<compile_context>
chip_gen: v7x
topology: tpu7x:2x2x1
jax: 0.10.0
libtpu: 0.0.40
codegen_flags: <defaults>
</compile_context>

<pallas_src>
import jax
import jax.numpy as jnp
from jax.experimental import pallas as pl
from jax.experimental.pallas import tpu as pltpu

LANE = 128


# ----------------------------- kernel -------------------------------------- #

def _make_rnn_kernel(T, H, n_layers, use_dropout):
    """Build the fused stacked-LSTM + fc kernel (all sizes static)."""
    n_masks = (n_layers - 1) if use_dropout else 0

    def kernel(*refs):
        # ---- unpack refs (inputs..., output) ----
        idx = 0
        x_ref = refs[idx]; idx += 1                              # (T, B, F) f32
        layer_w = []
        for _ in range(n_layers):                                # wih, whh, b
            layer_w.append((refs[idx], refs[idx + 1], refs[idx + 2]))
            idx += 3
        mask_refs = [refs[idx + l] for l in range(n_masks)]      # (T, B, H) f32
        idx += n_masks
        wfc_ref = refs[idx]; bfc_ref = refs[idx + 1]; idx += 2   # (H,Cp), (1,Cp)
        o_ref = refs[idx]                                        # (B, Cp) f32

        B = x_ref.shape[1]

        # LSTM state lives in vregs (tiny), zero-initialised like PyTorch.
        h = [jnp.zeros((B, H), jnp.float32) for _ in range(n_layers)]
        c = [jnp.zeros((B, H), jnp.float32) for _ in range(n_layers)]

        # Static unroll over time (T is small); static indices -> free views.
        for t in range(T):
            inp = x_ref[t]                                       # (B, F_l)
            for l in range(n_layers):
                wih_ref, whh_ref, b_ref = layer_w[l]
                # bf16 MXU matmuls, f32 accumulate; gates are (B, 4H)=(B,128),
                # i.e. lane-dense.
                gates = (
                    jnp.dot(inp.astype(jnp.bfloat16), wih_ref[...],
                            preferred_element_type=jnp.float32)
                    + jnp.dot(h[l].astype(jnp.bfloat16), whh_ref[...],
                              preferred_element_type=jnp.float32)
                    + b_ref[...]
                )
                # PyTorch gate order: i, f, g, o
                i_g = jax.nn.sigmoid(gates[:, 0 * H:1 * H])
                f_g = jax.nn.sigmoid(gates[:, 1 * H:2 * H])
                g_g = jnp.tanh(gates[:, 2 * H:3 * H])
                o_g = jax.nn.sigmoid(gates[:, 3 * H:4 * H])
                c[l] = f_g * c[l] + i_g * g_g
                h[l] = o_g * jnp.tanh(c[l])

                out = h[l]
                if l < n_layers - 1 and n_masks:
                    # inter-layer dropout: pre-scaled keep mask, one multiply
                    out = out * mask_refs[l][t]
                inp = out

        # out[:, -1, :] of the top LSTM layer == h[-1] after the last step.
        # Fused fc, lane-dense (class dim padded to 128).
        o_ref[...] = (
            jnp.dot(h[-1].astype(jnp.bfloat16), wfc_ref[...],
                    preferred_element_type=jnp.float32)
            + bfc_ref[...]
        ).astype(o_ref.dtype)

    return kernel


# ----------------------------- wrapper -------------------------------------- #

def rnn_forward(x, params, *, n_layers, hidden_size, n_classes, dropout_p,
                dropout_key=None, training=True):
    """x: (B, T, input_size) f32 -> logits (B, n_classes) f32."""
    B, T, _ = x.shape
    H = hidden_size
    layer_params, (wfc_p, bfc_p) = params
    c_pad = wfc_p.shape[1]

    use_dropout = bool(training) and float(dropout_p) > 0.0 and n_layers > 1

    # time-major so the kernel indexes the leading axis with static t
    x_tm = jnp.transpose(x, (1, 0, 2)).astype(jnp.float32)       # (T, B, F)

    inputs = [x_tm]
    for (wih, whh, b) in layer_params:
        inputs += [wih, whh, b]

    if use_dropout:
        keep = 1.0 - float(dropout_p)
        for kl in jax.random.split(dropout_key, n_layers - 1):
            m = jax.random.bernoulli(kl, keep, (T, B, H)).astype(jnp.float32)
            inputs.append(m * (1.0 / keep))                      # inverted dropout

    inputs += [wfc_p, bfc_p]

    vmem = pl.BlockSpec(memory_space=pltpu.MemorySpace.VMEM)
    kernel = _make_rnn_kernel(T, H, n_layers, use_dropout)

    out_padded = pl.pallas_call(
        kernel,
        out_shape=jax.ShapeDtypeStruct((B, c_pad), jnp.float32),
        in_specs=[vmem] * len(inputs),
        out_specs=vmem,
    )(*inputs)

    return out_padded[:, :n_classes]


# ----------------------------- init ----------------------------------------- #

def init_rnn_params(key, input_size, hidden_size, n_layers, n_classes):
    """Torch-style U(-1/sqrt(H), 1/sqrt(H)) init, stored in kernel-ready layout."""
    H = hidden_size
    bound = 1.0 / jnp.sqrt(jnp.float32(H))
    keys = jax.random.split(key, 4 * n_layers + 2)

    layer_params = []
    for l in range(n_layers):
        k_wih, k_whh, k_bih, k_bhh = keys[4 * l:4 * l + 4]
        in_l = input_size if l == 0 else H
        wih = jax.random.uniform(k_wih, (4 * H, in_l), jnp.float32, -bound, bound)
        whh = jax.random.uniform(k_whh, (4 * H, H), jnp.float32, -bound, bound)
        bih = jax.random.uniform(k_bih, (4 * H,), jnp.float32, -bound, bound)
        bhh = jax.random.uniform(k_bhh, (4 * H,), jnp.float32, -bound, bound)
        layer_params.append((
            wih.T.astype(jnp.bfloat16),                 # (in_l, 4H)
            whh.T.astype(jnp.bfloat16),                 # (H, 4H)
            (bih + bhh).reshape(1, 4 * H),              # (1, 4H) f32
        ))

    k_wfc, k_bfc = keys[-2:]
    wfc = jax.random.uniform(k_wfc, (n_classes, H), jnp.float32, -bound, bound)
    bfc = jax.random.uniform(k_bfc, (n_classes,), jnp.float32, -bound, bound)

    c_pad = max(LANE, ((n_classes + LANE - 1) // LANE) * LANE)   # lane-dense fc
    wfc_p = jnp.zeros((H, c_pad), jnp.bfloat16).at[:, :n_classes].set(
        wfc.T.astype(jnp.bfloat16))
    bfc_p = jnp.zeros((1, c_pad), jnp.float32).at[:, :n_classes].set(
        bfc.reshape(1, n_classes))
    return layer_params, (wfc_p, bfc_p)


# ----------------------------- main ------------------------------------------ #

if __name__ == "__main__":
    B = 2
    T = 8              # sequence length
    input_size = 16
    hidden_size = 32   # 4H = 128 -> gate matmuls are exactly one lane wide
    n_layers = 2
    n_classes = 4
    dropout_p = 0.1

    key = jax.random.PRNGKey(0)
    k_x, k_p, k_drop = jax.random.split(key, 3)

    x = jax.random.normal(k_x, (B, T, input_size), jnp.float32)
    params = init_rnn_params(k_p, input_size, hidden_size, n_layers, n_classes)

    logits = rnn_forward(
        x, params,
        n_layers=n_layers, hidden_size=hidden_size, n_classes=n_classes,
        dropout_p=dropout_p, dropout_key=k_drop, training=True,
    )
    jax.block_until_ready(logits)
    assert logits.shape == (B, n_classes)
    print("KERNEL_OK")
</pallas_src>

<mosaic_0001>
module attributes {stable_mosaic.version = 11 : i64} {
  func.func @kernel(%arg0: memref<8x2x16xf32, #tpu.memory_space<vmem>>, %arg1: memref<16x128xbf16, #tpu.memory_space<vmem>>, %arg2: memref<32x128xbf16, #tpu.memory_space<vmem>>, %arg3: memref<1x128xf32, #tpu.memory_space<vmem>>, %arg4: memref<32x128xbf16, #tpu.memory_space<vmem>>, %arg5: memref<32x128xbf16, #tpu.memory_space<vmem>>, %arg6: memref<1x128xf32, #tpu.memory_space<vmem>>, %arg7: memref<8x2x32xf32, #tpu.memory_space<vmem>>, %arg8: memref<32x128xbf16, #tpu.memory_space<vmem>>, %arg9: memref<1x128xf32, #tpu.memory_space<vmem>>, %arg10: memref<2x128xf32, #tpu.memory_space<vmem>>) attributes {dimension_semantics = [], scalar_prefetch = 0 : i64, scratch_operands = 0 : i64, tpu.core_type = #tpu.core_type<tc>} {
    %cst = arith.constant 0.000000e+00 : f32
    %0 = vector.broadcast %cst : f32 to vector<2x32xf32>
    %cst_0 = arith.constant 0.000000e+00 : f32
    %1 = vector.broadcast %cst_0 : f32 to vector<2x32xf32>
    %cst_1 = arith.constant 0.000000e+00 : f32
    %2 = vector.broadcast %cst_1 : f32 to vector<2x32xf32>
    %cst_2 = arith.constant 0.000000e+00 : f32
    %3 = vector.broadcast %cst_2 : f32 to vector<2x32xf32>
    %c0 = arith.constant 0 : index
    %c0_3 = arith.constant 0 : index
    %c0_4 = arith.constant 0 : index
    %4 = vector.load %arg0[%c0, %c0_3, %c0_4] : memref<8x2x16xf32, #tpu.memory_space<vmem>>, vector<1x2x16xf32>
    %5 = vector.shape_cast %4 : vector<1x2x16xf32> to vector<2x16xf32>
    %6 = arith.truncf %5 : vector<2x16xf32> to vector<2x16xbf16>
    %c0_5 = arith.constant 0 : index
    %c0_6 = arith.constant 0 : index
    %7 = vector.load %arg1[%c0_5, %c0_6] : memref<16x128xbf16, #tpu.memory_space<vmem>>, vector<16x128xbf16>
    %cst_7 = arith.constant dense<0.000000e+00> : vector<2x128xf32>
    %8 = tpu.matmul %6, %7, %cst_7 {dimension_numbers = #tpu.dot_dimension_numbers<[1], [0], [0], [1], [0, 0, 1, 1], [], []>} : vector<2x16xbf16>, vector<16x128xbf16>, vector<2x128xf32> -> vector<2x128xf32>
    %9 = arith.truncf %0 : vector<2x32xf32> to vector<2x32xbf16>
    %c0_8 = arith.constant 0 : index
    %c0_9 = arith.constant 0 : index
    %10 = vector.load %arg2[%c0_8, %c0_9] : memref<32x128xbf16, #tpu.memory_space<vmem>>, vector<32x128xbf16>
    %cst_10 = arith.constant dense<0.000000e+00> : vector<2x128xf32>
    %11 = tpu.matmul %9, %10, %cst_10 {dimension_numbers = #tpu.dot_dimension_numbers<[1], [0], [0], [1], [0, 0, 1, 1], [], []>} : vector<2x32xbf16>, vector<32x128xbf16>, vector<2x128xf32> -> vector<2x128xf32>
    %12 = arith.addf %8, %11 : vector<2x128xf32>
    %c0_11 = arith.constant 0 : index
    %c0_12 = arith.constant 0 : index
    %13 = vector.load %arg3[%c0_11, %c0_12] : memref<1x128xf32, #tpu.memory_space<vmem>>, vector<1x128xf32>
    %14 = vector.broadcast %13 : vector<1x128xf32> to vector<2x128xf32>
    %15 = arith.addf %12, %14 : vector<2x128xf32>
    %16 = vector.extract_strided_slice %15 {offsets = [0, 0], sizes = [2, 32], strides = [1, 1]} : vector<2x128xf32> to vector<2x32xf32>
    %17 = arith.negf %16 : vector<2x32xf32>
    %18 = math.exp %17 : vector<2x32xf32>
    %cst_13 = arith.constant 1.000000e+00 : f32
    %19 = vector.broadcast %cst_13 : f32 to vector<2x32xf32>
    %20 = arith.addf %19, %18 : vector<2x32xf32>
    %21 = arith.divf %19, %20 : vector<2x32xf32>
    %22 = vector.extract_strided_slice %15 {offsets = [0, 32], sizes = [2, 32], strides = [1, 1]} : vector<2x128xf32> to vector<2x32xf32>
    %23 = arith.negf %22 : vector<2x32xf32>
    %24 = math.exp %23 : vector<2x32xf32>
    %cst_14 = arith.constant 1.000000e+00 : f32
    %25 = vector.broadcast %cst_14 : f32 to vector<2x32xf32>
    %26 = arith.addf %25, %24 : vector<2x32xf32>
    %27 = arith.divf %25, %26 : vector<2x32xf32>
    %28 = vector.extract_strided_slice %15 {offsets = [0, 64], sizes = [2, 32], strides = [1, 1]} : vector<2x128xf32> to vector<2x32xf32>
    %29 = math.tanh %28 : vector<2x32xf32>
    %30 = vector.extract_strided_slice %15 {offsets = [0, 96], sizes = [2, 32], strides = [1, 1]} : vector<2x128xf32> to vector<2x32xf32>
    %31 = arith.negf %30 : vector<2x32xf32>
    %32 = math.exp %31 : vector<2x32xf32>
    %cst_15 = arith.constant 1.000000e+00 : f32
    %33 = vector.broadcast %cst_15 : f32 to vector<2x32xf32>
    %34 = arith.addf %33, %32 : vector<2x32xf32>
    %35 = arith.divf %33, %34 : vector<2x32xf32>
    %36 = arith.mulf %27, %2 : vector<2x32xf32>
    %37 = arith.mulf %21, %29 : vector<2x32xf32>
    %38 = arith.addf %36, %37 : vector<2x32xf32>
    %39 = math.tanh %38 : vector<2x32xf32>
    %40 = arith.mulf %35, %39 : vector<2x32xf32>
    %c0_16 = arith.constant 0 : index
    %c0_17 = arith.constant 0 : index
    %c0_18 = arith.constant 0 : index
    %41 = vector.load %arg7[%c0_16, %c0_17, %c0_18] : memref<8x2x32xf32, #tpu.memory_space<vmem>>, vector<1x2x32xf32>
    %42 = vector.shape_cast %41 : vector<1x2x32xf32> to vector<2x32xf32>
    %43 = arith.mulf %40, %42 : vector<2x32xf32>
    %44 = arith.truncf %43 : vector<2x32xf32> to vector<2x32xbf16>
    %c0_19 = arith.constant 0 : index
    %c0_20 = arith.constant 0 : index
    %45 = vector.load %arg4[%c0_19, %c0_20] : memref<32x128xbf16, #tpu.memory_space<vmem>>, vector<32x128xbf16>
    %cst_21 = arith.constant dense<0.000000e+00> : vector<2x128xf32>
    %46 = tpu.matmul %44, %45, %cst_21 {dimension_numbers = #tpu.dot_dimension_numbers<[1], [0], [0], [1], [0, 0, 1, 1], [], []>} : vector<2x32xbf16>, vector<32x128xbf16>, vector<2x128xf32> -> vector<2x128xf32>
    %47 = arith.truncf %1 : vector<2x32xf32> to vector<2x32xbf16>
    %c0_22 = arith.constant 0 : index
    %c0_23 = arith.constant 0 : index
    %48 = vector.load %arg5[%c0_22, %c0_23] : memref<32x128xbf16, #tpu.memory_space<vmem>>, vector<32x128xbf16>
    %cst_24 = arith.constant dense<0.000000e+00> : vector<2x128xf32>
    %49 = tpu.matmul %47, %48, %cst_24 {dimension_numbers = #tpu.dot_dimension_numbers<[1], [0], [0], [1], [0, 0, 1, 1], [], []>} : vector<2x32xbf16>, vector<32x128xbf16>, vector<2x128xf32> -> vector<2x128xf32>
    %50 = arith.addf %46, %49 : vector<2x128xf32>
    %c0_25 = arith.constant 0 : index
    %c0_26 = arith.constant 0 : index
    %51 = vector.load %arg6[%c0_25, %c0_26] : memref<1x128xf32, #tpu.memory_space<vmem>>, vector<1x128xf32>
    %52 = vector.broadcast %51 : vector<1x128xf32> to vector<2x128xf32>
    %53 = arith.addf %50, %52 : vector<2x128xf32>
    %54 = vector.extract_strided_slice %53 {offsets = [0, 0], sizes = [2, 32], strides = [1, 1]} : vector<2x128xf32> to vector<2x32xf32>
    %55 = arith.negf %54 : vector<2x32xf32>
    %56 = math.exp %55 : vector<2x32xf32>
    %cst_27 = arith.constant 1.000000e+00 : f32
    %57 = vector.broadcast %cst_27 : f32 to vector<2x32xf32>
    %58 = arith.addf %57, %56 : vector<2x32xf32>
    %59 = arith.divf %57, %58 : vector<2x32xf32>
    %60 = vector.extract_strided_slice %53 {offsets = [0, 32], sizes = [2, 32], strides = [1, 1]} : vector<2x128xf32> to vector<2x32xf32>
    %61 = arith.negf %60 : vector<2x32xf32>
    %62 = math.exp %61 : vector<2x32xf32>
    %cst_28 = arith.constant 1.000000e+00 : f32
    %63 = vector.broadcast %cst_28 : f32 to vector<2x32xf32>
    %64 = arith.addf %63, %62 : vector<2x32xf32>
    %65 = arith.divf %63, %64 : vector<2x32xf32>
    %66 = vector.extract_strided_slice %53 {offsets = [0, 64], sizes = [2, 32], strides = [1, 1]} : vector<2x128xf32> to vector<2x32xf32>
    %67 = math.tanh %66 : vector<2x32xf32>
    %68 = vector.extract_strided_slice %53 {offsets = [0, 96], sizes = [2, 32], strides = [1, 1]} : vector<2x128xf32> to vector<2x32xf32>
    %69 = arith.negf %68 : vector<2x32xf32>
    %70 = math.exp %69 : vector<2x32xf32>
    %cst_29 = arith.constant 1.000000e+00 : f32
    %71 = vector.broadcast %cst_29 : f32 to vector<2x32xf32>
    %72 = arith.addf %71, %70 : vector<2x32xf32>
    %73 = arith.divf %71, %72 : vector<2x32xf32>
    %74 = arith.mulf %65, %3 : vector<2x32xf32>
    %75 = arith.mulf %59, %67 : vector<2x32xf32>
    %76 = arith.addf %74, %75 : vector<2x32xf32>
    %77 = math.tanh %76 : vector<2x32xf32>
    %78 = arith.mulf %73, %77 : vector<2x32xf32>
    %c1 = arith.constant 1 : index
    %c0_30 = arith.constant 0 : index
    %c0_31 = arith.constant 0 : index
    %79 = vector.load %arg0[%c1, %c0_30, %c0_31] : memref<8x2x16xf32, #tpu.memory_space<vmem>>, vector<1x2x16xf32>
    %80 = vector.shape_cast %79 : vector<1x2x16xf32> to vector<2x16xf32>
    %81 = arith.truncf %80 : vector<2x16xf32> to vector<2x16xbf16>
    %c0_32 = arith.constant 0 : index
    %c0_33 = arith.constant 0 : index
    %82 = vector.load %arg1[%c0_32, %c0_33] : memref<16x128xbf16, #tpu.memory_space<vmem>>, vector<16x128xbf16>
    %cst_34 = arith.constant dense<0.000000e+00> : vector<2x128xf32>
    %83 = tpu.matmul %81, %82, %cst_34 {dimension_numbers = #tpu.dot_dimension_numbers<[1], [0], [0], [1], [0, 0, 1, 1], [], []>} : vector<2x16xbf16>, vector<16x128xbf16>, vector<2x128xf32> -> vector<2x128xf32>
    %84 = arith.truncf %40 : vector<2x32xf32> to vector<2x32xbf16>
    %c0_35 = arith.constant 0 : index
    %c0_36 = arith.constant 0 : index
    %85 = vector.load %arg2[%c0_35, %c0_36] : memref<32x128xbf16, #tpu.memory_space<vmem>>, vector<32x128xbf16>
    %cst_37 = arith.constant dense<0.000000e+00> : vector<2x128xf32>
    %86 = tpu.matmul %84, %85, %cst_37 {dimension_numbers = #tpu.dot_dimension_numbers<[1], [0], [0], [1], [0, 0, 1, 1], [], []>} : vector<2x32xbf16>, vector<32x128xbf16>, vector<2x128xf32> -> vector<2x128xf32>
    %87 = arith.addf %83, %86 : vector<2x128xf32>
    %c0_38 = arith.constant 0 : index
    %c0_39 = arith.constant 0 : index
    %88 = vector.load %arg3[%c0_38, %c0_39] : memref<1x128xf32, #tpu.memory_space<vmem>>, vector<1x128xf32>
    %89 = vector.broadcast %88 : vector<1x128xf32> to vector<2x128xf32>
    %90 = arith.addf %87, %89 : vector<2x128xf32>
    %91 = vector.extract_strided_slice %90 {offsets = [0, 0], sizes = [2, 32], strides = [1, 1]} : vector<2x128xf32> to vector<2x32xf32>
    %92 = arith.negf %91 : vector<2x32xf32>
    %93 = math.exp %92 : vector<2x32xf32>
    %cst_40 = arith.constant 1.000000e+00 : f32
    %94 = vector.broadcast %cst_40 : f32 to vector<2x32xf32>
    %95 = arith.addf %94, %93 : vector<2x32xf32>
    %96 = arith.divf %94, %95 : vector<2x32xf32>
    %97 = vector.extract_strided_slice %90 {offsets = [0, 32], sizes = [2, 32], strides = [1, 1]} : vector<2x128xf32> to vector<2x32xf32>
    %98 = arith.negf %97 : vector<2x32xf32>
    %99 = math.exp %98 : vector<2x32xf32>
    %cst_41 = arith.constant 1.000000e+00 : f32
    %100 = vector.broadcast %cst_41 : f32 to vector<2x32xf32>
    %101 = arith.addf %100, %99 : vector<2x32xf32>
    %102 = arith.divf %100, %101 : vector<2x32xf32>
    %103 = vector.extract_strided_slice %90 {offsets = [0, 64], sizes = [2, 32], strides = [1, 1]} : vector<2x128xf32> to vector<2x32xf32>
    %104 = math.tanh %103 : vector<2x32xf32>
    %105 = vector.extract_strided_slice %90 {offsets = [0, 96], sizes = [2, 32], strides = [1, 1]} : vector<2x128xf32> to vector<2x32xf32>
    %106 = arith.negf %105 : vector<2x32xf32>
    %107 = math.exp %106 : vector<2x32xf32>
    %cst_42 = arith.constant 1.000000e+00 : f32
    %108 = vector.broadcast %cst_42 : f32 to vector<2x32xf32>
    %109 = arith.addf %108, %107 : vector<2x32xf32>
    %110 = arith.divf %108, %109 : vector<2x32xf32>
    %111 = arith.mulf %102, %38 : vector<2x32xf32>
    %112 = arith.mulf %96, %104 : vector<2x32xf32>
    %113 = arith.addf %111, %112 : vector<2x32xf32>
    %114 = math.tanh %113 : vector<2x32xf32>
    %115 = arith.mulf %110, %114 : vector<2x32xf32>
    %c1_43 = arith.constant 1 : index
    %c0_44 = arith.constant 0 : index
    %c0_45 = arith.constant 0 : index
    %116 = vector.load %arg7[%c1_43, %c0_44, %c0_45] : memref<8x2x32xf32, #tpu.memory_space<vmem>>, vector<1x2x32xf32>
    %117 = vector.shape_cast %116 : vector<1x2x32xf32> to vector<2x32xf32>
    %118 = arith.mulf %115, %117 : vector<2x32xf32>
    %119 = arith.truncf %118 : vector<2x32xf32> to vector<2x32xbf16>
    %c0_46 = arith.constant 0 : index
    %c0_47 = arith.constant 0 : index
    %120 = vector.load %arg4[%c0_46, %c0_47] : memref<32x128xbf16, #tpu.memory_space<vmem>>, vector<32x128xbf16>
    %cst_48 = arith.constant dense<0.000000e+00> : vector<2x128xf32>
    %121 = tpu.matmul %119, %120, %cst_48 {dimension_numbers = #tpu.dot_dimension_numbers<[1], [0], [0], [1], [0, 0, 1, 1], [], []>} : vector<2x32xbf16>, vector<32x128xbf16>, vector<2x128xf32> -> vector<2x128xf32>
    %122 = arith.truncf %78 : vector<2x32xf32> to vector<2x32xbf16>
    %c0_49 = arith.constant 0 : index
    %c0_50 = arith.constant 0 : index
    %123 = vector.load %arg5[%c0_49, %c0_50] : memref<32x128xbf16, #tpu.memory_space<vmem>>, vector<32x128xbf16>
    %cst_51 = arith.constant dense<0.000000e+00> : vector<2x128xf32>
    %124 = tpu.matmul %122, %123, %cst_51 {dimension_numbers = #tpu.dot_dimension_numbers<[1], [0], [0], [1], [0, 0, 1, 1], [], []>} : vector<2x32xbf16>, vector<32x128xbf16>, vector<2x128xf32> -> vector<2x128xf32>
    %125 = arith.addf %121, %124 : vector<2x128xf32>
    %c0_52 = arith.constant 0 : index
    %c0_53 = arith.constant 0 : index
    %126 = vector.load %arg6[%c0_52, %c0_53] : memref<1x128xf32, #tpu.memory_space<vmem>>, vector<1x128xf32>
    %127 = vector.broadcast %126 : vector<1x128xf32> to vector<2x128xf32>
    %128 = arith.addf %125, %127 : vector<2x128xf32>
    %129 = vector.extract_strided_slice %128 {offsets = [0, 0], sizes = [2, 32], strides = [1, 1]} : vector<2x128xf32> to vector<2x32xf32>
    %130 = arith.negf %129 : vector<2x32xf32>
    %131 = math.exp %130 : vector<2x32xf32>
    %cst_54 = arith.constant 1.000000e+00 : f32
    %132 = vector.broadcast %cst_54 : f32 to vector<2x32xf32>
    %133 = arith.addf %132, %131 : vector<2x32xf32>
    %134 = arith.divf %132, %133 : vector<2x32xf32>
    %135 = vector.extract_strided_slice %128 {offsets = [0, 32], sizes = [2, 32], strides = [1, 1]} : vector<2x128xf32> to vector<2x32xf32>
    %136 = arith.negf %135 : vector<2x32xf32>
    %137 = math.exp %136 : vector<2x32xf32>
    %cst_55 = arith.constant 1.000000e+00 : f32
    %138 = vector.broadcast %cst_55 : f32 to vector<2x32xf32>
    %139 = arith.addf %138, %137 : vector<2x32xf32>
    %140 = arith.divf %138, %139 : vector<2x32xf32>
    %141 = vector.extract_strided_slice %128 {offsets = [0, 64], sizes = [2, 32], strides = [1, 1]} : vector<2x128xf32> to vector<2x32xf32>
    %142 = math.tanh %141 : vector<2x32xf32>
    %143 = vector.extract_strided_slice %128 {offsets = [0, 96], sizes = [2, 32], strides = [1, 1]} : vector<2x128xf32> to vector<2x32xf32>
    %144 = arith.negf %143 : vector<2x32xf32>
    %145 = math.exp %144 : vector<2x32xf32>
    %cst_56 = arith.constant 1.000000e+00 : f32
    %146 = vector.broadcast %cst_56 : f32 to vector<2x32xf32>
    %147 = arith.addf %146, %145 : vector<2x32xf32>
    %148 = arith.divf %146, %147 : vector<2x32xf32>
    %149 = arith.mulf %140, %76 : vector<2x32xf32>
    %150 = arith.mulf %134, %142 : vector<2x32xf32>
    %151 = arith.addf %149, %150 : vector<2x32xf32>
    %152 = math.tanh %151 : vector<2x32xf32>
    %153 = arith.mulf %148, %152 : vector<2x32xf32>
    %c2 = arith.constant 2 : index
    %c0_57 = arith.constant 0 : index
    %c0_58 = arith.constant 0 : index
    %154 = vector.load %arg0[%c2, %c0_57, %c0_58] : memref<8x2x16xf32, #tpu.memory_space<vmem>>, vector<1x2x16xf32>
    %155 = vector.shape_cast %154 : vector<1x2x16xf32> to vector<2x16xf32>
    %156 = arith.truncf %155 : vector<2x16xf32> to vector<2x16xbf16>
    %c0_59 = arith.constant 0 : index
    %c0_60 = arith.constant 0 : index
    %157 = vector.load %arg1[%c0_59, %c0_60] : memref<16x128xbf16, #tpu.memory_space<vmem>>, vector<16x128xbf16>
    %cst_61 = arith.constant dense<0.000000e+00> : vector<2x128xf32>
    %158 = tpu.matmul %156, %157, %cst_61 {dimension_numbers = #tpu.dot_dimension_numbers<[1], [0], [0], [1], [0, 0, 1, 1], [], []>} : vector<2x16xbf16>, vector<16x128xbf16>, vector<2x128xf32> -> vector<2x128xf32>
    %159 = arith.truncf %115 : vector<2x32xf32> to vector<2x32xbf16>
    %c0_62 = arith.constant 0 : index
    %c0_63 = arith.constant 0 : index
    %160 = vector.load %arg2[%c0_62, %c0_63] : memref<32x128xbf16, #tpu.memory_space<vmem>>, vector<32x128xbf16>
    %cst_64 = arith.constant dense<0.000000e+00> : vector<2x128xf32>
    %161 = tpu.matmul %159, %160, %cst_64 {dimension_numbers = #tpu.dot_dimension_numbers<[1], [0], [0], [1], [0, 0, 1, 1], [], []>} : vector<2x32xbf16>, vector<32x128xbf16>, vector<2x128xf32> -> vector<2x128xf32>
    %162 = arith.addf %158, %161 : vector<2x128xf32>
    %c0_65 = arith.constant 0 : index
    %c0_66 = arith.constant 0 : index
    %163 = vector.load %arg3[%c0_65, %c0_66] : memref<1x128xf32, #tpu.memory_space<vmem>>, vector<1x128xf32>
    %164 = vector.broadcast %163 : vector<1x128xf32> to vector<2x128xf32>
    %165 = arith.addf %162, %164 : vector<2x128xf32>
    %166 = vector.extract_strided_slice %165 {offsets = [0, 0], sizes = [2, 32], strides = [1, 1]} : vector<2x128xf32> to vector<2x32xf32>
    %167 = arith.negf %166 : vector<2x32xf32>
    %168 = math.exp %167 : vector<2x32xf32>
    %cst_67 = arith.constant 1.000000e+00 : f32
    %169 = vector.broadcast %cst_67 : f32 to vector<2x32xf32>
    %170 = arith.addf %169, %168 : vector<2x32xf32>
    %171 = arith.divf %169, %170 : vector<2x32xf32>
    %172 = vector.extract_strided_slice %165 {offsets = [0, 32], sizes = [2, 32], strides = [1, 1]} : vector<2x128xf32> to vector<2x32xf32>
    %173 = arith.negf %172 : vector<2x32xf32>
    %174 = math.exp %173 : vector<2x32xf32>
    %cst_68 = arith.constant 1.000000e+00 : f32
    %175 = vector.broadcast %cst_68 : f32 to vector<2x32xf32>
    %176 = arith.addf %175, %174 : vector<2x32xf32>
    %177 = arith.divf %175, %176 : vector<2x32xf32>
    %178 = vector.extract_strided_slice %165 {offsets = [0, 64], sizes = [2, 32], strides = [1, 1]} : vector<2x128xf32> to vector<2x32xf32>
    %179 = math.tanh %178 : vector<2x32xf32>
    %180 = vector.extract_strided_slice %165 {offsets = [0, 96], sizes = [2, 32], strides = [1, 1]} : vector<2x128xf32> to vector<2x32xf32>
    %181 = arith.negf %180 : vector<2x32xf32>
    %182 = math.exp %181 : vector<2x32xf32>
    %cst_69 = arith.constant 1.000000e+00 : f32
    %183 = vector.broadcast %cst_69 : f32 to vector<2x32xf32>
    %184 = arith.addf %183, %182 : vector<2x32xf32>
    %185 = arith.divf %183, %184 : vector<2x32xf32>
    %186 = arith.mulf %177, %113 : vector<2x32xf32>
    %187 = arith.mulf %171, %179 : vector<2x32xf32>
    %188 = arith.addf %186, %187 : vector<2x32xf32>
    %189 = math.tanh %188 : vector<2x32xf32>
    %190 = arith.mulf %185, %189 : vector<2x32xf32>
    %c2_70 = arith.constant 2 : index
    %c0_71 = arith.constant 0 : index
    %c0_72 = arith.constant 0 : index
    %191 = vector.load %arg7[%c2_70, %c0_71, %c0_72] : memref<8x2x32xf32, #tpu.memory_space<vmem>>, vector<1x2x32xf32>
    %192 = vector.shape_cast %191 : vector<1x2x32xf32> to vector<2x32xf32>
    %193 = arith.mulf %190, %192 : vector<2x32xf32>
    %194 = arith.truncf %193 : vector<2x32xf32> to vector<2x32xbf16>
    %c0_73 = arith.constant 0 : index
    %c0_74 = arith.constant 0 : index
    %195 = vector.load %arg4[%c0_73, %c0_74] : memref<32x128xbf16, #tpu.memory_space<vmem>>, vector<32x128xbf16>
    %cst_75 = arith.constant dense<0.000000e+00> : vector<2x128xf32>
    %196 = tpu.matmul %194, %195, %cst_75 {dimension_numbers = #tpu.dot_dimension_numbers<[1], [0], [0], [1], [0, 0, 1, 1], [], []>} : vector<2x32xbf16>, vector<32x128xbf16>, vector<2x128xf32> -> vector<2x128xf32>
    %197 = arith.truncf %153 : vector<2x32xf32> to vector<2x32xbf16>
    %c0_76 = arith.constant 0 : index
    %c0_77 = arith.constant 0 : index
    %198 = vector.load %arg5[%c0_76, %c0_77] : memref<32x128xbf16, #tpu.memory_space<vmem>>, vector<32x128xbf16>
    %cst_78 = arith.constant dense<0.000000e+00> : vector<2x128xf32>
    %199 = tpu.matmul %197, %198, %cst_78 {dimension_numbers = #tpu.dot_dimension_numbers<[1], [0], [0], [1], [0, 0, 1, 1], [], []>} : vector<2x32xbf16>, vector<32x128xbf16>, vector<2x128xf32> -> vector<2x128xf32>
    %200 = arith.addf %196, %199 : vector<2x128xf32>
    %c0_79 = arith.constant 0 : index
    %c0_80 = arith.constant 0 : index
    %201 = vector.load %arg6[%c0_79, %c0_80] : memref<1x128xf32, #tpu.memory_space<vmem>>, vector<1x128xf32>
    %202 = vector.broadcast %201 : vector<1x128xf32> to vector<2x128xf32>
    %203 = arith.addf %200, %202 : vector<2x128xf32>
    %204 = vector.extract_strided_slice %203 {offsets = [0, 0], sizes = [2, 32], strides = [1, 1]} : vector<2x128xf32> to vector<2x32xf32>
    %205 = arith.negf %204 : vector<2x32xf32>
    %206 = math.exp %205 : vector<2x32xf32>
    %cst_81 = arith.constant 1.000000e+00 : f32
    %207 = vector.broadcast %cst_81 : f32 to vector<2x32xf32>
    %208 = arith.addf %207, %206 : vector<2x32xf32>
    %209 = arith.divf %207, %208 : vector<2x32xf32>
    %210 = vector.extract_strided_slice %203 {offsets = [0, 32], sizes = [2, 32], strides = [1, 1]} : vector<2x128xf32> to vector<2x32xf32>
    %211 = arith.negf %210 : vector<2x32xf32>
    %212 = math.exp %211 : vector<2x32xf32>
    %cst_82 = arith.constant 1.000000e+00 : f32
    %213 = vector.broadcast %cst_82 : f32 to vector<2x32xf32>
    %214 = arith.addf %213, %212 : vector<2x32xf32>
    %215 = arith.divf %213, %214 : vector<2x32xf32>
    %216 = vector.extract_strided_slice %203 {offsets = [0, 64], sizes = [2, 32], strides = [1, 1]} : vector<2x128xf32> to vector<2x32xf32>
    %217 = math.tanh %216 : vector<2x32xf32>
    %218 = vector.extract_strided_slice %203 {offsets = [0, 96], sizes = [2, 32], strides = [1, 1]} : vector<2x128xf32> to vector<2x32xf32>
    %219 = arith.negf %218 : vector<2x32xf32>
    %220 = math.exp %219 : vector<2x32xf32>
    %cst_83 = arith.constant 1.000000e+00 : f32
    %221 = vector.broadcast %cst_83 : f32 to vector<2x32xf32>
    %222 = arith.addf %221, %220 : vector<2x32xf32>
    %223 = arith.divf %221, %222 : vector<2x32xf32>
    %224 = arith.mulf %215, %151 : vector<2x32xf32>
    %225 = arith.mulf %209, %217 : vector<2x32xf32>
    %226 = arith.addf %224, %225 : vector<2x32xf32>
    %227 = math.tanh %226 : vector<2x32xf32>
    %228 = arith.mulf %223, %227 : vector<2x32xf32>
    %c3 = arith.constant 3 : index
    %c0_84 = arith.constant 0 : index
    %c0_85 = arith.constant 0 : index
    %229 = vector.load %arg0[%c3, %c0_84, %c0_85] : memref<8x2x16xf32, #tpu.memory_space<vmem>>, vector<1x2x16xf32>
    %230 = vector.shape_cast %229 : vector<1x2x16xf32> to vector<2x16xf32>
    %231 = arith.truncf %230 : vector<2x16xf32> to vector<2x16xbf16>
    %c0_86 = arith.constant 0 : index
    %c0_87 = arith.constant 0 : index
    %232 = vector.load %arg1[%c0_86, %c0_87] : memref<16x128xbf16, #tpu.memory_space<vmem>>, vector<16x128xbf16>
    %cst_88 = arith.constant dense<0.000000e+00> : vector<2x128xf32>
    %233 = tpu.matmul %231, %232, %cst_88 {dimension_numbers = #tpu.dot_dimension_numbers<[1], [0], [0], [1], [0, 0, 1, 1], [], []>} : vector<2x16xbf16>, vector<16x128xbf16>, vector<2x128xf32> -> vector<2x128xf32>
    %234 = arith.truncf %190 : vector<2x32xf32> to vector<2x32xbf16>
    %c0_89 = arith.constant 0 : index
    %c0_90 = arith.constant 0 : index
    %235 = vector.load %arg2[%c0_89, %c0_90] : memref<32x128xbf16, #tpu.memory_space<vmem>>, vector<32x128xbf16>
    %cst_91 = arith.constant dense<0.000000e+00> : vector<2x128xf32>
    %236 = tpu.matmul %234, %235, %cst_91 {dimension_numbers = #tpu.dot_dimension_numbers<[1], [0], [0], [1], [0, 0, 1, 1], [], []>} : vector<2x32xbf16>, vector<32x128xbf16>, vector<2x128xf32> -> vector<2x128xf32>
    %237 = arith.addf %233, %236 : vector<2x128xf32>
    %c0_92 = arith.constant 0 : index
    %c0_93 = arith.constant 0 : index
    %238 = vector.load %arg3[%c0_92, %c0_93] : memref<1x128xf32, #tpu.memory_space<vmem>>, vector<1x128xf32>
    %239 = vector.broadcast %238 : vector<1x128xf32> to vector<2x128xf32>
    %240 = arith.addf %237, %239 : vector<2x128xf32>
    %241 = vector.extract_strided_slice %240 {offsets = [0, 0], sizes = [2, 32], strides = [1, 1]} : vector<2x128xf32> to vector<2x32xf32>
    %242 = arith.negf %241 : vector<2x32xf32>
    %243 = math.exp %242 : vector<2x32xf32>
    %cst_94 = arith.constant 1.000000e+00 : f32
    %244 = vector.broadcast %cst_94 : f32 to vector<2x32xf32>
    %245 = arith.addf %244, %243 : vector<2x32xf32>
    %246 = arith.divf %244, %245 : vector<2x32xf32>
    %247 = vector.extract_strided_slice %240 {offsets = [0, 32], sizes = [2, 32], strides = [1, 1]} : vector<2x128xf32> to vector<2x32xf32>
    %248 = arith.negf %247 : vector<2x32xf32>
    %249 = math.exp %248 : vector<2x32xf32>
    %cst_95 = arith.constant 1.000000e+00 : f32
    %250 = vector.broadcast %cst_95 : f32 to vector<2x32xf32>
    %251 = arith.addf %250, %249 : vector<2x32xf32>
    %252 = arith.divf %250, %251 : vector<2x32xf32>
    %253 = vector.extract_strided_slice %240 {offsets = [0, 64], sizes = [2, 32], strides = [1, 1]} : vector<2x128xf32> to vector<2x32xf32>
    %254 = math.tanh %253 : vector<2x32xf32>
    %255 = vector.extract_strided_slice %240 {offsets = [0, 96], sizes = [2, 32], strides = [1, 1]} : vector<2x128xf32> to vector<2x32xf32>
    %256 = arith.negf %255 : vector<2x32xf32>
    %257 = math.exp %256 : vector<2x32xf32>
    %cst_96 = arith.constant 1.000000e+00 : f32
    %258 = vector.broadcast %cst_96 : f32 to vector<2x32xf32>
    %259 = arith.addf %258, %257 : vector<2x32xf32>
    %260 = arith.divf %258, %259 : vector<2x32xf32>
    %261 = arith.mulf %252, %188 : vector<2x32xf32>
    %262 = arith.mulf %246, %254 : vector<2x32xf32>
    %263 = arith.addf %261, %262 : vector<2x32xf32>
    %264 = math.tanh %263 : vector<2x32xf32>
    %265 = arith.mulf %260, %264 : vector<2x32xf32>
    %c3_97 = arith.constant 3 : index
    %c0_98 = arith.constant 0 : index
    %c0_99 = arith.constant 0 : index
    %266 = vector.load %arg7[%c3_97, %c0_98, %c0_99] : memref<8x2x32xf32, #tpu.memory_space<vmem>>, vector<1x2x32xf32>
    %267 = vector.shape_cast %266 : vector<1x2x32xf32> to vector<2x32xf32>
    %268 = arith.mulf %265, %267 : vector<2x32xf32>
    %269 = arith.truncf %268 : vector<2x32xf32> to vector<2x32xbf16>
    %c0_100 = arith.constant 0 : index
    %c0_101 = arith.constant 0 : index
    %270 = vector.load %arg4[%c0_100, %c0_101] : memref<32x128xbf16, #tpu.memory_space<vmem>>, vector<32x128xbf16>
    %cst_102 = arith.constant dense<0.000000e+00> : vector<2x128xf32>
    %271 = tpu.matmul %269, %270, %cst_102 {dimension_numbers = #tpu.dot_dimension_numbers<[1], [0], [0], [1], [0, 0, 1, 1], [], []>} : vector<2x32xbf16>, vector<32x128xbf16>, vector<2x128xf32> -> vector<2x128xf32>
    %272 = arith.truncf %228 : vector<2x32xf32> to vector<2x32xbf16>
    %c0_103 = arith.constant 0 : index
    %c0_104 = arith.constant 0 : index
    %273 = vector.load %arg5[%c0_103, %c0_104] : memref<32x128xbf16, #tpu.memory_space<vmem>>, vector<32x128xbf16>
    %cst_105 = arith.constant dense<0.000000e+00> : vector<2x128xf32>
    %274 = tpu.matmul %272, %273, %cst_105 {dimension_numbers = #tpu.dot_dimension_numbers<[1], [0], [0], [1], [0, 0, 1, 1], [], []>} : vector<2x32xbf16>, vector<32x128xbf16>, vector<2x128xf32> -> vector<2x128xf32>
    %275 = arith.addf %271, %274 : vector<2x128xf32>
    %c0_106 = arith.constant 0 : index
    %c0_107 = arith.constant 0 : index
    %276 = vector.load %arg6[%c0_106, %c0_107] : memref<1x128xf32, #tpu.memory_space<vmem>>, vector<1x128xf32>
    %277 = vector.broadcast %276 : vector<1x128xf32> to vector<2x128xf32>
    %278 = arith.addf %275, %277 : vector<2x128xf32>
    %279 = vector.extract_strided_slice %278 {offsets = [0, 0], sizes = [2, 32], strides = [1, 1]} : vector<2x128xf32> to vector<2x32xf32>
    %280 = arith.negf %279 : vector<2x32xf32>
    %281 = math.exp %280 : vector<2x32xf32>
    %cst_108 = arith.constant 1.000000e+00 : f32
    %282 = vector.broadcast %cst_108 : f32 to vector<2x32xf32>
    %283 = arith.addf %282, %281 : vector<2x32xf32>
    %284 = arith.divf %282, %283 : vector<2x32xf32>
    %285 = vector.extract_strided_slice %278 {offsets = [0, 32], sizes = [2, 32], strides = [1, 1]} : vector<2x128xf32> to vector<2x32xf32>
    %286 = arith.negf %285 : vector<2x32xf32>
    %287 = math.exp %286 : vector<2x32xf32>
    %cst_109 = arith.constant 1.000000e+00 : f32
    %288 = vector.broadcast %cst_109 : f32 to vector<2x32xf32>
    %289 = arith.addf %288, %287 : vector<2x32xf32>
    %290 = arith.divf %288, %289 : vector<2x32xf32>
    %291 = vector.extract_strided_slice %278 {offsets = [0, 64], sizes = [2, 32], strides = [1, 1]} : vector<2x128xf32> to vector<2x32xf32>
    %292 = math.tanh %291 : vector<2x32xf32>
    %293 = vector.extract_strided_slice %278 {offsets = [0, 96], sizes = [2, 32], strides = [1, 1]} : vector<2x128xf32> to vector<2x32xf32>
    %294 = arith.negf %293 : vector<2x32xf32>
    %295 = math.exp %294 : vector<2x32xf32>
    %cst_110 = arith.constant 1.000000e+00 : f32
    %296 = vector.broadcast %cst_110 : f32 to vector<2x32xf32>
    %297 = arith.addf %296, %295 : vector<2x32xf32>
    %298 = arith.divf %296, %297 : vector<2x32xf32>
    %299 = arith.mulf %290, %226 : vector<2x32xf32>
    %300 = arith.mulf %284, %292 : vector<2x32xf32>
    %301 = arith.addf %299, %300 : vector<2x32xf32>
    %302 = math.tanh %301 : vector<2x32xf32>
    %303 = arith.mulf %298, %302 : vector<2x32xf32>
    %c4 = arith.constant 4 : index
    %c0_111 = arith.constant 0 : index
    %c0_112 = arith.constant 0 : index
    %304 = vector.load %arg0[%c4, %c0_111, %c0_112] : memref<8x2x16xf32, #tpu.memory_space<vmem>>, vector<1x2x16xf32>
    %305 = vector.shape_cast %304 : vector<1x2x16xf32> to vector<2x16xf32>
    %306 = arith.truncf %305 : vector<2x16xf32> to vector<2x16xbf16>
    %c0_113 = arith.constant 0 : index
    %c0_114 = arith.constant 0 : index
    %307 = vector.load %arg1[%c0_113, %c0_114] : memref<16x128xbf16, #tpu.memory_space<vmem>>, vector<16x128xbf16>
    %cst_115 = arith.constant dense<0.000000e+00> : vector<2x128xf32>
    %308 = tpu.matmul %306, %307, %cst_115 {dimension_numbers = #tpu.dot_dimension_numbers<[1], [0], [0], [1], [0, 0, 1, 1], [], []>} : vector<2x16xbf16>, vector<16x128xbf16>, vector<2x128xf32> -> vector<2x128xf32>
    %309 = arith.truncf %265 : vector<2x32xf32> to vector<2x32xbf16>
    %c0_116 = arith.constant 0 : index
    %c0_117 = arith.constant 0 : index
    %310 = vector.load %arg2[%c0_116, %c0_117] : memref<32x128xbf16, #tpu.memory_space<vmem>>, vector<32x128xbf16>
    %cst_118 = arith.constant dense<0.000000e+00> : vector<2x128xf32>
    %311 = tpu.matmul %309, %310, %cst_118 {dimension_numbers = #tpu.dot_dimension_numbers<[1], [0], [0], [1], [0, 0, 1, 1], [], []>} : vector<2x32xbf16>, vector<32x128xbf16>, vector<2x128xf32> -> vector<2x128xf32>
    %312 = arith.addf %308, %311 : vector<2x128xf32>
    %c0_119 = arith.constant 0 : index
    %c0_120 = arith.constant 0 : index
    %313 = vector.load %arg3[%c0_119, %c0_120] : memref<1x128xf32, #tpu.memory_space<vmem>>, vector<1x128xf32>
    %314 = vector.broadcast %313 : vector<1x128xf32> to vector<2x128xf32>
    %315 = arith.addf %312, %314 : vector<2x128xf32>
    %316 = vector.extract_strided_slice %315 {offsets = [0, 0], sizes = [2, 32], strides = [1, 1]} : vector<2x128xf32> to vector<2x32xf32>
    %317 = arith.negf %316 : vector<2x32xf32>
    %318 = math.exp %317 : vector<2x32xf32>
    %cst_121 = arith.constant 1.000000e+00 : f32
    %319 = vector.broadcast %cst_121 : f32 to vector<2x32xf32>
    %320 = arith.addf %319, %318 : vector<2x32xf32>
    %321 = arith.divf %319, %320 : vector<2x32xf32>
    %322 = vector.extract_strided_slice %315 {offsets = [0, 32], sizes = [2, 32], strides = [1, 1]} : vector<2x128xf32> to vector<2x32xf32>
    %323 = arith.negf %322 : vector<2x32xf32>
    %324 = math.exp %323 : vector<2x32xf32>
    %cst_122 = arith.constant 1.000000e+00 : f32
    %325 = vector.broadcast %cst_122 : f32 to vector<2x32xf32>
    %326 = arith.addf %325, %324 : vector<2x32xf32>
    %327 = arith.divf %325, %326 : vector<2x32xf32>
    %328 = vector.extract_strided_slice %315 {offsets = [0, 64], sizes = [2, 32], strides = [1, 1]} : vector<2x128xf32> to vector<2x32xf32>
    %329 = math.tanh %328 : vector<2x32xf32>
    %330 = vector.extract_strided_slice %315 {offsets = [0, 96], sizes = [2, 32], strides = [1, 1]} : vector<2x128xf32> to vector<2x32xf32>
    %331 = arith.negf %330 : vector<2x32xf32>
    %332 = math.exp %331 : vector<2x32xf32>
    %cst_123 = arith.constant 1.000000e+00 : f32
    %333 = vector.broadcast %cst_123 : f32 to vector<2x32xf32>
    %334 = arith.addf %333, %332 : vector<2x32xf32>
    %335 = arith.divf %333, %334 : vector<2x32xf32>
    %336 = arith.mulf %327, %263 : vector<2x32xf32>
    %337 = arith.mulf %321, %329 : vector<2x32xf32>
    %338 = arith.addf %336, %337 : vector<2x32xf32>
    %339 = math.tanh %338 : vector<2x32xf32>
    %340 = arith.mulf %335, %339 : vector<2x32xf32>
    %c4_124 = arith.constant 4 : index
    %c0_125 = arith.constant 0 : index
    %c0_126 = arith.constant 0 : index
    %341 = vector.load %arg7[%c4_124, %c0_125, %c0_126] : memref<8x2x32xf32, #tpu.memory_space<vmem>>, vector<1x2x32xf32>
    %342 = vector.shape_cast %341 : vector<1x2x32xf32> to vector<2x32xf32>
    %343 = arith.mulf %340, %342 : vector<2x32xf32>
    %344 = arith.truncf %343 : vector<2x32xf32> to vector<2x32xbf16>
    %c0_127 = arith.constant 0 : index
    %c0_128 = arith.constant 0 : index
    %345 = vector.load %arg4[%c0_127, %c0_128] : memref<32x128xbf16, #tpu.memory_space<vmem>>, vector<32x128xbf16>
    %cst_129 = arith.constant dense<0.000000e+00> : vector<2x128xf32>
    %346 = tpu.matmul %344, %345, %cst_129 {dimension_numbers = #tpu.dot_dimension_numbers<[1], [0], [0], [1], [0, 0, 1, 1], [], []>} : vector<2x32xbf16>, vector<32x128xbf16>, vector<2x128xf32> -> vector<2x128xf32>
    %347 = arith.truncf %303 : vector<2x32xf32> to vector<2x32xbf16>
    %c0_130 = arith.constant 0 : index
    %c0_131 = arith.constant 0 : index
    %348 = vector.load %arg5[%c0_130, %c0_131] : memref<32x128xbf16, #tpu.memory_space<vmem>>, vector<32x128xbf16>
    %cst_132 = arith.constant dense<0.000000e+00> : vector<2x128xf32>
    %349 = tpu.matmul %347, %348, %cst_132 {dimension_numbers = #tpu.dot_dimension_numbers<[1], [0], [0], [1], [0, 0, 1, 1], [], []>} : vector<2x32xbf16>, vector<32x128xbf16>, vector<2x128xf32> -> vector<2x128xf32>
    %350 = arith.addf %346, %349 : vector<2x128xf32>
    %c0_133 = arith.constant 0 : index
    %c0_134 = arith.constant 0 : index
    %351 = vector.load %arg6[%c0_133, %c0_134] : memref<1x128xf32, #tpu.memory_space<vmem>>, vector<1x128xf32>
    %352 = vector.broadcast %351 : vector<1x128xf32> to vector<2x128xf32>
    %353 = arith.addf %350, %352 : vector<2x128xf32>
    %354 = vector.extract_strided_slice %353 {offsets = [0, 0], sizes = [2, 32], strides = [1, 1]} : vector<2x128xf32> to vector<2x32xf32>
    %355 = arith.negf %354 : vector<2x32xf32>
    %356 = math.exp %355 : vector<2x32xf32>
    %cst_135 = arith.constant 1.000000e+00 : f32
    %357 = vector.broadcast %cst_135 : f32 to vector<2x32xf32>
    %358 = arith.addf %357, %356 : vector<2x32xf32>
    %359 = arith.divf %357, %358 : vector<2x32xf32>
    %360 = vector.extract_strided_slice %353 {offsets = [0, 32], sizes = [2, 32], strides = [1, 1]} : vector<2x128xf32> to vector<2x32xf32>
    %361 = arith.negf %360 : vector<2x32xf32>
    %362 = math.exp %361 : vector<2x32xf32>
    %cst_136 = arith.constant 1.000000e+00 : f32
    %363 = vector.broadcast %cst_136 : f32 to vector<2x32xf32>
    %364 = arith.addf %363, %362 : vector<2x32xf32>
    %365 = arith.divf %363, %364 : vector<2x32xf32>
    %366 = vector.extract_strided_slice %353 {offsets = [0, 64], sizes = [2, 32], strides = [1, 1]} : vector<2x128xf32> to vector<2x32xf32>
    %367 = math.tanh %366 : vector<2x32xf32>
    %368 = vector.extract_strided_slice %353 {offsets = [0, 96], sizes = [2, 32], strides = [1, 1]} : vector<2x128xf32> to vector<2x32xf32>
    %369 = arith.negf %368 : vector<2x32xf32>
    %370 = math.exp %369 : vector<2x32xf32>
    %cst_137 = arith.constant 1.000000e+00 : f32
    %371 = vector.broadcast %cst_137 : f32 to vector<2x32xf32>
    %372 = arith.addf %371, %370 : vector<2x32xf32>
    %373 = arith.divf %371, %372 : vector<2x32xf32>
    %374 = arith.mulf %365, %301 : vector<2x32xf32>
    %375 = arith.mulf %359, %367 : vector<2x32xf32>
    %376 = arith.addf %374, %375 : vector<2x32xf32>
    %377 = math.tanh %376 : vector<2x32xf32>
    %378 = arith.mulf %373, %377 : vector<2x32xf32>
    %c5 = arith.constant 5 : index
    %c0_138 = arith.constant 0 : index
    %c0_139 = arith.constant 0 : index
    %379 = vector.load %arg0[%c5, %c0_138, %c0_139] : memref<8x2x16xf32, #tpu.memory_space<vmem>>, vector<1x2x16xf32>
    %380 = vector.shape_cast %379 : vector<1x2x16xf32> to vector<2x16xf32>
    %381 = arith.truncf %380 : vector<2x16xf32> to vector<2x16xbf16>
    %c0_140 = arith.constant 0 : index
    %c0_141 = arith.constant 0 : index
    %382 = vector.load %arg1[%c0_140, %c0_141] : memref<16x128xbf16, #tpu.memory_space<vmem>>, vector<16x128xbf16>
    %cst_142 = arith.constant dense<0.000000e+00> : vector<2x128xf32>
    %383 = tpu.matmul %381, %382, %cst_142 {dimension_numbers = #tpu.dot_dimension_numbers<[1], [0], [0], [1], [0, 0, 1, 1], [], []>} : vector<2x16xbf16>, vector<16x128xbf16>, vector<2x128xf32> -> vector<2x128xf32>
    %384 = arith.truncf %340 : vector<2x32xf32> to vector<2x32xbf16>
    %c0_143 = arith.constant 0 : index
    %c0_144 = arith.constant 0 : index
    %385 = vector.load %arg2[%c0_143, %c0_144] : memref<32x128xbf16, #tpu.memory_space<vmem>>, vector<32x128xbf16>
    %cst_145 = arith.constant dense<0.000000e+00> : vector<2x128xf32>
    %386 = tpu.matmul %384, %385, %cst_145 {dimension_numbers = #tpu.dot_dimension_numbers<[1], [0], [0], [1], [0, 0, 1, 1], [], []>} : vector<2x32xbf16>, vector<32x128xbf16>, vector<2x128xf32> -> vector<2x128xf32>
    %387 = arith.addf %383, %386 : vector<2x128xf32>
    %c0_146 = arith.constant 0 : index
    %c0_147 = arith.constant 0 : index
    %388 = vector.load %arg3[%c0_146, %c0_147] : memref<1x128xf32, #tpu.memory_space<vmem>>, vector<1x128xf32>
    %389 = vector.broadcast %388 : vector<1x128xf32> to vector<2x128xf32>
    %390 = arith.addf %387, %389 : vector<2x128xf32>
    %391 = vector.extract_strided_slice %390 {offsets = [0, 0], sizes = [2, 32], strides = [1, 1]} : vector<2x128xf32> to vector<2x32xf32>
    %392 = arith.negf %391 : vector<2x32xf32>
    %393 = math.exp %392 : vector<2x32xf32>
    %cst_148 = arith.constant 1.000000e+00 : f32
    %394 = vector.broadcast %cst_148 : f32 to vector<2x32xf32>
    %395 = arith.addf %394, %393 : vector<2x32xf32>
    %396 = arith.divf %394, %395 : vector<2x32xf32>
    %397 = vector.extract_strided_slice %390 {offsets = [0, 32], sizes = [2, 32], strides = [1, 1]} : vector<2x128xf32> to vector<2x32xf32>
    %398 = arith.negf %397 : vector<2x32xf32>
    %399 = math.exp %398 : vector<2x32xf32>
    %cst_149 = arith.constant 1.000000e+00 : f32
    %400 = vector.broadcast %cst_149 : f32 to vector<2x32xf32>
    %401 = arith.addf %400, %399 : vector<2x32xf32>
    %402 = arith.divf %400, %401 : vector<2x32xf32>
    %403 = vector.extract_strided_slice %390 {offsets = [0, 64], sizes = [2, 32], strides = [1, 1]} : vector<2x128xf32> to vector<2x32xf32>
    %404 = math.tanh %403 : vector<2x32xf32>
    %405 = vector.extract_strided_slice %390 {offsets = [0, 96], sizes = [2, 32], strides = [1, 1]} : vector<2x128xf32> to vector<2x32xf32>
    %406 = arith.negf %405 : vector<2x32xf32>
    %407 = math.exp %406 : vector<2x32xf32>
    %cst_150 = arith.constant 1.000000e+00 : f32
    %408 = vector.broadcast %cst_150 : f32 to vector<2x32xf32>
    %409 = arith.addf %408, %407 : vector<2x32xf32>
    %410 = arith.divf %408, %409 : vector<2x32xf32>
    %411 = arith.mulf %402, %338 : vector<2x32xf32>
    %412 = arith.mulf %396, %404 : vector<2x32xf32>
    %413 = arith.addf %411, %412 : vector<2x32xf32>
    %414 = math.tanh %413 : vector<2x32xf32>
    %415 = arith.mulf %410, %414 : vector<2x32xf32>
    %c5_151 = arith.constant 5 : index
    %c0_152 = arith.constant 0 : index
    %c0_153 = arith.constant 0 : index
    %416 = vector.load %arg7[%c5_151, %c0_152, %c0_153] : memref<8x2x32xf32, #tpu.memory_space<vmem>>, vector<1x2x32xf32>
    %417 = vector.shape_cast %416 : vector<1x2x32xf32> to vector<2x32xf32>
    %418 = arith.mulf %415, %417 : vector<2x32xf32>
    %419 = arith.truncf %418 : vector<2x32xf32> to vector<2x32xbf16>
    %c0_154 = arith.constant 0 : index
    %c0_155 = arith.constant 0 : index
    %420 = vector.load %arg4[%c0_154, %c0_155] : memref<32x128xbf16, #tpu.memory_space<vmem>>, vector<32x128xbf16>
    %cst_156 = arith.constant dense<0.000000e+00> : vector<2x128xf32>
    %421 = tpu.matmul %419, %420, %cst_156 {dimension_numbers = #tpu.dot_dimension_numbers<[1], [0], [0], [1], [0, 0, 1, 1], [], []>} : vector<2x32xbf16>, vector<32x128xbf16>, vector<2x128xf32> -> vector<2x128xf32>
    %422 = arith.truncf %378 : vector<2x32xf32> to vector<2x32xbf16>
    %c0_157 = arith.constant 0 : index
    %c0_158 = arith.constant 0 : index
    %423 = vector.load %arg5[%c0_157, %c0_158] : memref<32x128xbf16, #tpu.memory_space<vmem>>, vector<32x128xbf16>
    %cst_159 = arith.constant dense<0.000000e+00> : vector<2x128xf32>
    %424 = tpu.matmul %422, %423, %cst_159 {dimension_numbers = #tpu.dot_dimension_numbers<[1], [0], [0], [1], [0, 0, 1, 1], [], []>} : vector<2x32xbf16>, vector<32x128xbf16>, vector<2x128xf32> -> vector<2x128xf32>
    %425 = arith.addf %421, %424 : vector<2x128xf32>
    %c0_160 = arith.constant 0 : index
    %c0_161 = arith.constant 0 : index
    %426 = vector.load %arg6[%c0_160, %c0_161] : memref<1x128xf32, #tpu.memory_space<vmem>>, vector<1x128xf32>
    %427 = vector.broadcast %426 : vector<1x128xf32> to vector<2x128xf32>
    %428 = arith.addf %425, %427 : vector<2x128xf32>
    %429 = vector.extract_strided_slice %428 {offsets = [0, 0], sizes = [2, 32], strides = [1, 1]} : vector<2x128xf32> to vector<2x32xf32>
    %430 = arith.negf %429 : vector<2x32xf32>
    %431 = math.exp %430 : vector<2x32xf32>
    %cst_162 = arith.constant 1.000000e+00 : f32
    %432 = vector.broadcast %cst_162 : f32 to vector<2x32xf32>
    %433 = arith.addf %432, %431 : vector<2x32xf32>
    %434 = arith.divf %432, %433 : vector<2x32xf32>
    %435 = vector.extract_strided_slice %428 {offsets = [0, 32], sizes = [2, 32], strides = [1, 1]} : vector<2x128xf32> to vector<2x32xf32>
    %436 = arith.negf %435 : vector<2x32xf32>
    %437 = math.exp %436 : vector<2x32xf32>
    %cst_163 = arith.constant 1.000000e+00 : f32
    %438 = vector.broadcast %cst_163 : f32 to vector<2x32xf32>
    %439 = arith.addf %438, %437 : vector<2x32xf32>
    %440 = arith.divf %438, %439 : vector<2x32xf32>
    %441 = vector.extract_strided_slice %428 {offsets = [0, 64], sizes = [2, 32], strides = [1, 1]} : vector<2x128xf32> to vector<2x32xf32>
    %442 = math.tanh %441 : vector<2x32xf32>
    %443 = vector.extract_strided_slice %428 {offsets = [0, 96], sizes = [2, 32], strides = [1, 1]} : vector<2x128xf32> to vector<2x32xf32>
    %444 = arith.negf %443 : vector<2x32xf32>
    %445 = math.exp %444 : vector<2x32xf32>
    %cst_164 = arith.constant 1.000000e+00 : f32
    %446 = vector.broadcast %cst_164 : f32 to vector<2x32xf32>
    %447 = arith.addf %446, %445 : vector<2x32xf32>
    %448 = arith.divf %446, %447 : vector<2x32xf32>
    %449 = arith.mulf %440, %376 : vector<2x32xf32>
    %450 = arith.mulf %434, %442 : vector<2x32xf32>
    %451 = arith.addf %449, %450 : vector<2x32xf32>
    %452 = math.tanh %451 : vector<2x32xf32>
    %453 = arith.mulf %448, %452 : vector<2x32xf32>
    %c6 = arith.constant 6 : index
    %c0_165 = arith.constant 0 : index
    %c0_166 = arith.constant 0 : index
    %454 = vector.load %arg0[%c6, %c0_165, %c0_166] : memref<8x2x16xf32, #tpu.memory_space<vmem>>, vector<1x2x16xf32>
    %455 = vector.shape_cast %454 : vector<1x2x16xf32> to vector<2x16xf32>
    %456 = arith.truncf %455 : vector<2x16xf32> to vector<2x16xbf16>
    %c0_167 = arith.constant 0 : index
    %c0_168 = arith.constant 0 : index
    %457 = vector.load %arg1[%c0_167, %c0_168] : memref<16x128xbf16, #tpu.memory_space<vmem>>, vector<16x128xbf16>
    %cst_169 = arith.constant dense<0.000000e+00> : vector<2x128xf32>
    %458 = tpu.matmul %456, %457, %cst_169 {dimension_numbers = #tpu.dot_dimension_numbers<[1], [0], [0], [1], [0, 0, 1, 1], [], []>} : vector<2x16xbf16>, vector<16x128xbf16>, vector<2x128xf32> -> vector<2x128xf32>
    %459 = arith.truncf %415 : vector<2x32xf32> to vector<2x32xbf16>
    %c0_170 = arith.constant 0 : index
    %c0_171 = arith.constant 0 : index
    %460 = vector.load %arg2[%c0_170, %c0_171] : memref<32x128xbf16, #tpu.memory_space<vmem>>, vector<32x128xbf16>
    %cst_172 = arith.constant dense<0.000000e+00> : vector<2x128xf32>
    %461 = tpu.matmul %459, %460, %cst_172 {dimension_numbers = #tpu.dot_dimension_numbers<[1], [0], [0], [1], [0, 0, 1, 1], [], []>} : vector<2x32xbf16>, vector<32x128xbf16>, vector<2x128xf32> -> vector<2x128xf32>
    %462 = arith.addf %458, %461 : vector<2x128xf32>
    %c0_173 = arith.constant 0 : index
    %c0_174 = arith.constant 0 : index
    %463 = vector.load %arg3[%c0_173, %c0_174] : memref<1x128xf32, #tpu.memory_space<vmem>>, vector<1x128xf32>
    %464 = vector.broadcast %463 : vector<1x128xf32> to vector<2x128xf32>
    %465 = arith.addf %462, %464 : vector<2x128xf32>
    %466 = vector.extract_strided_slice %465 {offsets = [0, 0], sizes = [2, 32], strides = [1, 1]} : vector<2x128xf32> to vector<2x32xf32>
    %467 = arith.negf %466 : vector<2x32xf32>
    %468 = math.exp %467 : vector<2x32xf32>
    %cst_175 = arith.constant 1.000000e+00 : f32
    %469 = vector.broadcast %cst_175 : f32 to vector<2x32xf32>
    %470 = arith.addf %469, %468 : vector<2x32xf32>
    %471 = arith.divf %469, %470 : vector<2x32xf32>
    %472 = vector.extract_strided_slice %465 {offsets = [0, 32], sizes = [2, 32], strides = [1, 1]} : vector<2x128xf32> to vector<2x32xf32>
    %473 = arith.negf %472 : vector<2x32xf32>
    %474 = math.exp %473 : vector<2x32xf32>
    %cst_176 = arith.constant 1.000000e+00 : f32
    %475 = vector.broadcast %cst_176 : f32 to vector<2x32xf32>
    %476 = arith.addf %475, %474 : vector<2x32xf32>
    %477 = arith.divf %475, %476 : vector<2x32xf32>
    %478 = vector.extract_strided_slice %465 {offsets = [0, 64], sizes = [2, 32], strides = [1, 1]} : vector<2x128xf32> to vector<2x32xf32>
    %479 = math.tanh %478 : vector<2x32xf32>
    %480 = vector.extract_strided_slice %465 {offsets = [0, 96], sizes = [2, 32], strides = [1, 1]} : vector<2x128xf32> to vector<2x32xf32>
    %481 = arith.negf %480 : vector<2x32xf32>
    %482 = math.exp %481 : vector<2x32xf32>
    %cst_177 = arith.constant 1.000000e+00 : f32
    %483 = vector.broadcast %cst_177 : f32 to vector<2x32xf32>
    %484 = arith.addf %483, %482 : vector<2x32xf32>
    %485 = arith.divf %483, %484 : vector<2x32xf32>
    %486 = arith.mulf %477, %413 : vector<2x32xf32>
    %487 = arith.mulf %471, %479 : vector<2x32xf32>
    %488 = arith.addf %486, %487 : vector<2x32xf32>
    %489 = math.tanh %488 : vector<2x32xf32>
    %490 = arith.mulf %485, %489 : vector<2x32xf32>
    %c6_178 = arith.constant 6 : index
    %c0_179 = arith.constant 0 : index
    %c0_180 = arith.constant 0 : index
    %491 = vector.load %arg7[%c6_178, %c0_179, %c0_180] : memref<8x2x32xf32, #tpu.memory_space<vmem>>, vector<1x2x32xf32>
    %492 = vector.shape_cast %491 : vector<1x2x32xf32> to vector<2x32xf32>
    %493 = arith.mulf %490, %492 : vector<2x32xf32>
    %494 = arith.truncf %493 : vector<2x32xf32> to vector<2x32xbf16>
    %c0_181 = arith.constant 0 : index
    %c0_182 = arith.constant 0 : index
    %495 = vector.load %arg4[%c0_181, %c0_182] : memref<32x128xbf16, #tpu.memory_space<vmem>>, vector<32x128xbf16>
    %cst_183 = arith.constant dense<0.000000e+00> : vector<2x128xf32>
    %496 = tpu.matmul %494, %495, %cst_183 {dimension_numbers = #tpu.dot_dimension_numbers<[1], [0], [0], [1], [0, 0, 1, 1], [], []>} : vector<2x32xbf16>, vector<32x128xbf16>, vector<2x128xf32> -> vector<2x128xf32>
    %497 = arith.truncf %453 : vector<2x32xf32> to vector<2x32xbf16>
    %c0_184 = arith.constant 0 : index
    %c0_185 = arith.constant 0 : index
    %498 = vector.load %arg5[%c0_184, %c0_185] : memref<32x128xbf16, #tpu.memory_space<vmem>>, vector<32x128xbf16>
    %cst_186 = arith.constant dense<0.000000e+00> : vector<2x128xf32>
    %499 = tpu.matmul %497, %498, %cst_186 {dimension_numbers = #tpu.dot_dimension_numbers<[1], [0], [0], [1], [0, 0, 1, 1], [], []>} : vector<2x32xbf16>, vector<32x128xbf16>, vector<2x128xf32> -> vector<2x128xf32>
    %500 = arith.addf %496, %499 : vector<2x128xf32>
    %c0_187 = arith.constant 0 : index
    %c0_188 = arith.constant 0 : index
    %501 = vector.load %arg6[%c0_187, %c0_188] : memref<1x128xf32, #tpu.memory_space<vmem>>, vector<1x128xf32>
    %502 = vector.broadcast %501 : vector<1x128xf32> to vector<2x128xf32>
    %503 = arith.addf %500, %502 : vector<2x128xf32>
    %504 = vector.extract_strided_slice %503 {offsets = [0, 0], sizes = [2, 32], strides = [1, 1]} : vector<2x128xf32> to vector<2x32xf32>
    %505 = arith.negf %504 : vector<2x32xf32>
    %506 = math.exp %505 : vector<2x32xf32>
    %cst_189 = arith.constant 1.000000e+00 : f32
    %507 = vector.broadcast %cst_189 : f32 to vector<2x32xf32>
    %508 = arith.addf %507, %506 : vector<2x32xf32>
    %509 = arith.divf %507, %508 : vector<2x32xf32>
    %510 = vector.extract_strided_slice %503 {offsets = [0, 32], sizes = [2, 32], strides = [1, 1]} : vector<2x128xf32> to vector<2x32xf32>
    %511 = arith.negf %510 : vector<2x32xf32>
    %512 = math.exp %511 : vector<2x32xf32>
    %cst_190 = arith.constant 1.000000e+00 : f32
    %513 = vector.broadcast %cst_190 : f32 to vector<2x32xf32>
    %514 = arith.addf %513, %512 : vector<2x32xf32>
    %515 = arith.divf %513, %514 : vector<2x32xf32>
    %516 = vector.extract_strided_slice %503 {offsets = [0, 64], sizes = [2, 32], strides = [1, 1]} : vector<2x128xf32> to vector<2x32xf32>
    %517 = math.tanh %516 : vector<2x32xf32>
    %518 = vector.extract_strided_slice %503 {offsets = [0, 96], sizes = [2, 32], strides = [1, 1]} : vector<2x128xf32> to vector<2x32xf32>
    %519 = arith.negf %518 : vector<2x32xf32>
    %520 = math.exp %519 : vector<2x32xf32>
    %cst_191 = arith.constant 1.000000e+00 : f32
    %521 = vector.broadcast %cst_191 : f32 to vector<2x32xf32>
    %522 = arith.addf %521, %520 : vector<2x32xf32>
    %523 = arith.divf %521, %522 : vector<2x32xf32>
    %524 = arith.mulf %515, %451 : vector<2x32xf32>
    %525 = arith.mulf %509, %517 : vector<2x32xf32>
    %526 = arith.addf %524, %525 : vector<2x32xf32>
    %527 = math.tanh %526 : vector<2x32xf32>
    %528 = arith.mulf %523, %527 : vector<2x32xf32>
    %c7 = arith.constant 7 : index
    %c0_192 = arith.constant 0 : index
    %c0_193 = arith.constant 0 : index
    %529 = vector.load %arg0[%c7, %c0_192, %c0_193] : memref<8x2x16xf32, #tpu.memory_space<vmem>>, vector<1x2x16xf32>
    %530 = vector.shape_cast %529 : vector<1x2x16xf32> to vector<2x16xf32>
    %531 = arith.truncf %530 : vector<2x16xf32> to vector<2x16xbf16>
    %c0_194 = arith.constant 0 : index
    %c0_195 = arith.constant 0 : index
    %532 = vector.load %arg1[%c0_194, %c0_195] : memref<16x128xbf16, #tpu.memory_space<vmem>>, vector<16x128xbf16>
    %cst_196 = arith.constant dense<0.000000e+00> : vector<2x128xf32>
    %533 = tpu.matmul %531, %532, %cst_196 {dimension_numbers = #tpu.dot_dimension_numbers<[1], [0], [0], [1], [0, 0, 1, 1], [], []>} : vector<2x16xbf16>, vector<16x128xbf16>, vector<2x128xf32> -> vector<2x128xf32>
    %534 = arith.truncf %490 : vector<2x32xf32> to vector<2x32xbf16>
    %c0_197 = arith.constant 0 : index
    %c0_198 = arith.constant 0 : index
    %535 = vector.load %arg2[%c0_197, %c0_198] : memref<32x128xbf16, #tpu.memory_space<vmem>>, vector<32x128xbf16>
    %cst_199 = arith.constant dense<0.000000e+00> : vector<2x128xf32>
    %536 = tpu.matmul %534, %535, %cst_199 {dimension_numbers = #tpu.dot_dimension_numbers<[1], [0], [0], [1], [0, 0, 1, 1], [], []>} : vector<2x32xbf16>, vector<32x128xbf16>, vector<2x128xf32> -> vector<2x128xf32>
    %537 = arith.addf %533, %536 : vector<2x128xf32>
    %c0_200 = arith.constant 0 : index
    %c0_201 = arith.constant 0 : index
    %538 = vector.load %arg3[%c0_200, %c0_201] : memref<1x128xf32, #tpu.memory_space<vmem>>, vector<1x128xf32>
    %539 = vector.broadcast %538 : vector<1x128xf32> to vector<2x128xf32>
    %540 = arith.addf %537, %539 : vector<2x128xf32>
    %541 = vector.extract_strided_slice %540 {offsets = [0, 0], sizes = [2, 32], strides = [1, 1]} : vector<2x128xf32> to vector<2x32xf32>
    %542 = arith.negf %541 : vector<2x32xf32>
    %543 = math.exp %542 : vector<2x32xf32>
    %cst_202 = arith.constant 1.000000e+00 : f32
    %544 = vector.broadcast %cst_202 : f32 to vector<2x32xf32>
    %545 = arith.addf %544, %543 : vector<2x32xf32>
    %546 = arith.divf %544, %545 : vector<2x32xf32>
    %547 = vector.extract_strided_slice %540 {offsets = [0, 32], sizes = [2, 32], strides = [1, 1]} : vector<2x128xf32> to vector<2x32xf32>
    %548 = arith.negf %547 : vector<2x32xf32>
    %549 = math.exp %548 : vector<2x32xf32>
    %cst_203 = arith.constant 1.000000e+00 : f32
    %550 = vector.broadcast %cst_203 : f32 to vector<2x32xf32>
    %551 = arith.addf %550, %549 : vector<2x32xf32>
    %552 = arith.divf %550, %551 : vector<2x32xf32>
    %553 = vector.extract_strided_slice %540 {offsets = [0, 64], sizes = [2, 32], strides = [1, 1]} : vector<2x128xf32> to vector<2x32xf32>
    %554 = math.tanh %553 : vector<2x32xf32>
    %555 = vector.extract_strided_slice %540 {offsets = [0, 96], sizes = [2, 32], strides = [1, 1]} : vector<2x128xf32> to vector<2x32xf32>
    %556 = arith.negf %555 : vector<2x32xf32>
    %557 = math.exp %556 : vector<2x32xf32>
    %cst_204 = arith.constant 1.000000e+00 : f32
    %558 = vector.broadcast %cst_204 : f32 to vector<2x32xf32>
    %559 = arith.addf %558, %557 : vector<2x32xf32>
    %560 = arith.divf %558, %559 : vector<2x32xf32>
    %561 = arith.mulf %552, %488 : vector<2x32xf32>
    %562 = arith.mulf %546, %554 : vector<2x32xf32>
    %563 = arith.addf %561, %562 : vector<2x32xf32>
    %564 = math.tanh %563 : vector<2x32xf32>
    %565 = arith.mulf %560, %564 : vector<2x32xf32>
    %c7_205 = arith.constant 7 : index
    %c0_206 = arith.constant 0 : index
    %c0_207 = arith.constant 0 : index
    %566 = vector.load %arg7[%c7_205, %c0_206, %c0_207] : memref<8x2x32xf32, #tpu.memory_space<vmem>>, vector<1x2x32xf32>
    %567 = vector.shape_cast %566 : vector<1x2x32xf32> to vector<2x32xf32>
    %568 = arith.mulf %565, %567 : vector<2x32xf32>
    %569 = arith.truncf %568 : vector<2x32xf32> to vector<2x32xbf16>
    %c0_208 = arith.constant 0 : index
    %c0_209 = arith.constant 0 : index
    %570 = vector.load %arg4[%c0_208, %c0_209] : memref<32x128xbf16, #tpu.memory_space<vmem>>, vector<32x128xbf16>
    %cst_210 = arith.constant dense<0.000000e+00> : vector<2x128xf32>
    %571 = tpu.matmul %569, %570, %cst_210 {dimension_numbers = #tpu.dot_dimension_numbers<[1], [0], [0], [1], [0, 0, 1, 1], [], []>} : vector<2x32xbf16>, vector<32x128xbf16>, vector<2x128xf32> -> vector<2x128xf32>
    %572 = arith.truncf %528 : vector<2x32xf32> to vector<2x32xbf16>
    %c0_211 = arith.constant 0 : index
    %c0_212 = arith.constant 0 : index
    %573 = vector.load %arg5[%c0_211, %c0_212] : memref<32x128xbf16, #tpu.memory_space<vmem>>, vector<32x128xbf16>
    %cst_213 = arith.constant dense<0.000000e+00> : vector<2x128xf32>
    %574 = tpu.matmul %572, %573, %cst_213 {dimension_numbers = #tpu.dot_dimension_numbers<[1], [0], [0], [1], [0, 0, 1, 1], [], []>} : vector<2x32xbf16>, vector<32x128xbf16>, vector<2x128xf32> -> vector<2x128xf32>
    %575 = arith.addf %571, %574 : vector<2x128xf32>
    %c0_214 = arith.constant 0 : index
    %c0_215 = arith.constant 0 : index
    %576 = vector.load %arg6[%c0_214, %c0_215] : memref<1x128xf32, #tpu.memory_space<vmem>>, vector<1x128xf32>
    %577 = vector.broadcast %576 : vector<1x128xf32> to vector<2x128xf32>
    %578 = arith.addf %575, %577 : vector<2x128xf32>
    %579 = vector.extract_strided_slice %578 {offsets = [0, 0], sizes = [2, 32], strides = [1, 1]} : vector<2x128xf32> to vector<2x32xf32>
    %580 = arith.negf %579 : vector<2x32xf32>
    %581 = math.exp %580 : vector<2x32xf32>
    %cst_216 = arith.constant 1.000000e+00 : f32
    %582 = vector.broadcast %cst_216 : f32 to vector<2x32xf32>
    %583 = arith.addf %582, %581 : vector<2x32xf32>
    %584 = arith.divf %582, %583 : vector<2x32xf32>
    %585 = vector.extract_strided_slice %578 {offsets = [0, 32], sizes = [2, 32], strides = [1, 1]} : vector<2x128xf32> to vector<2x32xf32>
    %586 = arith.negf %585 : vector<2x32xf32>
    %587 = math.exp %586 : vector<2x32xf32>
    %cst_217 = arith.constant 1.000000e+00 : f32
    %588 = vector.broadcast %cst_217 : f32 to vector<2x32xf32>
    %589 = arith.addf %588, %587 : vector<2x32xf32>
    %590 = arith.divf %588, %589 : vector<2x32xf32>
    %591 = vector.extract_strided_slice %578 {offsets = [0, 64], sizes = [2, 32], strides = [1, 1]} : vector<2x128xf32> to vector<2x32xf32>
    %592 = math.tanh %591 : vector<2x32xf32>
    %593 = vector.extract_strided_slice %578 {offsets = [0, 96], sizes = [2, 32], strides = [1, 1]} : vector<2x128xf32> to vector<2x32xf32>
    %594 = arith.negf %593 : vector<2x32xf32>
    %595 = math.exp %594 : vector<2x32xf32>
    %cst_218 = arith.constant 1.000000e+00 : f32
    %596 = vector.broadcast %cst_218 : f32 to vector<2x32xf32>
    %597 = arith.addf %596, %595 : vector<2x32xf32>
    %598 = arith.divf %596, %597 : vector<2x32xf32>
    %599 = arith.mulf %590, %526 : vector<2x32xf32>
    %600 = arith.mulf %584, %592 : vector<2x32xf32>
    %601 = arith.addf %599, %600 : vector<2x32xf32>
    %602 = math.tanh %601 : vector<2x32xf32>
    %603 = arith.mulf %598, %602 : vector<2x32xf32>
    %604 = arith.truncf %603 : vector<2x32xf32> to vector<2x32xbf16>
    %c0_219 = arith.constant 0 : index
    %c0_220 = arith.constant 0 : index
    %605 = vector.load %arg8[%c0_219, %c0_220] : memref<32x128xbf16, #tpu.memory_space<vmem>>, vector<32x128xbf16>
    %cst_221 = arith.constant dense<0.000000e+00> : vector<2x128xf32>
    %606 = tpu.matmul %604, %605, %cst_221 {dimension_numbers = #tpu.dot_dimension_numbers<[1], [0], [0], [1], [0, 0, 1, 1], [], []>} : vector<2x32xbf16>, vector<32x128xbf16>, vector<2x128xf32> -> vector<2x128xf32>
    %c0_222 = arith.constant 0 : index
    %c0_223 = arith.constant 0 : index
    %607 = vector.load %arg9[%c0_222, %c0_223] : memref<1x128xf32, #tpu.memory_space<vmem>>, vector<1x128xf32>
    %608 = vector.broadcast %607 : vector<1x128xf32> to vector<2x128xf32>
    %609 = arith.addf %606, %608 : vector<2x128xf32>
    %c0_224 = arith.constant 0 : index
    %c0_225 = arith.constant 0 : index
    %610 = vector.load %arg10[%c0_224, %c0_225] : memref<2x128xf32, #tpu.memory_space<vmem>>, vector<2x128xf32>
    tpu.vector_store %arg10[%c0_224, %c0_225], %609 {strides = array<i32>} : memref<2x128xf32, #tpu.memory_space<vmem>>, vector<2x128xf32>,
    return
  }
}

</mosaic_0001>

<llo_original>
// kernel: tpu_custom_call.1
$region0: #{tpu_custom_call.1}
  #allocation0 [shape = 'u32[]', space=smem, size = 0x4, offset = 0x4, fixed_abs, tag = 'smem constant byte address 0x4 - core index']
  #allocation1 [shape = 'u32[144,128]{1,0:T(1,128)}', space=vmem, size = 0x12000, scoped, tag = 'internal scratch']
  %s0 = inlined_call_operand.hbm [shape: f32[8,2,16], index: 0, kind: input, shape index: {}]
  %s1 = inlined_call_operand.hbm [shape: bf16[16,128], index: 1, kind: input, shape index: {}]
  %s2 = inlined_call_operand.hbm [shape: bf16[32,128], index: 2, kind: input, shape index: {}]
  %s3 = inlined_call_operand.vmem [shape: f32[1,128], index: 3, kind: input, shape index: {}]
  %s4 = inlined_call_operand.hbm [shape: bf16[32,128], index: 4, kind: input, shape index: {}]
  %s5 = inlined_call_operand.vmem [shape: bf16[32,128], index: 5, kind: input, shape index: {}]
  %s6 = inlined_call_operand.vmem [shape: f32[1,128], index: 6, kind: input, shape index: {}]
  %s7 = inlined_call_operand.hbm [shape: f32[8,2,32], index: 7, kind: input, shape index: {}]
  %s8 = inlined_call_operand.hbm [shape: bf16[32,128], index: 8, kind: input, shape index: {}]
  %s9 = inlined_call_operand.vmem [shape: f32[1,128], index: 9, kind: input, shape index: {}]
  %s10 = inlined_call_operand.hbm [shape: f32[2,128], index: 10, kind: output, shape index: {}]
  %s11 = sld [smem:[#allocation0]]
  $region74: #{tpu_custom_call.1} parent=0
    _
  %s13 = ssub.s32 1, %s11
  %s14 = scalar_select 0, %s13, %s11
  $region1: #{tpu_custom_call.1} parent=0
    #allocation2 [shape = 'u8[8192]{0}', space=vmem, size = 0x2000, scoped, tag = 'input window, operand 0, single buffered']
    #allocation3 [shape = 's32[1]{0}', space=sflag, size = 0x4, scoped, tag = 'scoped memory for tpu_custom_call.1']
    #allocation4 [shape = 's32[1]{0}', space=sflag, size = 0x4, scoped, tag = 'scoped memory for tpu_custom_call.1']
    #allocation5 [shape = 'u8[4096]{0}', space=vmem, size = 0x1000, scoped, tag = 'input window, operand 1, single buffered']
    #allocation6 [shape = 's32[1]{0}', space=sflag, size = 0x4, scoped, tag = 'scoped memory for tpu_custom_call.1']
    #allocation7 [shape = 'u8[8192]{0}', space=vmem, size = 0x2000, scoped, tag = 'input window, operand 2, single buffered']
    #allocation8 [shape = 'u8[8192]{0}', space=vmem, size = 0x2000, scoped, tag = 'input window, operand 4, single buffered']
    #allocation9 [shape = 's32[1]{0}', space=sflag, size = 0x4, scoped, tag = 'scoped memory for tpu_custom_call.1']
    #allocation10 [shape = 'u8[8192]{0}', space=vmem, size = 0x2000, scoped, tag = 'input window, operand 7, single buffered']
    #allocation11 [shape = 'u8[8192]{0}', space=vmem, size = 0x2000, scoped, tag = 'input window, operand 8, single buffered']
    #allocation12 [shape = 's32[1]{0}', space=sflag, size = 0x4, scoped, tag = 'scoped memory for tpu_custom_call.1']
    #allocation13 [shape = 'u8[1024]{0}', space=vmem, size = 0x400, scoped, tag = 'output window, operand 0, single buffered']
    %15 = vsyncpa [#allocation3], 0
    %16 = vsyncpa [#allocation6], 0
    %17 = vsyncpa [#allocation9], 0
    %18 = vsyncpa [#allocation12], 0
    %19 = vsyncpa [#allocation4], 0
    // Predicated region
    $region2: #{tpu_custom_call.1} parent=1 // pred_check
      _
    $region3: #{tpu_custom_call.1} parent=1 // pred_check_branch
      %21 = sbr.rel (0) target = $region5
    $region4: #{tpu_custom_call.1} parent=1 // pred_region
      %s23 = ssub.s32 256, 256
      %24 = vsyncadd [#allocation3], %s23
      %s25 = sshll.u32 [#allocation2], 4
      %s26 = int_to_ptr.vmem [resolvable:$true] %s25
      %31 = dma.hbm_to_vmem [thread:$0]  %s0, 256, %s26, [#allocation3], 32, 32, 2
    $region5: #{tpu_custom_call.1} parent=1 // pred_fallthru
      _
    // Predicated region
    $region6: #{tpu_custom_call.1} parent=1 // pred_check
      _
    $region7: #{tpu_custom_call.1} parent=1 // pred_check_branch
      %33 = sbr.rel (0) target = $region9
    $region8: #{tpu_custom_call.1} parent=1 // pred_region
      %s35 = ssub.s32 128, 128
      %36 = vsyncadd [#allocation6], %s35
      %s37 = sshll.u32 [#allocation5], 4
      %s38 = int_to_ptr.vmem [resolvable:$true] %s37
      %43 = dma.hbm_to_vmem [thread:$0]  %s1, 128, %s38, [#allocation6], 64, 64, 4
    $region9: #{tpu_custom_call.1} parent=1 // pred_fallthru
      _
    // Predicated region
    $region10: #{tpu_custom_call.1} parent=1 // pred_check
      _
    $region11: #{tpu_custom_call.1} parent=1 // pred_check_branch
      %45 = sbr.rel (0) target = $region13
    $region12: #{tpu_custom_call.1} parent=1 // pred_region
      %s47 = ssub.s32 256, 256
      %48 = vsyncadd [#allocation6], %s47
      %s49 = sshll.u32 [#allocation7], 4
      %s50 = int_to_ptr.vmem [resolvable:$true] %s49
      %55 = dma.hbm_to_vmem [thread:$0]  %s2, 256, %s50, [#allocation6], 64, 64, 4
    $region13: #{tpu_custom_call.1} parent=1 // pred_fallthru
      _
    // Predicated region
    $region14: #{tpu_custom_call.1} parent=1 // pred_check
      _
    $region15: #{tpu_custom_call.1} parent=1 // pred_check_branch
      %57 = sbr.rel (0) target = $region17
    $region16: #{tpu_custom_call.1} parent=1 // pred_region
      _
    $region17: #{tpu_custom_call.1} parent=1 // pred_fallthru
      _
    // Predicated region
    $region18: #{tpu_custom_call.1} parent=1 // pred_check
      _
    $region19: #{tpu_custom_call.1} parent=1 // pred_check_branch
      %59 = sbr.rel (0) target = $region21
    $region20: #{tpu_custom_call.1} parent=1 // pred_region
      %s61 = ssub.s32 256, 256
      %62 = vsyncadd [#allocation9], %s61
      %s63 = sshll.u32 [#allocation8], 4
      %s64 = int_to_ptr.vmem [resolvable:$true] %s63
      %69 = dma.hbm_to_vmem [thread:$0]  %s4, 256, %s64, [#allocation9], 64, 64, 4
    $region21: #{tpu_custom_call.1} parent=1 // pred_fallthru
      _
    // Predicated region
    $region22: #{tpu_custom_call.1} parent=1 // pred_check
      _
    $region23: #{tpu_custom_call.1} parent=1 // pred_check_branch
      %71 = sbr.rel (0) target = $region25
    $region24: #{tpu_custom_call.1} parent=1 // pred_region
      _
    $region25: #{tpu_custom_call.1} parent=1 // pred_fallthru
      _
    // Predicated region
    $region26: #{tpu_custom_call.1} parent=1 // pred_check
      _
    $region27: #{tpu_custom_call.1} parent=1 // pred_check_branch
      %73 = sbr.rel (0) target = $region29
    $region28: #{tpu_custom_call.1} parent=1 // pred_region
      _
    $region29: #{tpu_custom_call.1} parent=1 // pred_fallthru
      _
    // Predicated region
    $region30: #{tpu_custom_call.1} parent=1 // pred_check
      _
    $region31: #{tpu_custom_call.1} parent=1 // pred_check_branch
      %75 = sbr.rel (0) target = $region33
    $region32: #{tpu_custom_call.1} parent=1 // pred_region
      %s77 = ssub.s32 256, 256
      %78 = vsyncadd [#allocation9], %s77
      %s79 = sshll.u32 [#allocation10], 4
      %s80 = int_to_ptr.vmem [resolvable:$true] %s79
      %85 = dma.hbm_to_vmem [thread:$0]  %s7, 256, %s80, [#allocation9], 32, 32, 2
    $region33: #{tpu_custom_call.1} parent=1 // pred_fallthru
      _
    // Predicated region
    $region34: #{tpu_custom_call.1} parent=1 // pred_check
      _
    $region35: #{tpu_custom_call.1} parent=1 // pred_check_branch
      %87 = sbr.rel (0) target = $region37
    $region36: #{tpu_custom_call.1} parent=1 // pred_region
      %s89 = ssub.s32 256, 256
      %90 = vsyncadd [#allocation12], %s89
      %s91 = sshll.u32 [#allocation11], 4
      %s92 = int_to_ptr.vmem [resolvable:$true] %s91
      %97 = dma.hbm_to_vmem [thread:$0]  %s8, 256, %s92, [#allocation12], 64, 64, 4
    $region37: #{tpu_custom_call.1} parent=1 // pred_fallthru
      _
    // Predicated region
    $region38: #{tpu_custom_call.1} parent=1 // pred_check
      _
    $region39: #{tpu_custom_call.1} parent=1 // pred_check_branch
      %99 = sbr.rel (0) target = $region41
    $region40: #{tpu_custom_call.1} parent=1 // pred_region
      _
    $region41: #{tpu_custom_call.1} parent=1 // pred_fallthru
      _
    // Predicated region
    $region42: #{tpu_custom_call.1} parent=1 // pred_check
      _
    $region43: #{tpu_custom_call.1} parent=1 // pred_check_branch
      %101 = sbr.rel (0) target = $region45
    $region44: #{tpu_custom_call.1} parent=1 // pred_region
      %102 = dma.done [#allocation3], 256
    $region45: #{tpu_custom_call.1} parent=1 // pred_fallthru
      _
    // Predicated region
    $region46: #{tpu_custom_call.1} parent=1 // pred_check
      _
    $region47: #{tpu_custom_call.1} parent=1 // pred_check_branch
      %104 = sbr.rel (0) target = $region49
    $region48: #{tpu_custom_call.1} parent=1 // pred_region
      %105 = dma.done [#allocation6], 128
    $region49: #{tpu_custom_call.1} parent=1 // pred_fallthru
      _
    // Predicated region
    $region50: #{tpu_custom_call.1} parent=1 // pred_check
      _
    $region51: #{tpu_custom_call.1} parent=1 // pred_check_branch
      %107 = sbr.rel (0) target = $region53
    $region52: #{tpu_custom_call.1} parent=1 // pred_region
      %108 = dma.done [#allocation6], 256
    $region53: #{tpu_custom_call.1} parent=1 // pred_fallthru
      _
    // Predicated region
    $region54: #{tpu_custom_call.1} parent=1 // pred_check
      _
    $region55: #{tpu_custom_call.1} parent=1 // pred_check_branch
      %110 = sbr.rel (0) target = $region57
    $region56: #{tpu_custom_call.1} parent=1 // pred_region
      %111 = dma.done [#allocation9], 256
    $region57: #{tpu_custom_call.1} parent=1 // pred_fallthru
      _
    // Predicated region
    $region58: #{tpu_custom_call.1} parent=1 // pred_check
      _
    $region59: #{tpu_custom_call.1} parent=1 // pred_check_branch
      %113 = sbr.rel (0) target = $region61
    $region60: #{tpu_custom_call.1} parent=1 // pred_region
      %114 = dma.done [#allocation9], 256
    $region61: #{tpu_custom_call.1} parent=1 // pred_fallthru
      _
    // Predicated region
    $region62: #{tpu_custom_call.1} parent=1 // pred_check
      _
    $region63: #{tpu_custom_call.1} parent=1 // pred_check_branch
      %116 = sbr.rel (0) target = $region65
    $region64: #{tpu_custom_call.1} parent=1 // pred_region
      %117 = dma.done [#allocation12], 256
    $region65: #{tpu_custom_call.1} parent=1 // pred_fallthru
      _
    %v119 = vld [vmem:[#allocation2] sm:$0x3]
    %v120 = vpack.c.bf16 %v119, %v119
    %v121 = vld [vmem:[#allocation5] sm:$0xf]
    %v122 = vld [vmem:[#allocation5 + $0x4] sm:$0xf]
    %v123 = vld [vmem:[#allocation7] sm:$0xf]
    %v124 = vld [vmem:[#allocation7 + $0x4] sm:$0xf]
    %v125 = vld [vmem:[#allocation7 + $0x8] sm:$0xf]
    %v126 = vld [vmem:[#allocation7 + $0xc] sm:$0xf]
    %v131 = vunpack.c.l.b16 %v123
    %v132 = vunpack.c.l.b16 %v124
    %v133 = vunpack.c.l.b16 %v125
    %v134 = vunpack.c.l.b16 %v126
    %v135 = vpack.c.b16 %v132, %v131
    %v136 = vpack.c.b16 %v134, %v133
    %vm139 = vcmask 261120
    %v141 = vsel %vm139, 0, 0
    %143 = vmatprep.subr.bf16.mxu0 0
    %144 = vmatpush1.bf16.msra.mxu0 %v135
    %145 = vmatprep.subr.bf16.mxu0 0
    %146 = vmatpush1.bf16.msra.mxu0 %v136
    %147 = vmatprep.subr.bf16.mxu0 0
    %148 = vmatpush1.bf16.msra.mxu0 0
    %149 = vmatprep.subr.bf16.mxu0 0
    %150 = vmatpush1.bf16.msra.mxu0 0
    %151 = vmatprep.subr.bf16.mxu0 0
    %152 = vmatpush1.bf16.msra.mxu0 0
    %153 = vmatprep.subr.bf16.mxu0 0
    %154 = vmatpush1.bf16.msra.mxu0 0
    %155 = vmatprep.subr.bf16.mxu0 0
    %156 = vmatpush1.bf16.msra.mxu0 0
    %157 = vmatprep.subr.bf16.mxu0 0
    %158 = vmatpush1.bf16.msra.mxu0 0
    %159 = vmatprep.subr.bf16.mxu0 0
    %160 = vmatpush1.bf16.msra.mxu0 0
    %161 = vmatprep.subr.bf16.mxu0 0
    %162 = vmatpush1.bf16.msra.mxu0 0
    %163 = vmatprep.subr.bf16.mxu0 0
    %164 = vmatpush1.bf16.msra.mxu0 0
    %165 = vmatprep.subr.bf16.mxu0 0
    %166 = vmatpush1.bf16.msra.mxu0 0
    %167 = vmatprep.subr.bf16.mxu0 0
    %168 = vmatpush1.bf16.msra.mxu0 0
    %169 = vmatprep.subr.bf16.mxu0 0
    %170 = vmatpush1.bf16.msra.mxu0 0
    %171 = vmatprep.subr.bf16.mxu0 0
    %172 = vmatpush1.bf16.msra.mxu0 0
    %173 = vmatprep.subr.bf16.mxu0 0
    %174 = vmatpush1.bf16.msra.mxu0 0
    %175 = vmatprep.mubr.bf16.mxu0 0
    %176 = vmatmul.mubr.bf16.gmra.mrb[0].mxu0 %v141
    %v177 = vpop.f32.mrb[0].mxu0
    %v178 = vadd.f32 0.0, %v177
    %v179 = vpop.f32.mrb[0].mxu0
    %v180 = vpop.f32.mrb[0].mxu0
    %v181 = vpop.f32.mrb[0].mxu0
    %182 = vdwg.mxu0
    %v185 = vunpack.c.l.b16 %v121
    %v186 = vunpack.c.l.b16 %v122
    %v187 = vpack.c.b16 %v186, %v185
    %vm189 = vcmask 130048
    %v191 = vsel %vm189, %v120, 0
    %193 = vmatprep.subr.bf16.mxu0 0
    %194 = vmatpush1.bf16.msra.mxu0 %v187
    %195 = vmatprep.subr.bf16.mxu0 0
    %196 = vmatpush1.bf16.msra.mxu0 0
    %197 = vmatprep.subr.bf16.mxu0 0
    %198 = vmatpush1.bf16.msra.mxu0 0
    %199 = vmatprep.subr.bf16.mxu0 0
    %200 = vmatpush1.bf16.msra.mxu0 0
    %201 = vmatprep.subr.bf16.mxu0 0
    %202 = vmatpush1.bf16.msra.mxu0 0
    %203 = vmatprep.subr.bf16.mxu0 0
    %204 = vmatpush1.bf16.msra.mxu0 0
    %205 = vmatprep.subr.bf16.mxu0 0
    %206 = vmatpush1.bf16.msra.mxu0 0
    %207 = vmatprep.subr.bf16.mxu0 0
    %208 = vmatpush1.bf16.msra.mxu0 0
    %209 = vmatprep.subr.bf16.mxu0 0
    %210 = vmatpush1.bf16.msra.mxu0 0
    %211 = vmatprep.subr.bf16.mxu0 0
    %212 = vmatpush1.bf16.msra.mxu0 0
    %213 = vmatprep.subr.bf16.mxu0 0
    %214 = vmatpush1.bf16.msra.mxu0 0
    %215 = vmatprep.subr.bf16.mxu0 0
    %216 = vmatpush1.bf16.msra.mxu0 0
    %217 = vmatprep.subr.bf16.mxu0 0
    %218 = vmatpush1.bf16.msra.mxu0 0
    %219 = vmatprep.subr.bf16.mxu0 0
    %220 = vmatpush1.bf16.msra.mxu0 0
    %221 = vmatprep.subr.bf16.mxu0 0
    %222 = vmatpush1.bf16.msra.mxu0 0
    %223 = vmatprep.subr.bf16.mxu0 0
    %224 = vmatpush1.bf16.msra.mxu0 0
    %225 = vmatprep.mubr.bf16.mxu0 0
    %226 = vmatmul.mubr.bf16.gmra.mrb[0].mxu0 %v191
    %v227 = vpop.f32.mrb[0].mxu0
    %v228 = vadd.f32 %v178, %v227
    %v229 = vpop.f32.mrb[0].mxu0
    %v230 = vpop.f32.mrb[0].mxu0
    %v231 = vpop.f32.mrb[0].mxu0
    %232 = vdwg.mxu0
    %v233 = vld [vmem:[%s3] sm:$0x1]
    %v235 = vlaneseq
    %v236 = vshrl.u32 %v235, 7
    %v237 = vsub.s32 0, %v236
    %v238 = vrot.slane %v233, %v237
    %v240 = vadd.f32 %v228, %v238
    %v241 = vxor.u32 %v240, 2147483648
    %v242 = vmul.f32 %v241, 1.442695
    %v243 = vpow.pop %v242
    %v244 = vadd.f32 %v243, 1.0
    %v245 = vrcp.pop %v244
    %v246 = vmul.f32 1.0, %v245
    %v247 = vtanh.pop %v240
    %v248 = vmul.f32 %v246, 0.0
    %250 = vrot.lane.b32.xlu0 %v247, 64
    %v251 = vpop.permute.xlu0 %250
    %v253 = vmul.f32 %v246, %v251
    %255 = vrot.lane.b32.xlu0 %v253, 32
    %v256 = vpop.permute.xlu0 %255
    %v258 = vadd.f32 %v248, %v256
    %v259 = vtanh.pop %v258
    %261 = vrot.lane.b32.xlu0 %v259, 64
    %v262 = vpop.permute.xlu0 %261
    %v264 = vmul.f32 %v246, %v262
    %v265 = vld [vmem:[#allocation10] sm:$0x3]
    %267 = vrot.lane.b32.xlu0 %v265, 96
    %v268 = vpop.permute.xlu0 %267
    %v270 = vmul.f32 %v264, %v268
    %v271 = vpack.c.bf16 %v270, %v270
    %v272 = vld [vmem:[#allocation8] sm:$0xf]
    %v273 = vld [vmem:[#allocation8 + $0x4] sm:$0xf]
    %v274 = vld [vmem:[#allocation8 + $0x8] sm:$0xf]
    %v275 = vld [vmem:[#allocation8 + $0xc] sm:$0xf]
    %v276 = vld [vmem:[%s5] sm:$0xf]
    %v277 = vld [vmem:[%s5 + $0x4] sm:$0xf]
    %v278 = vld [vmem:[%s5 + $0x8] sm:$0xf]
    %v279 = vld [vmem:[%s5 + $0xc] sm:$0xf]
    %v284 = vunpack.c.l.b16 %v276
    %v285 = vunpack.c.l.b16 %v277
    %v286 = vunpack.c.l.b16 %v278
    %v287 = vunpack.c.l.b16 %v279
    %v288 = vpack.c.b16 %v285, %v284
    %v289 = vpack.c.b16 %v287, %v286
    %292 = vmatprep.subr.bf16.mxu0 0
    %293 = vmatpush1.bf16.msra.mxu0 %v288
    %294 = vmatprep.subr.bf16.mxu0 0
    %295 = vmatpush1.bf16.msra.mxu0 %v289
    %296 = vmatprep.subr.bf16.mxu0 0
    %297 = vmatpush1.bf16.msra.mxu0 0
    %298 = vmatprep.subr.bf16.mxu0 0
    %299 = vmatpush1.bf16.msra.mxu0 0
    %300 = vmatprep.subr.bf16.mxu0 0
    %301 = vmatpush1.bf16.msra.mxu0 0
    %302 = vmatprep.subr.bf16.mxu0 0
    %303 = vmatpush1.bf16.msra.mxu0 0
    %304 = vmatprep.subr.bf16.mxu0 0
    %305 = vmatpush1.bf16.msra.mxu0 0
    %306 = vmatprep.subr.bf16.mxu0 0
    %307 = vmatpush1.bf16.msra.mxu0 0
    %308 = vmatprep.subr.bf16.mxu0 0
    %309 = vmatpush1.bf16.msra.mxu0 0
    %310 = vmatprep.subr.bf16.mxu0 0
    %311 = vmatpush1.bf16.msra.mxu0 0
    %312 = vmatprep.subr.bf16.mxu0 0
    %313 = vmatpush1.bf16.msra.mxu0 0
    %314 = vmatprep.subr.bf16.mxu0 0
    %315 = vmatpush1.bf16.msra.mxu0 0
    %316 = vmatprep.subr.bf16.mxu0 0
    %317 = vmatpush1.bf16.msra.mxu0 0
    %318 = vmatprep.subr.bf16.mxu0 0
    %319 = vmatpush1.bf16.msra.mxu0 0
    %320 = vmatprep.subr.bf16.mxu0 0
    %321 = vmatpush1.bf16.msra.mxu0 0
    %322 = vmatprep.subr.bf16.mxu0 0
    %323 = vmatpush1.bf16.msra.mxu0 0
    %324 = vmatprep.mubr.bf16.mxu0 0
    %325 = vmatmul.mubr.bf16.gmra.mrb[0].mxu0 %v141
    %v326 = vpop.f32.mrb[0].mxu0
    %v327 = vadd.f32 0.0, %v326
    %v328 = vpop.f32.mrb[0].mxu0
    %v329 = vpop.f32.mrb[0].mxu0
    %v330 = vpop.f32.mrb[0].mxu0
    %331 = vdwg.mxu0
    %333 = vrot.lane.b32.xlu0 %v271, 32
    %v334 = vpop.permute.xlu0 %333
    %v339 = vunpack.c.l.b16 %v272
    %v340 = vunpack.c.l.b16 %v273
    %v341 = vunpack.c.l.b16 %v274
    %v342 = vunpack.c.l.b16 %v275
    %v343 = vpack.c.b16 %v340, %v339
    %v344 = vpack.c.b16 %v342, %v341
    %v348 = vsel %vm139, %v334, 0
    %350 = vmatprep.subr.bf16.mxu0 0
    %351 = vmatpush1.bf16.msra.mxu0 %v343
    %352 = vmatprep.subr.bf16.mxu0 0
    %353 = vmatpush1.bf16.msra.mxu0 %v344
    %354 = vmatprep.subr.bf16.mxu0 0
    %355 = vmatpush1.bf16.msra.mxu0 0
    %356 = vmatprep.subr.bf16.mxu0 0
    %357 = vmatpush1.bf16.msra.mxu0 0
    %358 = vmatprep.subr.bf16.mxu0 0
    %359 = vmatpush1.bf16.msra.mxu0 0
    %360 = vmatprep.subr.bf16.mxu0 0
    %361 = vmatpush1.bf16.msra.mxu0 0
    %362 = vmatprep.subr.bf16.mxu0 0
    %363 = vmatpush1.bf16.msra.mxu0 0
    %364 = vmatprep.subr.bf16.mxu0 0
    %365 = vmatpush1.bf16.msra.mxu0 0
    %366 = vmatprep.subr.bf16.mxu0 0
    %367 = vmatpush1.bf16.msra.mxu0 0
    %368 = vmatprep.subr.bf16.mxu0 0
    %369 = vmatpush1.bf16.msra.mxu0 0
    %370 = vmatprep.subr.bf16.mxu0 0
    %371 = vmatpush1.bf16.msra.mxu0 0
    %372 = vmatprep.subr.bf16.mxu0 0
    %373 = vmatpush1.bf16.msra.mxu0 0
    %374 = vmatprep.subr.bf16.mxu0 0
    %375 = vmatpush1.bf16.msra.mxu0 0
    %376 = vmatprep.subr.bf16.mxu0 0
    %377 = vmatpush1.bf16.msra.mxu0 0
    %378 = vmatprep.subr.bf16.mxu0 0
    %379 = vmatpush1.bf16.msra.mxu0 0
    %380 = vmatprep.subr.bf16.mxu0 0
    %381 = vmatpush1.bf16.msra.mxu0 0
    %382 = vmatprep.mubr.bf16.mxu0 0
    %383 = vmatmul.mubr.bf16.gmra.mrb[0].mxu0 %v348
    %v384 = vpop.f32.mrb[0].mxu0
    %v385 = vadd.f32 %v327, %v384
    %v386 = vpop.f32.mrb[0].mxu0
    %v387 = vpop.f32.mrb[0].mxu0
    %v388 = vpop.f32.mrb[0].mxu0
    %389 = vdwg.mxu0
    %v390 = vld [vmem:[%s6] sm:$0x1]
    %v392 = vlaneseq
    %v393 = vshrl.u32 %v392, 7
    %v394 = vsub.s32 0, %v393
    %v395 = vrot.slane %v390, %v394
    %v397 = vadd.f32 %v385, %v395
    %v398 = vxor.u32 %v397, 2147483648
    %v399 = vmul.f32 %v398, 1.442695
    %v400 = vpow.pop %v399
    %v401 = vadd.f32 %v400, 1.0
    %v402 = vrcp.pop %v401
    %v403 = vmul.f32 1.0, %v402
    %v404 = vtanh.pop %v397
    %v405 = vmul.f32 %v403, 0.0
    %407 = vrot.lane.b32.xlu0 %v404, 64
    %v408 = vpop.permute.xlu0 %407
    %v410 = vmul.f32 %v403, %v408
    %412 = vrot.lane.b32.xlu0 %v410, 32
    %v413 = vpop.permute.xlu0 %412
    %v415 = vadd.f32 %v405, %v413
    %v416 = vtanh.pop %v415
    %418 = vrot.lane.b32.xlu0 %v416, 64
    %v419 = vpop.permute.xlu0 %418
    %v421 = vmul.f32 %v403, %v419
    %s422 = scalar_lea.vmem [#allocation2], 2
    %v423 = vld [vmem:[%s422] sm:$0x3]
    %v424 = vpack.c.bf16 %v423, %v423
    %v425 = vpack.c.bf16 %v264, %v264
    %427 = vrot.lane.b32.xlu0 %v425, 32
    %v428 = vpop.permute.xlu0 %427
    %v430 = vsel %vm139, %v428, 0
    %432 = vmatprep.subr.bf16.mxu0 0
    %433 = vmatpush1.bf16.msra.mxu0 %v135
    %434 = vmatprep.subr.bf16.mxu0 0
    %435 = vmatpush1.bf16.msra.mxu0 %v136
    %436 = vmatprep.subr.bf16.mxu0 0
    %437 = vmatpush1.bf16.msra.mxu0 0
    %438 = vmatprep.subr.bf16.mxu0 0
    %439 = vmatpush1.bf16.msra.mxu0 0
    %440 = vmatprep.subr.bf16.mxu0 0
    %441 = vmatpush1.bf16.msra.mxu0 0
    %442 = vmatprep.subr.bf16.mxu0 0
    %443 = vmatpush1.bf16.msra.mxu0 0
    %444 = vmatprep.subr.bf16.mxu0 0
    %445 = vmatpush1.bf16.msra.mxu0 0
    %446 = vmatprep.subr.bf16.mxu0 0
    %447 = vmatpush1.bf16.msra.mxu0 0
    %448 = vmatprep.subr.bf16.mxu0 0
    %449 = vmatpush1.bf16.msra.mxu0 0
    %450 = vmatprep.subr.bf16.mxu0 0
    %451 = vmatpush1.bf16.msra.mxu0 0
    %452 = vmatprep.subr.bf16.mxu0 0
    %453 = vmatpush1.bf16.msra.mxu0 0
    %454 = vmatprep.subr.bf16.mxu0 0
    %455 = vmatpush1.bf16.msra.mxu0 0
    %456 = vmatprep.subr.bf16.mxu0 0
    %457 = vmatpush1.bf16.msra.mxu0 0
    %458 = vmatprep.subr.bf16.mxu0 0
    %459 = vmatpush1.bf16.msra.mxu0 0
    %460 = vmatprep.subr.bf16.mxu0 0
    %461 = vmatpush1.bf16.msra.mxu0 0
    %462 = vmatprep.subr.bf16.mxu0 0
    %463 = vmatpush1.bf16.msra.mxu0 0
    %464 = vmatprep.mubr.bf16.mxu0 0
    %465 = vmatmul.mubr.bf16.gmra.mrb[0].mxu0 %v430
    %v466 = vpop.f32.mrb[0].mxu0
    %v467 = vadd.f32 0.0, %v466
    %v468 = vpop.f32.mrb[0].mxu0
    %v469 = vpop.f32.mrb[0].mxu0
    %v470 = vpop.f32.mrb[0].mxu0
    %471 = vdwg.mxu0
    %v473 = vsel %vm189, %v424, 0
    %475 = vmatprep.subr.bf16.mxu0 0
    %476 = vmatpush1.bf16.msra.mxu0 %v187
    %477 = vmatprep.subr.bf16.mxu0 0
    %478 = vmatpush1.bf16.msra.mxu0 0
    %479 = vmatprep.subr.bf16.mxu0 0
    %480 = vmatpush1.bf16.msra.mxu0 0
    %481 = vmatprep.subr.bf16.mxu0 0
    %482 = vmatpush1.bf16.msra.mxu0 0
    %483 = vmatprep.subr.bf16.mxu0 0
    %484 = vmatpush1.bf16.msra.mxu0 0
    %485 = vmatprep.subr.bf16.mxu0 0
    %486 = vmatpush1.bf16.msra.mxu0 0
    %487 = vmatprep.subr.bf16.mxu0 0
    %488 = vmatpush1.bf16.msra.mxu0 0
    %489 = vmatprep.subr.bf16.mxu0 0
    %490 = vmatpush1.bf16.msra.mxu0 0
    %491 = vmatprep.subr.bf16.mxu0 0
    %492 = vmatpush1.bf16.msra.mxu0 0
    %493 = vmatprep.subr.bf16.mxu0 0
    %494 = vmatpush1.bf16.msra.mxu0 0
    %495 = vmatprep.subr.bf16.mxu0 0
    %496 = vmatpush1.bf16.msra.mxu0 0
    %497 = vmatprep.subr.bf16.mxu0 0
    %498 = vmatpush1.bf16.msra.mxu0 0
    %499 = vmatprep.subr.bf16.mxu0 0
    %500 = vmatpush1.bf16.msra.mxu0 0
    %501 = vmatprep.subr.bf16.mxu0 0
    %502 = vmatpush1.bf16.msra.mxu0 0
    %503 = vmatprep.subr.bf16.mxu0 0
    %504 = vmatpush1.bf16.msra.mxu0 0
    %505 = vmatprep.subr.bf16.mxu0 0
    %506 = vmatpush1.bf16.msra.mxu0 0
    %507 = vmatprep.mubr.bf16.mxu0 0
    %508 = vmatmul.mubr.bf16.gmra.mrb[0].mxu0 %v473
    %v509 = vpop.f32.mrb[0].mxu0
    %v510 = vadd.f32 %v467, %v509
    %v511 = vpop.f32.mrb[0].mxu0
    %v512 = vpop.f32.mrb[0].mxu0
    %v513 = vpop.f32.mrb[0].mxu0
    %514 = vdwg.mxu0
    %v515 = vadd.f32 %v510, %v238
    %v516 = vxor.u32 %v515, 2147483648
    %v517 = vmul.f32 %v516, 1.442695
    %v518 = vpow.pop %v517
    %v519 = vadd.f32 %v518, 1.0
    %v520 = vrcp.pop %v519
    %v521 = vmul.f32 1.0, %v520
    %v522 = vtanh.pop %v515
    %v523 = vmul.f32 %v521, %v258
    %525 = vrot.lane.b32.xlu0 %v522, 64
    %v526 = vpop.permute.xlu0 %525
    %v528 = vmul.f32 %v521, %v526
    %530 = vrot.lane.b32.xlu0 %v528, 32
    %v531 = vpop.permute.xlu0 %530
    %v533 = vadd.f32 %v523, %v531
    %v534 = vtanh.pop %v533
    %536 = vrot.lane.b32.xlu0 %v534, 64
    %v537 = vpop.permute.xlu0 %536
    %v539 = vmul.f32 %v521, %v537
    %s540 = scalar_lea.vmem [#allocation10], 2
    %v541 = vld [vmem:[%s540] sm:$0x3]
    %543 = vrot.lane.b32.xlu0 %v541, 96
    %v544 = vpop.permute.xlu0 %543
    %v546 = vmul.f32 %v539, %v544
    %v547 = vpack.c.bf16 %v546, %v546
    %v548 = vpack.c.bf16 %v421, %v421
    %550 = vrot.lane.b32.xlu0 %v548, 32
    %v551 = vpop.permute.xlu0 %550
    %v553 = vsel %vm139, %v551, 0
    %555 = vmatprep.subr.bf16.mxu0 0
    %556 = vmatpush1.bf16.msra.mxu0 %v288
    %557 = vmatprep.subr.bf16.mxu0 0
    %558 = vmatpush1.bf16.msra.mxu0 %v289
    %559 = vmatprep.subr.bf16.mxu0 0
    %560 = vmatpush1.bf16.msra.mxu0 0
    %561 = vmatprep.subr.bf16.mxu0 0
    %562 = vmatpush1.bf16.msra.mxu0 0
    %563 = vmatprep.subr.bf16.mxu0 0
    %564 = vmatpush1.bf16.msra.mxu0 0
    %565 = vmatprep.subr.bf16.mxu0 0
    %566 = vmatpush1.bf16.msra.mxu0 0
    %567 = vmatprep.subr.bf16.mxu0 0
    %568 = vmatpush1.bf16.msra.mxu0 0
    %569 = vmatprep.subr.bf16.mxu0 0
    %570 = vmatpush1.bf16.msra.mxu0 0
    %571 = vmatprep.subr.bf16.mxu0 0
    %572 = vmatpush1.bf16.msra.mxu0 0
    %573 = vmatprep.subr.bf16.mxu0 0
    %574 = vmatpush1.bf16.msra.mxu0 0
    %575 = vmatprep.subr.bf16.mxu0 0
    %576 = vmatpush1.bf16.msra.mxu0 0
    %577 = vmatprep.subr.bf16.mxu0 0
    %578 = vmatpush1.bf16.msra.mxu0 0
    %579 = vmatprep.subr.bf16.mxu0 0
    %580 = vmatpush1.bf16.msra.mxu0 0
    %581 = vmatprep.subr.bf16.mxu0 0
    %582 = vmatpush1.bf16.msra.mxu0 0
    %583 = vmatprep.subr.bf16.mxu0 0
    %584 = vmatpush1.bf16.msra.mxu0 0
    %585 = vmatprep.subr.bf16.mxu0 0
    %586 = vmatpush1.bf16.msra.mxu0 0
    %587 = vmatprep.mubr.bf16.mxu0 0
    %588 = vmatmul.mubr.bf16.gmra.mrb[0].mxu0 %v553
    %v589 = vpop.f32.mrb[0].mxu0
    %v590 = vadd.f32 0.0, %v589
    %v591 = vpop.f32.mrb[0].mxu0
    %v592 = vpop.f32.mrb[0].mxu0
    %v593 = vpop.f32.mrb[0].mxu0
    %594 = vdwg.mxu0
    %596 = vrot.lane.b32.xlu0 %v547, 32
    %v597 = vpop.permute.xlu0 %596
    %v599 = vsel %vm139, %v597, 0
    %601 = vmatprep.subr.bf16.mxu0 0
    %602 = vmatpush1.bf16.msra.mxu0 %v343
    %603 = vmatprep.subr.bf16.mxu0 0
    %604 = vmatpush1.bf16.msra.mxu0 %v344
    %605 = vmatprep.subr.bf16.mxu0 0
    %606 = vmatpush1.bf16.msra.mxu0 0
    %607 = vmatprep.subr.bf16.mxu0 0
    %608 = vmatpush1.bf16.msra.mxu0 0
    %609 = vmatprep.subr.bf16.mxu0 0
    %610 = vmatpush1.bf16.msra.mxu0 0
    %611 = vmatprep.subr.bf16.mxu0 0
    %612 = vmatpush1.bf16.msra.mxu0 0
    %613 = vmatprep.subr.bf16.mxu0 0
    %614 = vmatpush1.bf16.msra.mxu0 0
    %615 = vmatprep.subr.bf16.mxu0 0
    %616 = vmatpush1.bf16.msra.mxu0 0
    %617 = vmatprep.subr.bf16.mxu0 0
    %618 = vmatpush1.bf16.msra.mxu0 0
    %619 = vmatprep.subr.bf16.mxu0 0
    %620 = vmatpush1.bf16.msra.mxu0 0
    %621 = vmatprep.subr.bf16.mxu0 0
    %622 = vmatpush1.bf16.msra.mxu0 0
    %623 = vmatprep.subr.bf16.mxu0 0
    %624 = vmatpush1.bf16.msra.mxu0 0
    %625 = vmatprep.subr.bf16.mxu0 0
    %626 = vmatpush1.bf16.msra.mxu0 0
    %627 = vmatprep.subr.bf16.mxu0 0
    %628 = vmatpush1.bf16.msra.mxu0 0
    %629 = vmatprep.subr.bf16.mxu0 0
    %630 = vmatpush1.bf16.msra.mxu0 0
    %631 = vmatprep.subr.bf16.mxu0 0
    %632 = vmatpush1.bf16.msra.mxu0 0
    %633 = vmatprep.mubr.bf16.mxu0 0
    %634 = vmatmul.mubr.bf16.gmra.mrb[0].mxu0 %v599
    %v635 = vpop.f32.mrb[0].mxu0
    %v636 = vadd.f32 %v590, %v635
    %v637 = vpop.f32.mrb[0].mxu0
    %v638 = vpop.f32.mrb[0].mxu0
    %v639 = vpop.f32.mrb[0].mxu0
    %640 = vdwg.mxu0
    %v641 = vadd.f32 %v636, %v395
    %v642 = vxor.u32 %v641, 2147483648
    %v643 = vmul.f32 %v642, 1.442695
    %v644 = vpow.pop %v643
    %v645 = vadd.f32 %v644, 1.0
    %v646 = vrcp.pop %v645
    %v647 = vmul.f32 1.0, %v646
    %v648 = vtanh.pop %v641
    %v649 = vmul.f32 %v647, %v415
    %651 = vrot.lane.b32.xlu0 %v648, 64
    %v652 = vpop.permute.xlu0 %651
    %v654 = vmul.f32 %v647, %v652
    %656 = vrot.lane.b32.xlu0 %v654, 32
    %v657 = vpop.permute.xlu0 %656
    %v659 = vadd.f32 %v649, %v657
    %v660 = vtanh.pop %v659
    %662 = vrot.lane.b32.xlu0 %v660, 64
    %v663 = vpop.permute.xlu0 %662
    %v665 = vmul.f32 %v647, %v663
    %s666 = scalar_lea.vmem [#allocation2], 4
    %v667 = vld [vmem:[%s666] sm:$0x3]
    %v668 = vpack.c.bf16 %v667, %v667
    %v669 = vpack.c.bf16 %v539, %v539
    %671 = vrot.lane.b32.xlu0 %v669, 32
    %v672 = vpop.permute.xlu0 %671
    %v674 = vsel %vm139, %v672, 0
    %676 = vmatprep.subr.bf16.mxu0 0
    %677 = vmatpush1.bf16.msra.mxu0 %v135
    %678 = vmatprep.subr.bf16.mxu0 0
    %679 = vmatpush1.bf16.msra.mxu0 %v136
    %680 = vmatprep.subr.bf16.mxu0 0
    %681 = vmatpush1.bf16.msra.mxu0 0
    %682 = vmatprep.subr.bf16.mxu0 0
    %683 = vmatpush1.bf16.msra.mxu0 0
    %684 = vmatprep.subr.bf16.mxu0 0
    %685 = vmatpush1.bf16.msra.mxu0 0
    %686 = vmatprep.subr.bf16.mxu0 0
    %687 = vmatpush1.bf16.msra.mxu0 0
    %688 = vmatprep.subr.bf16.mxu0 0
    %689 = vmatpush1.bf16.msra.mxu0 0
    %690 = vmatprep.subr.bf16.mxu0 0
    %691 = vmatpush1.bf16.msra.mxu0 0
    %692 = vmatprep.subr.bf16.mxu0 0
    %693 = vmatpush1.bf16.msra.mxu0 0
    %694 = vmatprep.subr.bf16.mxu0 0
    %695 = vmatpush1.bf16.msra.mxu0 0
    %696 = vmatprep.subr.bf16.mxu0 0
    %697 = vmatpush1.bf16.msra.mxu0 0
    %698 = vmatprep.subr.bf16.mxu0 0
    %699 = vmatpush1.bf16.msra.mxu0 0
    %700 = vmatprep.subr.bf16.mxu0 0
    %701 = vmatpush1.bf16.msra.mxu0 0
    %702 = vmatprep.subr.bf16.mxu0 0
    %703 = vmatpush1.bf16.msra.mxu0 0
    %704 = vmatprep.subr.bf16.mxu0 0
    %705 = vmatpush1.bf16.msra.mxu0 0
    %706 = vmatprep.subr.bf16.mxu0 0
    %707 = vmatpush1.bf16.msra.mxu0 0
    %708 = vmatprep.mubr.bf16.mxu0 0
    %709 = vmatmul.mubr.bf16.gmra.mrb[0].mxu0 %v674
    %v710 = vpop.f32.mrb[0].mxu0
    %v711 = vadd.f32 0.0, %v710
    %v712 = vpop.f32.mrb[0].mxu0
    %v713 = vpop.f32.mrb[0].mxu0
    %v714 = vpop.f32.mrb[0].mxu0
    %715 = vdwg.mxu0
    %v717 = vsel %vm189, %v668, 0
    %719 = vmatprep.subr.bf16.mxu0 0
    %720 = vmatpush1.bf16.msra.mxu0 %v187
    %721 = vmatprep.subr.bf16.mxu0 0
    %722 = vmatpush1.bf16.msra.mxu0 0
    %723 = vmatprep.subr.bf16.mxu0 0
    %724 = vmatpush1.bf16.msra.mxu0 0
    %725 = vmatprep.subr.bf16.mxu0 0
    %726 = vmatpush1.bf16.msra.mxu0 0
    %727 = vmatprep.subr.bf16.mxu0 0
    %728 = vmatpush1.bf16.msra.mxu0 0
    %729 = vmatprep.subr.bf16.mxu0 0
    %730 = vmatpush1.bf16.msra.mxu0 0
    %731 = vmatprep.subr.bf16.mxu0 0
    %732 = vmatpush1.bf16.msra.mxu0 0
    %733 = vmatprep.subr.bf16.mxu0 0
    %734 = vmatpush1.bf16.msra.mxu0 0
    %735 = vmatprep.subr.bf16.mxu0 0
    %736 = vmatpush1.bf16.msra.mxu0 0
    %737 = vmatprep.subr.bf16.mxu0 0
    %738 = vmatpush1.bf16.msra.mxu0 0
    %739 = vmatprep.subr.bf16.mxu0 0
    %740 = vmatpush1.bf16.msra.mxu0 0
    %741 = vmatprep.subr.bf16.mxu0 0
    %742 = vmatpush1.bf16.msra.mxu0 0
    %743 = vmatprep.subr.bf16.mxu0 0
    %744 = vmatpush1.bf16.msra.mxu0 0
    %745 = vmatprep.subr.bf16.mxu0 0
    %746 = vmatpush1.bf16.msra.mxu0 0
    %747 = vmatprep.subr.bf16.mxu0 0
    %748 = vmatpush1.bf16.msra.mxu0 0
    %749 = vmatprep.subr.bf16.mxu0 0
    %750 = vmatpush1.bf16.msra.mxu0 0
    %751 = vmatprep.mubr.bf16.mxu0 0
    %752 = vmatmul.mubr.bf16.gmra.mrb[0].mxu0 %v717
    %v753 = vpop.f32.mrb[0].mxu0
    %v754 = vadd.f32 %v711, %v753
    %v755 = vpop.f32.mrb[0].mxu0
    %v756 = vpop.f32.mrb[0].mxu0
    %v757 = vpop.f32.mrb[0].mxu0
    %758 = vdwg.mxu0
    %v759 = vadd.f32 %v754, %v238
    %v760 = vxor.u32 %v759, 2147483648
    %v761 = vmul.f32 %v760, 1.442695
    %v762 = vpow.pop %v761
    %v763 = vadd.f32 %v762, 1.0
    %v764 = vrcp.pop %v763
    %v765 = vmul.f32 1.0, %v764
    %v766 = vtanh.pop %v759
    %v767 = vmul.f32 %v765, %v533
    %769 = vrot.lane.b32.xlu0 %v766, 64
    %v770 = vpop.permute.xlu0 %769
    %v772 = vmul.f32 %v765, %v770
    %774 = vrot.lane.b32.xlu0 %v772, 32
    %v775 = vpop.permute.xlu0 %774
    %v777 = vadd.f32 %v767, %v775
    %v778 = vtanh.pop %v777
    %780 = vrot.lane.b32.xlu0 %v778, 64
    %v781 = vpop.permute.xlu0 %780
    %v783 = vmul.f32 %v765, %v781
    %s784 = scalar_lea.vmem [#allocation10], 4
    %v785 = vld [vmem:[%s784] sm:$0x3]
    %787 = vrot.lane.b32.xlu0 %v785, 96
    %v788 = vpop.permute.xlu0 %787
    %v790 = vmul.f32 %v783, %v788
    %v791 = vpack.c.bf16 %v790, %v790
    %v792 = vpack.c.bf16 %v665, %v665
    %794 = vrot.lane.b32.xlu0 %v792, 32
    %v795 = vpop.permute.xlu0 %794
    %v797 = vsel %vm139, %v795, 0
    %799 = vmatprep.subr.bf16.mxu0 0
    %800 = vmatpush1.bf16.msra.mxu0 %v288
    %801 = vmatprep.subr.bf16.mxu0 0
    %802 = vmatpush1.bf16.msra.mxu0 %v289
    %803 = vmatprep.subr.bf16.mxu0 0
    %804 = vmatpush1.bf16.msra.mxu0 0
    %805 = vmatprep.subr.bf16.mxu0 0
    %806 = vmatpush1.bf16.msra.mxu0 0
    %807 = vmatprep.subr.bf16.mxu0 0
    %808 = vmatpush1.bf16.msra.mxu0 0
    %809 = vmatprep.subr.bf16.mxu0 0
    %810 = vmatpush1.bf16.msra.mxu0 0
    %811 = vmatprep.subr.bf16.mxu0 0
    %812 = vmatpush1.bf16.msra.mxu0 0
    %813 = vmatprep.subr.bf16.mxu0 0
    %814 = vmatpush1.bf16.msra.mxu0 0
    %815 = vmatprep.subr.bf16.mxu0 0
    %816 = vmatpush1.bf16.msra.mxu0 0
    %817 = vmatprep.subr.bf16.mxu0 0
    %818 = vmatpush1.bf16.msra.mxu0 0
    %819 = vmatprep.subr.bf16.mxu0 0
    %820 = vmatpush1.bf16.msra.mxu0 0
    %821 = vmatprep.subr.bf16.mxu0 0
    %822 = vmatpush1.bf16.msra.mxu0 0
    %823 = vmatprep.subr.bf16.mxu0 0
    %824 = vmatpush1.bf16.msra.mxu0 0
    %825 = vmatprep.subr.bf16.mxu0 0
    %826 = vmatpush1.bf16.msra.mxu0 0
    %827 = vmatprep.subr.bf16.mxu0 0
    %828 = vmatpush1.bf16.msra.mxu0 0
    %829 = vmatprep.subr.bf16.mxu0 0
    %830 = vmatpush1.bf16.msra.mxu0 0
    %831 = vmatprep.mubr.bf16.mxu0 0
    %832 = vmatmul.mubr.bf16.gmra.mrb[0].mxu0 %v797
    %v833 = vpop.f32.mrb[0].mxu0
    %v834 = vadd.f32 0.0, %v833
    %v835 = vpop.f32.mrb[0].mxu0
    %v836 = vpop.f32.mrb[0].mxu0
    %v837 = vpop.f32.mrb[0].mxu0
    %838 = vdwg.mxu0
    %840 = vrot.lane.b32.xlu0 %v791, 32
    %v841 = vpop.permute.xlu0 %840
    %v843 = vsel %vm139, %v841, 0
    %845 = vmatprep.subr.bf16.mxu0 0
    %846 = vmatpush1.bf16.msra.mxu0 %v343
    %847 = vmatprep.subr.bf16.mxu0 0
    %848 = vmatpush1.bf16.msra.mxu0 %v344
    %849 = vmatprep.subr.bf16.mxu0 0
    %850 = vmatpush1.bf16.msra.mxu0 0
    %851 = vmatprep.subr.bf16.mxu0 0
    %852 = vmatpush1.bf16.msra.mxu0 0
    %853 = vmatprep.subr.bf16.mxu0 0
    %854 = vmatpush1.bf16.msra.mxu0 0
    %855 = vmatprep.subr.bf16.mxu0 0
    %856 = vmatpush1.bf16.msra.mxu0 0
    %857 = vmatprep.subr.bf16.mxu0 0
    %858 = vmatpush1.bf16.msra.mxu0 0
    %859 = vmatprep.subr.bf16.mxu0 0
    %860 = vmatpush1.bf16.msra.mxu0 0
    %861 = vmatprep.subr.bf16.mxu0 0
    %862 = vmatpush1.bf16.msra.mxu0 0
    %863 = vmatprep.subr.bf16.mxu0 0
    %864 = vmatpush1.bf16.msra.mxu0 0
    %865 = vmatprep.subr.bf16.mxu0 0
    %866 = vmatpush1.bf16.msra.mxu0 0
    %867 = vmatprep.subr.bf16.mxu0 0
    %868 = vmatpush1.bf16.msra.mxu0 0
    %869 = vmatprep.subr.bf16.mxu0 0
    %870 = vmatpush1.bf16.msra.mxu0 0
    %871 = vmatprep.subr.bf16.mxu0 0
    %872 = vmatpush1.bf16.msra.mxu0 0
    %873 = vmatprep.subr.bf16.mxu0 0
    %874 = vmatpush1.bf16.msra.mxu0 0
    %875 = vmatprep.subr.bf16.mxu0 0
    %876 = vmatpush1.bf16.msra.mxu0 0
    %877 = vmatprep.mubr.bf16.mxu0 0
    %878 = vmatmul.mubr.bf16.gmra.mrb[0].mxu0 %v843
    %v879 = vpop.f32.mrb[0].mxu0
    %v880 = vadd.f32 %v834, %v879
    %v881 = vpop.f32.mrb[0].mxu0
    %v882 = vpop.f32.mrb[0].mxu0
    %v883 = vpop.f32.mrb[0].mxu0
    %884 = vdwg.mxu0
    %v885 = vadd.f32 %v880, %v395
    %v886 = vxor.u32 %v885, 2147483648
    %v887 = vmul.f32 %v886, 1.442695
    %v888 = vpow.pop %v887
    %v889 = vadd.f32 %v888, 1.0
    %v890 = vrcp.pop %v889
    %v891 = vmul.f32 1.0, %v890
    %v892 = vtanh.pop %v885
    %v893 = vmul.f32 %v891, %v659
    %895 = vrot.lane.b32.xlu0 %v892, 64
    %v896 = vpop.permute.xlu0 %895
    %v898 = vmul.f32 %v891, %v896
    %900 = vrot.lane.b32.xlu0 %v898, 32
    %v901 = vpop.permute.xlu0 %900
    %v903 = vadd.f32 %v893, %v901
    %v904 = vtanh.pop %v903
    %906 = vrot.lane.b32.xlu0 %v904, 64
    %v907 = vpop.permute.xlu0 %906
    %v909 = vmul.f32 %v891, %v907
    %s910 = scalar_lea.vmem [#allocation2], 6
    %v911 = vld [vmem:[%s910] sm:$0x3]
    %v912 = vpack.c.bf16 %v911, %v911
    %v913 = vpack.c.bf16 %v783, %v783
    %915 = vrot.lane.b32.xlu0 %v913, 32
    %v916 = vpop.permute.xlu0 %915
    %v918 = vsel %vm139, %v916, 0
    %920 = vmatprep.subr.bf16.mxu0 0
    %921 = vmatpush1.bf16.msra.mxu0 %v135
    %922 = vmatprep.subr.bf16.mxu0 0
    %923 = vmatpush1.bf16.msra.mxu0 %v136
    %924 = vmatprep.subr.bf16.mxu0 0
    %925 = vmatpush1.bf16.msra.mxu0 0
    %926 = vmatprep.subr.bf16.mxu0 0
    %927 = vmatpush1.bf16.msra.mxu0 0
    %928 = vmatprep.subr.bf16.mxu0 0
    %929 = vmatpush1.bf16.msra.mxu0 0
    %930 = vmatprep.subr.bf16.mxu0 0
    %931 = vmatpush1.bf16.msra.mxu0 0
    %932 = vmatprep.subr.bf16.mxu0 0
    %933 = vmatpush1.bf16.msra.mxu0 0
    %934 = vmatprep.subr.bf16.mxu0 0
    %935 = vmatpush1.bf16.msra.mxu0 0
    %936 = vmatprep.subr.bf16.mxu0 0
    %937 = vmatpush1.bf16.msra.mxu0 0
    %938 = vmatprep.subr.bf16.mxu0 0
    %939 = vmatpush1.bf16.msra.mxu0 0
    %940 = vmatprep.subr.bf16.mxu0 0
    %941 = vmatpush1.bf16.msra.mxu0 0
    %942 = vmatprep.subr.bf16.mxu0 0
    %943 = vmatpush1.bf16.msra.mxu0 0
    %944 = vmatprep.subr.bf16.mxu0 0
    %945 = vmatpush1.bf16.msra.mxu0 0
    %946 = vmatprep.subr.bf16.mxu0 0
    %947 = vmatpush1.bf16.msra.mxu0 0
    %948 = vmatprep.subr.bf16.mxu0 0
    %949 = vmatpush1.bf16.msra.mxu0 0
    %950 = vmatprep.subr.bf16.mxu0 0
    %951 = vmatpush1.bf16.msra.mxu0 0
    %952 = vmatprep.mubr.bf16.mxu0 0
    %953 = vmatmul.mubr.bf16.gmra.mrb[0].mxu0 %v918
    %v954 = vpop.f32.mrb[0].mxu0
    %v955 = vadd.f32 0.0, %v954
    %v956 = vpop.f32.mrb[0].mxu0
    %v957 = vpop.f32.mrb[0].mxu0
    %v958 = vpop.f32.mrb[0].mxu0
    %959 = vdwg.mxu0
    %v961 = vsel %vm189, %v912, 0
    %963 = vmatprep.subr.bf16.mxu0 0
    %964 = vmatpush1.bf16.msra.mxu0 %v187
    %965 = vmatprep.subr.bf16.mxu0 0
    %966 = vmatpush1.bf16.msra.mxu0 0
    %967 = vmatprep.subr.bf16.mxu0 0
    %968 = vmatpush1.bf16.msra.mxu0 0
    %969 = vmatprep.subr.bf16.mxu0 0
    %970 = vmatpush1.bf16.msra.mxu0 0
    %971 = vmatprep.subr.bf16.mxu0 0
    %972 = vmatpush1.bf16.msra.mxu0 0
    %973 = vmatprep.subr.bf16.mxu0 0
    %974 = vmatpush1.bf16.msra.mxu0 0
    %975 = vmatprep.subr.bf16.mxu0 0
    %976 = vmatpush1.bf16.msra.mxu0 0
    %977 = vmatprep.subr.bf16.mxu0 0
    %978 = vmatpush1.bf16.msra.mxu0 0
    %979 = vmatprep.subr.bf16.mxu0 0
    %980 = vmatpush1.bf16.msra.mxu0 0
    %981 = vmatprep.subr.bf16.mxu0 0
    %982 = vmatpush1.bf16.msra.mxu0 0
    %983 = vmatprep.subr.bf16.mxu0 0
    %984 = vmatpush1.bf16.msra.mxu0 0
    %985 = vmatprep.subr.bf16.mxu0 0
    %986 = vmatpush1.bf16.msra.mxu0 0
    %987 = vmatprep.subr.bf16.mxu0 0
    %988 = vmatpush1.bf16.msra.mxu0 0
    %989 = vmatprep.subr.bf16.mxu0 0
    %990 = vmatpush1.bf16.msra.mxu0 0
    %991 = vmatprep.subr.bf16.mxu0 0
    %992 = vmatpush1.bf16.msra.mxu0 0
    %993 = vmatprep.subr.bf16.mxu0 0
    %994 = vmatpush1.bf16.msra.mxu0 0
    %995 = vmatprep.mubr.bf16.mxu0 0
    %996 = vmatmul.mubr.bf16.gmra.mrb[0].mxu0 %v961
    %v997 = vpop.f32.mrb[0].mxu0
    %v998 = vadd.f32 %v955, %v997
    %v999 = vpop.f32.mrb[0].mxu0
    %v1000 = vpop.f32.mrb[0].mxu0
    %v1001 = vpop.f32.mrb[0].mxu0
    %1002 = vdwg.mxu0
    %v1003 = vadd.f32 %v998, %v238
    %v1004 = vxor.u32 %v1003, 2147483648
    %v1005 = vmul.f32 %v1004, 1.442695
    %v1006 = vpow.pop %v1005
    %v1007 = vadd.f32 %v1006, 1.0
    %v1008 = vrcp.pop %v1007
    %v1009 = vmul.f32 1.0, %v1008
    %v1010 = vtanh.pop %v1003
    %v1011 = vmul.f32 %v1009, %v777
    %1013 = vrot.lane.b32.xlu0 %v1010, 64
    %v1014 = vpop.permute.xlu0 %1013
    %v1016 = vmul.f32 %v1009, %v1014
    %1018 = vrot.lane.b32.xlu0 %v1016, 32
    %v1019 = vpop.permute.xlu0 %1018
    %v1021 = vadd.f32 %v1011, %v1019
    %v1022 = vtanh.pop %v1021
    %1024 = vrot.lane.b32.xlu0 %v1022, 64
    %v1025 = vpop.permute.xlu0 %1024
    %v1027 = vmul.f32 %v1009, %v1025
    %s1028 = scalar_lea.vmem [#allocation10], 6
    %v1029 = vld [vmem:[%s1028] sm:$0x3]
    %1031 = vrot.lane.b32.xlu0 %v1029, 96
    %v1032 = vpop.permute.xlu0 %1031
    %v1034 = vmul.f32 %v1027, %v1032
    %v1035 = vpack.c.bf16 %v1034, %v1034
    %v1036 = vpack.c.bf16 %v909, %v909
    %1038 = vrot.lane.b32.xlu0 %v1036, 32
    %v1039 = vpop.permute.xlu0 %1038
    %v1041 = vsel %vm139, %v1039, 0
    %1043 = vmatprep.subr.bf16.mxu0 0
    %1044 = vmatpush1.bf16.msra.mxu0 %v288
    %1045 = vmatprep.subr.bf16.mxu0 0
    %1046 = vmatpush1.bf16.msra.mxu0 %v289
    %1047 = vmatprep.subr.bf16.mxu0 0
    %1048 = vmatpush1.bf16.msra.mxu0 0
    %1049 = vmatprep.subr.bf16.mxu0 0
    %1050 = vmatpush1.bf16.msra.mxu0 0
    %1051 = vmatprep.subr.bf16.mxu0 0
    %1052 = vmatpush1.bf16.msra.mxu0 0
    %1053 = vmatprep.subr.bf16.mxu0 0
    %1054 = vmatpush1.bf16.msra.mxu0 0
    %1055 = vmatprep.subr.bf16.mxu0 0
    %1056 = vmatpush1.bf16.msra.mxu0 0
    %1057 = vmatprep.subr.bf16.mxu0 0
    %1058 = vmatpush1.bf16.msra.mxu0 0
    %1059 = vmatprep.subr.bf16.mxu0 0
    %1060 = vmatpush1.bf16.msra.mxu0 0
    %1061 = vmatprep.subr.bf16.mxu0 0
    %1062 = vmatpush1.bf16.msra.mxu0 0
    %1063 = vmatprep.subr.bf16.mxu0 0
    %1064 = vmatpush1.bf16.msra.mxu0 0
    %1065 = vmatprep.subr.bf16.mxu0 0
    %1066 = vmatpush1.bf16.msra.mxu0 0
    %1067 = vmatprep.subr.bf16.mxu0 0
    %1068 = vmatpush1.bf16.msra.mxu0 0
    %1069 = vmatprep.subr.bf16.mxu0 0
    %1070 = vmatpush1.bf16.msra.mxu0 0
    %1071 = vmatprep.subr.bf16.mxu0 0
    %1072 = vmatpush1.bf16.msra.mxu0 0
    %1073 = vmatprep.subr.bf16.mxu0 0
    %1074 = vmatpush1.bf16.msra.mxu0 0
    %1075 = vmatprep.mubr.bf16.mxu0 0
    %1076 = vmatmul.mubr.bf16.gmra.mrb[0].mxu0 %v1041
    %v1077 = vpop.f32.mrb[0].mxu0
    %v1078 = vadd.f32 0.0, %v1077
    %v1079 = vpop.f32.mrb[0].mxu0
    %v1080 = vpop.f32.mrb[0].mxu0
    %v1081 = vpop.f32.mrb[0].mxu0
    %1082 = vdwg.mxu0
    %1084 = vrot.lane.b32.xlu0 %v1035, 32
    %v1085 = vpop.permute.xlu0 %1084
    %v1087 = vsel %vm139, %v1085, 0
    %1089 = vmatprep.subr.bf16.mxu0 0
    %1090 = vmatpush1.bf16.msra.mxu0 %v343
    %1091 = vmatprep.subr.bf16.mxu0 0
    %1092 = vmatpush1.bf16.msra.mxu0 %v344
    %1093 = vmatprep.subr.bf16.mxu0 0
    %1094 = vmatpush1.bf16.msra.mxu0 0
    %1095 = vmatprep.subr.bf16.mxu0 0
    %1096 = vmatpush1.bf16.msra.mxu0 0
    %1097 = vmatprep.subr.bf16.mxu0 0
    %1098 = vmatpush1.bf16.msra.mxu0 0
    %1099 = vmatprep.subr.bf16.mxu0 0
    %1100 = vmatpush1.bf16.msra.mxu0 0
    %1101 = vmatprep.subr.bf16.mxu0 0
    %1102 = vmatpush1.bf16.msra.mxu0 0
    %1103 = vmatprep.subr.bf16.mxu0 0
    %1104 = vmatpush1.bf16.msra.mxu0 0
    %1105 = vmatprep.subr.bf16.mxu0 0
    %1106 = vmatpush1.bf16.msra.mxu0 0
    %1107 = vmatprep.subr.bf16.mxu0 0
    %1108 = vmatpush1.bf16.msra.mxu0 0
    %1109 = vmatprep.subr.bf16.mxu0 0
    %1110 = vmatpush1.bf16.msra.mxu0 0
    %1111 = vmatprep.subr.bf16.mxu0 0
    %1112 = vmatpush1.bf16.msra.mxu0 0
    %1113 = vmatprep.subr.bf16.mxu0 0
    %1114 = vmatpush1.bf16.msra.mxu0 0
    %1115 = vmatprep.subr.bf16.mxu0 0
    %1116 = vmatpush1.bf16.msra.mxu0 0
    %1117 = vmatprep.subr.bf16.mxu0 0
    %1118 = vmatpush1.bf16.msra.mxu0 0
    %1119 = vmatprep.subr.bf16.mxu0 0
    %1120 = vmatpush1.bf16.msra.mxu0 0
    %1121 = vmatprep.mubr.bf16.mxu0 0
    %1122 = vmatmul.mubr.bf16.gmra.mrb[0].mxu0 %v1087
    %v1123 = vpop.f32.mrb[0].mxu0
    %v1124 = vadd.f32 %v1078, %v1123
    %v1125 = vpop.f32.mrb[0].mxu0
    %v1126 = vpop.f32.mrb[0].mxu0
    %v1127 = vpop.f32.mrb[0].mxu0
    %1128 = vdwg.mxu0
    %v1129 = vadd.f32 %v1124, %v395
    %v1130 = vxor.u32 %v1129, 2147483648
    %v1131 = vmul.f32 %v1130, 1.442695
    %v1132 = vpow.pop %v1131
    %v1133 = vadd.f32 %v1132, 1.0
    %v1134 = vrcp.pop %v1133
    %v1135 = vmul.f32 1.0, %v1134
    %v1136 = vtanh.pop %v1129
    %v1137 = vmul.f32 %v1135, %v903
    %1139 = vrot.lane.b32.xlu0 %v1136, 64
    %v1140 = vpop.permute.xlu0 %1139
    %v1142 = vmul.f32 %v1135, %v1140
    %1144 = vrot.lane.b32.xlu0 %v1142, 32
    %v1145 = vpop.permute.xlu0 %1144
    %v1147 = vadd.f32 %v1137, %v1145
    %v1148 = vtanh.pop %v1147
    %1150 = vrot.lane.b32.xlu0 %v1148, 64
    %v1151 = vpop.permute.xlu0 %1150
    %v1153 = vmul.f32 %v1135, %v1151
    %s1154 = scalar_lea.vmem [#allocation2], 8
    %v1155 = vld [vmem:[%s1154] sm:$0x3]
    %v1156 = vpack.c.bf16 %v1155, %v1155
    %v1157 = vpack.c.bf16 %v1027, %v1027
    %1159 = vrot.lane.b32.xlu0 %v1157, 32
    %v1160 = vpop.permute.xlu0 %1159
    %v1162 = vsel %vm139, %v1160, 0
    %1164 = vmatprep.subr.bf16.mxu0 0
    %1165 = vmatpush1.bf16.msra.mxu0 %v135
    %1166 = vmatprep.subr.bf16.mxu0 0
    %1167 = vmatpush1.bf16.msra.mxu0 %v136
    %1168 = vmatprep.subr.bf16.mxu0 0
    %1169 = vmatpush1.bf16.msra.mxu0 0
    %1170 = vmatprep.subr.bf16.mxu0 0
    %1171 = vmatpush1.bf16.msra.mxu0 0
    %1172 = vmatprep.subr.bf16.mxu0 0
    %1173 = vmatpush1.bf16.msra.mxu0 0
    %1174 = vmatprep.subr.bf16.mxu0 0
    %1175 = vmatpush1.bf16.msra.mxu0 0
    %1176 = vmatprep.subr.bf16.mxu0 0
    %1177 = vmatpush1.bf16.msra.mxu0 0
    %1178 = vmatprep.subr.bf16.mxu0 0
    %1179 = vmatpush1.bf16.msra.mxu0 0
    %1180 = vmatprep.subr.bf16.mxu0 0
    %1181 = vmatpush1.bf16.msra.mxu0 0
    %1182 = vmatprep.subr.bf16.mxu0 0
    %1183 = vmatpush1.bf16.msra.mxu0 0
    %1184 = vmatprep.subr.bf16.mxu0 0
    %1185 = vmatpush1.bf16.msra.mxu0 0
    %1186 = vmatprep.subr.bf16.mxu0 0
    %1187 = vmatpush1.bf16.msra.mxu0 0
    %1188 = vmatprep.subr.bf16.mxu0 0
    %1189 = vmatpush1.bf16.msra.mxu0 0
    %1190 = vmatprep.subr.bf16.mxu0 0
    %1191 = vmatpush1.bf16.msra.mxu0 0
    %1192 = vmatprep.subr.bf16.mxu0 0
    %1193 = vmatpush1.bf16.msra.mxu0 0
    %1194 = vmatprep.subr.bf16.mxu0 0
    %1195 = vmatpush1.bf16.msra.mxu0 0
    %1196 = vmatprep.mubr.bf16.mxu0 0
    %1197 = vmatmul.mubr.bf16.gmra.mrb[0].mxu0 %v1162
    %v1198 = vpop.f32.mrb[0].mxu0
    %v1199 = vadd.f32 0.0, %v1198
    %v1200 = vpop.f32.mrb[0].mxu0
    %v1201 = vpop.f32.mrb[0].mxu0
    %v1202 = vpop.f32.mrb[0].mxu0
    %1203 = vdwg.mxu0
    %v1205 = vsel %vm189, %v1156, 0
    %1207 = vmatprep.subr.bf16.mxu0 0
    %1208 = vmatpush1.bf16.msra.mxu0 %v187
    %1209 = vmatprep.subr.bf16.mxu0 0
    %1210 = vmatpush1.bf16.msra.mxu0 0
    %1211 = vmatprep.subr.bf16.mxu0 0
    %1212 = vmatpush1.bf16.msra.mxu0 0
    %1213 = vmatprep.subr.bf16.mxu0 0
    %1214 = vmatpush1.bf16.msra.mxu0 0
    %1215 = vmatprep.subr.bf16.mxu0 0
    %1216 = vmatpush1.bf16.msra.mxu0 0
    %1217 = vmatprep.subr.bf16.mxu0 0
    %1218 = vmatpush1.bf16.msra.mxu0 0
    %1219 = vmatprep.subr.bf16.mxu0 0
    %1220 = vmatpush1.bf16.msra.mxu0 0
    %1221 = vmatprep.subr.bf16.mxu0 0
    %1222 = vmatpush1.bf16.msra.mxu0 0
    %1223 = vmatprep.subr.bf16.mxu0 0
    %1224 = vmatpush1.bf16.msra.mxu0 0
    %1225 = vmatprep.subr.bf16.mxu0 0
    %1226 = vmatpush1.bf16.msra.mxu0 0
    %1227 = vmatprep.subr.bf16.mxu0 0
    %1228 = vmatpush1.bf16.msra.mxu0 0
    %1229 = vmatprep.subr.bf16.mxu0 0
    %1230 = vmatpush1.bf16.msra.mxu0 0
    %1231 = vmatprep.subr.bf16.mxu0 0
    %1232 = vmatpush1.bf16.msra.mxu0 0
    %1233 = vmatprep.subr.bf16.mxu0 0
    %1234 = vmatpush1.bf16.msra.mxu0 0
    %1235 = vmatprep.subr.bf16.mxu0 0
    %1236 = vmatpush1.bf16.msra.mxu0 0
    %1237 = vmatprep.subr.bf16.mxu0 0
    %1238 = vmatpush1.bf16.msra.mxu0 0
    %1239 = vmatprep.mubr.bf16.mxu0 0
    %1240 = vmatmul.mubr.bf16.gmra.mrb[0].mxu0 %v1205
    %v1241 = vpop.f32.mrb[0].mxu0
    %v1242 = vadd.f32 %v1199, %v1241
    %v1243 = vpop.f32.mrb[0].mxu0
    %v1244 = vpop.f32.mrb[0].mxu0
    %v1245 = vpop.f32.mrb[0].mxu0
    %1246 = vdwg.mxu0
    %v1247 = vadd.f32 %v1242, %v238
    %v1248 = vxor.u32 %v1247, 2147483648
    %v1249 = vmul.f32 %v1248, 1.442695
    %v1250 = vpow.pop %v1249
    %v1251 = vadd.f32 %v1250, 1.0
    %v1252 = vrcp.pop %v1251
    %v1253 = vmul.f32 1.0, %v1252
    %v1254 = vtanh.pop %v1247
    %v1255 = vmul.f32 %v1253, %v1021
    %1257 = vrot.lane.b32.xlu0 %v1254, 64
    %v1258 = vpop.permute.xlu0 %1257
    %v1260 = vmul.f32 %v1253, %v1258
    %1262 = vrot.lane.b32.xlu0 %v1260, 32
    %v1263 = vpop.permute.xlu0 %1262
    %v1265 = vadd.f32 %v1255, %v1263
    %v1266 = vtanh.pop %v1265
    %1268 = vrot.lane.b32.xlu0 %v1266, 64
    %v1269 = vpop.permute.xlu0 %1268
    %v1271 = vmul.f32 %v1253, %v1269
    %s1272 = scalar_lea.vmem [#allocation10], 8
    %v1273 = vld [vmem:[%s1272] sm:$0x3]
    %1275 = vrot.lane.b32.xlu0 %v1273, 96
    %v1276 = vpop.permute.xlu0 %1275
    %v1278 = vmul.f32 %v1271, %v1276
    %v1279 = vpack.c.bf16 %v1278, %v1278
    %v1280 = vpack.c.bf16 %v1153, %v1153
    %1282 = vrot.lane.b32.xlu0 %v1280, 32
    %v1283 = vpop.permute.xlu0 %1282
    %v1285 = vsel %vm139, %v1283, 0
    %1287 = vmatprep.subr.bf16.mxu0 0
    %1288 = vmatpush1.bf16.msra.mxu0 %v288
    %1289 = vmatprep.subr.bf16.mxu0 0
    %1290 = vmatpush1.bf16.msra.mxu0 %v289
    %1291 = vmatprep.subr.bf16.mxu0 0
    %1292 = vmatpush1.bf16.msra.mxu0 0
    %1293 = vmatprep.subr.bf16.mxu0 0
    %1294 = vmatpush1.bf16.msra.mxu0 0
    %1295 = vmatprep.subr.bf16.mxu0 0
    %1296 = vmatpush1.bf16.msra.mxu0 0
    %1297 = vmatprep.subr.bf16.mxu0 0
    %1298 = vmatpush1.bf16.msra.mxu0 0
    %1299 = vmatprep.subr.bf16.mxu0 0
    %1300 = vmatpush1.bf16.msra.mxu0 0
    %1301 = vmatprep.subr.bf16.mxu0 0
    %1302 = vmatpush1.bf16.msra.mxu0 0
    %1303 = vmatprep.subr.bf16.mxu0 0
    %1304 = vmatpush1.bf16.msra.mxu0 0
    %1305 = vmatprep.subr.bf16.mxu0 0
    %1306 = vmatpush1.bf16.msra.mxu0 0
    %1307 = vmatprep.subr.bf16.mxu0 0
    %1308 = vmatpush1.bf16.msra.mxu0 0
    %1309 = vmatprep.subr.bf16.mxu0 0
    %1310 = vmatpush1.bf16.msra.mxu0 0
    %1311 = vmatprep.subr.bf16.mxu0 0
    %1312 = vmatpush1.bf16.msra.mxu0 0
    %1313 = vmatprep.subr.bf16.mxu0 0
    %1314 = vmatpush1.bf16.msra.mxu0 0
    %1315 = vmatprep.subr.bf16.mxu0 0
    %1316 = vmatpush1.bf16.msra.mxu0 0
    %1317 = vmatprep.subr.bf16.mxu0 0
    %1318 = vmatpush1.bf16.msra.mxu0 0
    %1319 = vmatprep.mubr.bf16.mxu0 0
    %1320 = vmatmul.mubr.bf16.gmra.mrb[0].mxu0 %v1285
    %v1321 = vpop.f32.mrb[0].mxu0
    %v1322 = vadd.f32 0.0, %v1321
    %v1323 = vpop.f32.mrb[0].mxu0
    %v1324 = vpop.f32.mrb[0].mxu0
    %v1325 = vpop.f32.mrb[0].mxu0
    %1326 = vdwg.mxu0
    %1328 = vrot.lane.b32.xlu0 %v1279, 32
    %v1329 = vpop.permute.xlu0 %1328
    %v1331 = vsel %vm139, %v1329, 0
    %1333 = vmatprep.subr.bf16.mxu0 0
    %1334 = vmatpush1.bf16.msra.mxu0 %v343
    %1335 = vmatprep.subr.bf16.mxu0 0
    %1336 = vmatpush1.bf16.msra.mxu0 %v344
    %1337 = vmatprep.subr.bf16.mxu0 0
    %1338 = vmatpush1.bf16.msra.mxu0 0
    %1339 = vmatprep.subr.bf16.mxu0 0
    %1340 = vmatpush1.bf16.msra.mxu0 0
    %1341 = vmatprep.subr.bf16.mxu0 0
    %1342 = vmatpush1.bf16.msra.mxu0 0
    %1343 = vmatprep.subr.bf16.mxu0 0
    %1344 = vmatpush1.bf16.msra.mxu0 0
    %1345 = vmatprep.subr.bf16.mxu0 0
    %1346 = vmatpush1.bf16.msra.mxu0 0
    %1347 = vmatprep.subr.bf16.mxu0 0
    %1348 = vmatpush1.bf16.msra.mxu0 0
    %1349 = vmatprep.subr.bf16.mxu0 0
    %1350 = vmatpush1.bf16.msra.mxu0 0
    %1351 = vmatprep.subr.bf16.mxu0 0
    %1352 = vmatpush1.bf16.msra.mxu0 0
    %1353 = vmatprep.subr.bf16.mxu0 0
    %1354 = vmatpush1.bf16.msra.mxu0 0
    %1355 = vmatprep.subr.bf16.mxu0 0
    %1356 = vmatpush1.bf16.msra.mxu0 0
    %1357 = vmatprep.subr.bf16.mxu0 0
    %1358 = vmatpush1.bf16.msra.mxu0 0
    %1359 = vmatprep.subr.bf16.mxu0 0
    %1360 = vmatpush1.bf16.msra.mxu0 0
    %1361 = vmatprep.subr.bf16.mxu0 0
    %1362 = vmatpush1.bf16.msra.mxu0 0
    %1363 = vmatprep.subr.bf16.mxu0 0
    %1364 = vmatpush1.bf16.msra.mxu0 0
    %1365 = vmatprep.mubr.bf16.mxu0 0
    %1366 = vmatmul.mubr.bf16.gmra.mrb[0].mxu0 %v1331
    %v1367 = vpop.f32.mrb[0].mxu0
    %v1368 = vadd.f32 %v1322, %v1367
    %v1369 = vpop.f32.mrb[0].mxu0
    %v1370 = vpop.f32.mrb[0].mxu0
    %v1371 = vpop.f32.mrb[0].mxu0
    %1372 = vdwg.mxu0
    %v1373 = vadd.f32 %v1368, %v395
    %v1374 = vxor.u32 %v1373, 2147483648
    %v1375 = vmul.f32 %v1374, 1.442695
    %v1376 = vpow.pop %v1375
    %v1377 = vadd.f32 %v1376, 1.0
    %v1378 = vrcp.pop %v1377
    %v1379 = vmul.f32 1.0, %v1378
    %v1380 = vtanh.pop %v1373
    %v1381 = vmul.f32 %v1379, %v1147
    %1383 = vrot.lane.b32.xlu0 %v1380, 64
    %v1384 = vpop.permute.xlu0 %1383
    %v1386 = vmul.f32 %v1379, %v1384
    %1388 = vrot.lane.b32.xlu0 %v1386, 32
    %v1389 = vpop.permute.xlu0 %1388
    %v1391 = vadd.f32 %v1381, %v1389
    %v1392 = vtanh.pop %v1391
    %1394 = vrot.lane.b32.xlu0 %v1392, 64
    %v1395 = vpop.permute.xlu0 %1394
    %v1397 = vmul.f32 %v1379, %v1395
    %s1398 = scalar_lea.vmem [#allocation2], 10
    %v1399 = vld [vmem:[%s1398] sm:$0x3]
    %v1400 = vpack.c.bf16 %v1399, %v1399
    %v1401 = vpack.c.bf16 %v1271, %v1271
    %1403 = vrot.lane.b32.xlu0 %v1401, 32
    %v1404 = vpop.permute.xlu0 %1403
    %v1406 = vsel %vm139, %v1404, 0
    %1408 = vmatprep.subr.bf16.mxu0 0
    %1409 = vmatpush1.bf16.msra.mxu0 %v135
    %1410 = vmatprep.subr.bf16.mxu0 0
    %1411 = vmatpush1.bf16.msra.mxu0 %v136
    %1412 = vmatprep.subr.bf16.mxu0 0
    %1413 = vmatpush1.bf16.msra.mxu0 0
    %1414 = vmatprep.subr.bf16.mxu0 0
    %1415 = vmatpush1.bf16.msra.mxu0 0
    %1416 = vmatprep.subr.bf16.mxu0 0
    %1417 = vmatpush1.bf16.msra.mxu0 0
    %1418 = vmatprep.subr.bf16.mxu0 0
    %1419 = vmatpush1.bf16.msra.mxu0 0
    %1420 = vmatprep.subr.bf16.mxu0 0
    %1421 = vmatpush1.bf16.msra.mxu0 0
    %1422 = vmatprep.subr.bf16.mxu0 0
    %1423 = vmatpush1.bf16.msra.mxu0 0
    %1424 = vmatprep.subr.bf16.mxu0 0
    %1425 = vmatpush1.bf16.msra.mxu0 0
    %1426 = vmatprep.subr.bf16.mxu0 0
    %1427 = vmatpush1.bf16.msra.mxu0 0
    %1428 = vmatprep.subr.bf16.mxu0 0
    %1429 = vmatpush1.bf16.msra.mxu0 0
    %1430 = vmatprep.subr.bf16.mxu0 0
    %1431 = vmatpush1.bf16.msra.mxu0 0
    %1432 = vmatprep.subr.bf16.mxu0 0
    %1433 = vmatpush1.bf16.msra.mxu0 0
    %1434 = vmatprep.subr.bf16.mxu0 0
    %1435 = vmatpush1.bf16.msra.mxu0 0
    %1436 = vmatprep.subr.bf16.mxu0 0
    %1437 = vmatpush1.bf16.msra.mxu0 0
    %1438 = vmatprep.subr.bf16.mxu0 0
    %1439 = vmatpush1.bf16.msra.mxu0 0
    %1440 = vmatprep.mubr.bf16.mxu0 0
    %1441 = vmatmul.mubr.bf16.gmra.mrb[0].mxu0 %v1406
    %v1442 = vpop.f32.mrb[0].mxu0
    %v1443 = vadd.f32 0.0, %v1442
    %v1444 = vpop.f32.mrb[0].mxu0
    %v1445 = vpop.f32.mrb[0].mxu0
    %v1446 = vpop.f32.mrb[0].mxu0
    %1447 = vdwg.mxu0
    %v1449 = vsel %vm189, %v1400, 0
    %1451 = vmatprep.subr.bf16.mxu0 0
    %1452 = vmatpush1.bf16.msra.mxu0 %v187
    %1453 = vmatprep.subr.bf16.mxu0 0
    %1454 = vmatpush1.bf16.msra.mxu0 0
    %1455 = vmatprep.subr.bf16.mxu0 0
    %1456 = vmatpush1.bf16.msra.mxu0 0
    %1457 = vmatprep.subr.bf16.mxu0 0
    %1458 = vmatpush1.bf16.msra.mxu0 0
    %1459 = vmatprep.subr.bf16.mxu0 0
    %1460 = vmatpush1.bf16.msra.mxu0 0
    %1461 = vmatprep.subr.bf16.mxu0 0
    %1462 = vmatpush1.bf16.msra.mxu0 0
    %1463 = vmatprep.subr.bf16.mxu0 0
    %1464 = vmatpush1.bf16.msra.mxu0 0
    %1465 = vmatprep.subr.bf16.mxu0 0
    %1466 = vmatpush1.bf16.msra.mxu0 0
    %1467 = vmatprep.subr.bf16.mxu0 0
    %1468 = vmatpush1.bf16.msra.mxu0 0
    %1469 = vmatprep.subr.bf16.mxu0 0
    %1470 = vmatpush1.bf16.msra.mxu0 0
    %1471 = vmatprep.subr.bf16.mxu0 0
    %1472 = vmatpush1.bf16.msra.mxu0 0
    %1473 = vmatprep.subr.bf16.mxu0 0
    %1474 = vmatpush1.bf16.msra.mxu0 0
    %1475 = vmatprep.subr.bf16.mxu0 0
    %1476 = vmatpush1.bf16.msra.mxu0 0
    %1477 = vmatprep.subr.bf16.mxu0 0
    %1478 = vmatpush1.bf16.msra.mxu0 0
    %1479 = vmatprep.subr.bf16.mxu0 0
    %1480 = vmatpush1.bf16.msra.mxu0 0
    %1481 = vmatprep.subr.bf16.mxu0 0
    %1482 = vmatpush1.bf16.msra.mxu0 0
    %1483 = vmatprep.mubr.bf16.mxu0 0
    %1484 = vmatmul.mubr.bf16.gmra.mrb[0].mxu0 %v1449
    %v1485 = vpop.f32.mrb[0].mxu0
    %v1486 = vadd.f32 %v1443, %v1485
    %v1487 = vpop.f32.mrb[0].mxu0
    %v1488 = vpop.f32.mrb[0].mxu0
    %v1489 = vpop.f32.mrb[0].mxu0
    %1490 = vdwg.mxu0
    %v1491 = vadd.f32 %v1486, %v238
    %v1492 = vxor.u32 %v1491, 2147483648
    %v1493 = vmul.f32 %v1492, 1.442695
    %v1494 = vpow.pop %v1493
    %v1495 = vadd.f32 %v1494, 1.0
    %v1496 = vrcp.pop %v1495
    %v1497 = vmul.f32 1.0, %v1496
    %v1498 = vtanh.pop %v1491
    %v1499 = vmul.f32 %v1497, %v1265
    %1501 = vrot.lane.b32.xlu0 %v1498, 64
    %v1502 = vpop.permute.xlu0 %1501
    %v1504 = vmul.f32 %v1497, %v1502
    %1506 = vrot.lane.b32.xlu0 %v1504, 32
    %v1507 = vpop.permute.xlu0 %1506
    %v1509 = vadd.f32 %v1499, %v1507
    %v1510 = vtanh.pop %v1509
    %1512 = vrot.lane.b32.xlu0 %v1510, 64
    %v1513 = vpop.permute.xlu0 %1512
    %v1515 = vmul.f32 %v1497, %v1513
    %s1516 = scalar_lea.vmem [#allocation10], 10
    %v1517 = vld [vmem:[%s1516] sm:$0x3]
    %1519 = vrot.lane.b32.xlu0 %v1517, 96
    %v1520 = vpop.permute.xlu0 %1519
    %v1522 = vmul.f32 %v1515, %v1520
    %v1523 = vpack.c.bf16 %v1522, %v1522
    %v1524 = vpack.c.bf16 %v1397, %v1397
    %1526 = vrot.lane.b32.xlu0 %v1524, 32
    %v1527 = vpop.permute.xlu0 %1526
    %v1529 = vsel %vm139, %v1527, 0
    %1531 = vmatprep.subr.bf16.mxu0 0
    %1532 = vmatpush1.bf16.msra.mxu0 %v288
    %1533 = vmatprep.subr.bf16.mxu0 0
    %1534 = vmatpush1.bf16.msra.mxu0 %v289
    %1535 = vmatprep.subr.bf16.mxu0 0
    %1536 = vmatpush1.bf16.msra.mxu0 0
    %1537 = vmatprep.subr.bf16.mxu0 0
    %1538 = vmatpush1.bf16.msra.mxu0 0
    %1539 = vmatprep.subr.bf16.mxu0 0
    %1540 = vmatpush1.bf16.msra.mxu0 0
    %1541 = vmatprep.subr.bf16.mxu0 0
    %1542 = vmatpush1.bf16.msra.mxu0 0
    %1543 = vmatprep.subr.bf16.mxu0 0
    %1544 = vmatpush1.bf16.msra.mxu0 0
    %1545 = vmatprep.subr.bf16.mxu0 0
    %1546 = vmatpush1.bf16.msra.mxu0 0
    %1547 = vmatprep.subr.bf16.mxu0 0
    %1548 = vmatpush1.bf16.msra.mxu0 0
    %1549 = vmatprep.subr.bf16.mxu0 0
    %1550 = vmatpush1.bf16.msra.mxu0 0
    %1551 = vmatprep.subr.bf16.mxu0 0
    %1552 = vmatpush1.bf16.msra.mxu0 0
    %1553 = vmatprep.subr.bf16.mxu0 0
    %1554 = vmatpush1.bf16.msra.mxu0 0
    %1555 = vmatprep.subr.bf16.mxu0 0
    %1556 = vmatpush1.bf16.msra.mxu0 0
    %1557 = vmatprep.subr.bf16.mxu0 0
    %1558 = vmatpush1.bf16.msra.mxu0 0
    %1559 = vmatprep.subr.bf16.mxu0 0
    %1560 = vmatpush1.bf16.msra.mxu0 0
    %1561 = vmatprep.subr.bf16.mxu0 0
    %1562 = vmatpush1.bf16.msra.mxu0 0
    %1563 = vmatprep.mubr.bf16.mxu0 0
    %1564 = vmatmul.mubr.bf16.gmra.mrb[0].mxu0 %v1529
    %v1565 = vpop.f32.mrb[0].mxu0
    %v1566 = vadd.f32 0.0, %v1565
    %v1567 = vpop.f32.mrb[0].mxu0
    %v1568 = vpop.f32.mrb[0].mxu0
    %v1569 = vpop.f32.mrb[0].mxu0
    %1570 = vdwg.mxu0
    %1572 = vrot.lane.b32.xlu0 %v1523, 32
    %v1573 = vpop.permute.xlu0 %1572
    %v1575 = vsel %vm139, %v1573, 0
    %1577 = vmatprep.subr.bf16.mxu0 0
    %1578 = vmatpush1.bf16.msra.mxu0 %v343
    %1579 = vmatprep.subr.bf16.mxu0 0
    %1580 = vmatpush1.bf16.msra.mxu0 %v344
    %1581 = vmatprep.subr.bf16.mxu0 0
    %1582 = vmatpush1.bf16.msra.mxu0 0
    %1583 = vmatprep.subr.bf16.mxu0 0
    %1584 = vmatpush1.bf16.msra.mxu0 0
    %1585 = vmatprep.subr.bf16.mxu0 0
    %1586 = vmatpush1.bf16.msra.mxu0 0
    %1587 = vmatprep.subr.bf16.mxu0 0
    %1588 = vmatpush1.bf16.msra.mxu0 0
    %1589 = vmatprep.subr.bf16.mxu0 0
    %1590 = vmatpush1.bf16.msra.mxu0 0
    %1591 = vmatprep.subr.bf16.mxu0 0
    %1592 = vmatpush1.bf16.msra.mxu0 0
    %1593 = vmatprep.subr.bf16.mxu0 0
    %1594 = vmatpush1.bf16.msra.mxu0 0
    %1595 = vmatprep.subr.bf16.mxu0 0
    %1596 = vmatpush1.bf16.msra.mxu0 0
    %1597 = vmatprep.subr.bf16.mxu0 0
    %1598 = vmatpush1.bf16.msra.mxu0 0
    %1599 = vmatprep.subr.bf16.mxu0 0
    %1600 = vmatpush1.bf16.msra.mxu0 0
    %1601 = vmatprep.subr.bf16.mxu0 0
    %1602 = vmatpush1.bf16.msra.mxu0 0
    %1603 = vmatprep.subr.bf16.mxu0 0
    %1604 = vmatpush1.bf16.msra.mxu0 0
    %1605 = vmatprep.subr.bf16.mxu0 0
    %1606 = vmatpush1.bf16.msra.mxu0 0
    %1607 = vmatprep.subr.bf16.mxu0 0
    %1608 = vmatpush1.bf16.msra.mxu0 0
    %1609 = vmatprep.mubr.bf16.mxu0 0
    %1610 = vmatmul.mubr.bf16.gmra.mrb[0].mxu0 %v1575
    %v1611 = vpop.f32.mrb[0].mxu0
    %v1612 = vadd.f32 %v1566, %v1611
    %v1613 = vpop.f32.mrb[0].mxu0
    %v1614 = vpop.f32.mrb[0].mxu0
    %v1615 = vpop.f32.mrb[0].mxu0
    %1616 = vdwg.mxu0
    %v1617 = vadd.f32 %v1612, %v395
    %v1618 = vxor.u32 %v1617, 2147483648
    %v1619 = vmul.f32 %v1618, 1.442695
    %v1620 = vpow.pop %v1619
    %v1621 = vadd.f32 %v1620, 1.0
    %v1622 = vrcp.pop %v1621
    %v1623 = vmul.f32 1.0, %v1622
    %v1624 = vtanh.pop %v1617
    %v1625 = vmul.f32 %v1623, %v1391
    %1627 = vrot.lane.b32.xlu0 %v1624, 64
    %v1628 = vpop.permute.xlu0 %1627
    %v1630 = vmul.f32 %v1623, %v1628
    %1632 = vrot.lane.b32.xlu0 %v1630, 32
    %v1633 = vpop.permute.xlu0 %1632
    %v1635 = vadd.f32 %v1625, %v1633
    %v1636 = vtanh.pop %v1635
    %1638 = vrot.lane.b32.xlu0 %v1636, 64
    %v1639 = vpop.permute.xlu0 %1638
    %v1641 = vmul.f32 %v1623, %v1639
    %s1642 = scalar_lea.vmem [#allocation2], 12
    %v1643 = vld [vmem:[%s1642] sm:$0x3]
    %v1644 = vpack.c.bf16 %v1643, %v1643
    %v1645 = vpack.c.bf16 %v1515, %v1515
    %1647 = vrot.lane.b32.xlu0 %v1645, 32
    %v1648 = vpop.permute.xlu0 %1647
    %v1650 = vsel %vm139, %v1648, 0
    %1652 = vmatprep.subr.bf16.mxu0 0
    %1653 = vmatpush1.bf16.msra.mxu0 %v135
    %1654 = vmatprep.subr.bf16.mxu0 0
    %1655 = vmatpush1.bf16.msra.mxu0 %v136
    %1656 = vmatprep.subr.bf16.mxu0 0
    %1657 = vmatpush1.bf16.msra.mxu0 0
    %1658 = vmatprep.subr.bf16.mxu0 0
    %1659 = vmatpush1.bf16.msra.mxu0 0
    %1660 = vmatprep.subr.bf16.mxu0 0
    %1661 = vmatpush1.bf16.msra.mxu0 0
    %1662 = vmatprep.subr.bf16.mxu0 0
    %1663 = vmatpush1.bf16.msra.mxu0 0
    %1664 = vmatprep.subr.bf16.mxu0 0
    %1665 = vmatpush1.bf16.msra.mxu0 0
    %1666 = vmatprep.subr.bf16.mxu0 0
    %1667 = vmatpush1.bf16.msra.mxu0 0
    %1668 = vmatprep.subr.bf16.mxu0 0
    %1669 = vmatpush1.bf16.msra.mxu0 0
    %1670 = vmatprep.subr.bf16.mxu0 0
    %1671 = vmatpush1.bf16.msra.mxu0 0
    %1672 = vmatprep.subr.bf16.mxu0 0
    %1673 = vmatpush1.bf16.msra.mxu0 0
    %1674 = vmatprep.subr.bf16.mxu0 0
    %1675 = vmatpush1.bf16.msra.mxu0 0
    %1676 = vmatprep.subr.bf16.mxu0 0
    %1677 = vmatpush1.bf16.msra.mxu0 0
    %1678 = vmatprep.subr.bf16.mxu0 0
    %1679 = vmatpush1.bf16.msra.mxu0 0
    %1680 = vmatprep.subr.bf16.mxu0 0
    %1681 = vmatpush1.bf16.msra.mxu0 0
    %1682 = vmatprep.subr.bf16.mxu0 0
    %1683 = vmatpush1.bf16.msra.mxu0 0
    %1684 = vmatprep.mubr.bf16.mxu0 0
    %1685 = vmatmul.mubr.bf16.gmra.mrb[0].mxu0 %v1650
    %v1686 = vpop.f32.mrb[0].mxu0
    %v1687 = vadd.f32 0.0, %v1686
    %v1688 = vpop.f32.mrb[0].mxu0
    %v1689 = vpop.f32.mrb[0].mxu0
    %v1690 = vpop.f32.mrb[0].mxu0
    %1691 = vdwg.mxu0
    %v1693 = vsel %vm189, %v1644, 0
    %1695 = vmatprep.subr.bf16.mxu0 0
    %1696 = vmatpush1.bf16.msra.mxu0 %v187
    %1697 = vmatprep.subr.bf16.mxu0 0
    %1698 = vmatpush1.bf16.msra.mxu0 0
    %1699 = vmatprep.subr.bf16.mxu0 0
    %1700 = vmatpush1.bf16.msra.mxu0 0
    %1701 = vmatprep.subr.bf16.mxu0 0
    %1702 = vmatpush1.bf16.msra.mxu0 0
    %1703 = vmatprep.subr.bf16.mxu0 0
    %1704 = vmatpush1.bf16.msra.mxu0 0
    %1705 = vmatprep.subr.bf16.mxu0 0
    %1706 = vmatpush1.bf16.msra.mxu0 0
    %1707 = vmatprep.subr.bf16.mxu0 0
    %1708 = vmatpush1.bf16.msra.mxu0 0
    %1709 = vmatprep.subr.bf16.mxu0 0
    %1710 = vmatpush1.bf16.msra.mxu0 0
    %1711 = vmatprep.subr.bf16.mxu0 0
    %1712 = vmatpush1.bf16.msra.mxu0 0
    %1713 = vmatprep.subr.bf16.mxu0 0
    %1714 = vmatpush1.bf16.msra.mxu0 0
    %1715 = vmatprep.subr.bf16.mxu0 0
    %1716 = vmatpush1.bf16.msra.mxu0 0
    %1717 = vmatprep.subr.bf16.mxu0 0
    %1718 = vmatpush1.bf16.msra.mxu0 0
    %1719 = vmatprep.subr.bf16.mxu0 0
    %1720 = vmatpush1.bf16.msra.mxu0 0
    %1721 = vmatprep.subr.bf16.mxu0 0
    %1722 = vmatpush1.bf16.msra.mxu0 0
    %1723 = vmatprep.subr.bf16.mxu0 0
    %1724 = vmatpush1.bf16.msra.mxu0 0
    %1725 = vmatprep.subr.bf16.mxu0 0
    %1726 = vmatpush1.bf16.msra.mxu0 0
    %1727 = vmatprep.mubr.bf16.mxu0 0
    %1728 = vmatmul.mubr.bf16.gmra.mrb[0].mxu0 %v1693
    %v1729 = vpop.f32.mrb[0].mxu0
    %v1730 = vadd.f32 %v1687, %v1729
    %v1731 = vpop.f32.mrb[0].mxu0
    %v1732 = vpop.f32.mrb[0].mxu0
    %v1733 = vpop.f32.mrb[0].mxu0
    %1734 = vdwg.mxu0
    %v1735 = vadd.f32 %v1730, %v238
    %v1736 = vxor.u32 %v1735, 2147483648
    %v1737 = vmul.f32 %v1736, 1.442695
    %v1738 = vpow.pop %v1737
    %v1739 = vadd.f32 %v1738, 1.0
    %v1740 = vrcp.pop %v1739
    %v1741 = vmul.f32 1.0, %v1740
    %v1742 = vtanh.pop %v1735
    %v1743 = vmul.f32 %v1741, %v1509
    %1745 = vrot.lane.b32.xlu0 %v1742, 64
    %v1746 = vpop.permute.xlu0 %1745
    %v1748 = vmul.f32 %v1741, %v1746
    %1750 = vrot.lane.b32.xlu0 %v1748, 32
    %v1751 = vpop.permute.xlu0 %1750
    %v1753 = vadd.f32 %v1743, %v1751
    %v1754 = vtanh.pop %v1753
    %1756 = vrot.lane.b32.xlu0 %v1754, 64
    %v1757 = vpop.permute.xlu0 %1756
    %v1759 = vmul.f32 %v1741, %v1757
    %s1760 = scalar_lea.vmem [#allocation10], 12
    %v1761 = vld [vmem:[%s1760] sm:$0x3]
    %1763 = vrot.lane.b32.xlu0 %v1761, 96
    %v1764 = vpop.permute.xlu0 %1763
    %v1766 = vmul.f32 %v1759, %v1764
    %v1767 = vpack.c.bf16 %v1766, %v1766
    %v1768 = vpack.c.bf16 %v1641, %v1641
    %1770 = vrot.lane.b32.xlu0 %v1768, 32
    %v1771 = vpop.permute.xlu0 %1770
    %v1773 = vsel %vm139, %v1771, 0
    %1775 = vmatprep.subr.bf16.mxu0 0
    %1776 = vmatpush1.bf16.msra.mxu0 %v288
    %1777 = vmatprep.subr.bf16.mxu0 0
    %1778 = vmatpush1.bf16.msra.mxu0 %v289
    %1779 = vmatprep.subr.bf16.mxu0 0
    %1780 = vmatpush1.bf16.msra.mxu0 0
    %1781 = vmatprep.subr.bf16.mxu0 0
    %1782 = vmatpush1.bf16.msra.mxu0 0
    %1783 = vmatprep.subr.bf16.mxu0 0
    %1784 = vmatpush1.bf16.msra.mxu0 0
    %1785 = vmatprep.subr.bf16.mxu0 0
    %1786 = vmatpush1.bf16.msra.mxu0 0
    %1787 = vmatprep.subr.bf16.mxu0 0
    %1788 = vmatpush1.bf16.msra.mxu0 0
    %1789 = vmatprep.subr.bf16.mxu0 0
    %1790 = vmatpush1.bf16.msra.mxu0 0
    %1791 = vmatprep.subr.bf16.mxu0 0
    %1792 = vmatpush1.bf16.msra.mxu0 0
    %1793 = vmatprep.subr.bf16.mxu0 0
    %1794 = vmatpush1.bf16.msra.mxu0 0
    %1795 = vmatprep.subr.bf16.mxu0 0
    %1796 = vmatpush1.bf16.msra.mxu0 0
    %1797 = vmatprep.subr.bf16.mxu0 0
    %1798 = vmatpush1.bf16.msra.mxu0 0
    %1799 = vmatprep.subr.bf16.mxu0 0
    %1800 = vmatpush1.bf16.msra.mxu0 0
    %1801 = vmatprep.subr.bf16.mxu0 0
    %1802 = vmatpush1.bf16.msra.mxu0 0
    %1803 = vmatprep.subr.bf16.mxu0 0
    %1804 = vmatpush1.bf16.msra.mxu0 0
    %1805 = vmatprep.subr.bf16.mxu0 0
    %1806 = vmatpush1.bf16.msra.mxu0 0
    %1807 = vmatprep.mubr.bf16.mxu0 0
    %1808 = vmatmul.mubr.bf16.gmra.mrb[0].mxu0 %v1773
    %v1809 = vpop.f32.mrb[0].mxu0
    %v1810 = vadd.f32 0.0, %v1809
    %v1811 = vpop.f32.mrb[0].mxu0
    %v1812 = vpop.f32.mrb[0].mxu0
    %v1813 = vpop.f32.mrb[0].mxu0
    %1814 = vdwg.mxu0
    %1816 = vrot.lane.b32.xlu0 %v1767, 32
    %v1817 = vpop.permute.xlu0 %1816
    %v1819 = vsel %vm139, %v1817, 0
    %1821 = vmatprep.subr.bf16.mxu0 0
    %1822 = vmatpush1.bf16.msra.mxu0 %v343
    %1823 = vmatprep.subr.bf16.mxu0 0
    %1824 = vmatpush1.bf16.msra.mxu0 %v344
    %1825 = vmatprep.subr.bf16.mxu0 0
    %1826 = vmatpush1.bf16.msra.mxu0 0
    %1827 = vmatprep.subr.bf16.mxu0 0
    %1828 = vmatpush1.bf16.msra.mxu0 0
    %1829 = vmatprep.subr.bf16.mxu0 0
    %1830 = vmatpush1.bf16.msra.mxu0 0
    %1831 = vmatprep.subr.bf16.mxu0 0
    %1832 = vmatpush1.bf16.msra.mxu0 0
    %1833 = vmatprep.subr.bf16.mxu0 0
    %1834 = vmatpush1.bf16.msra.mxu0 0
    %1835 = vmatprep.subr.bf16.mxu0 0
    %1836 = vmatpush1.bf16.msra.mxu0 0
    %1837 = vmatprep.subr.bf16.mxu0 0
    %1838 = vmatpush1.bf16.msra.mxu0 0
    %1839 = vmatprep.subr.bf16.mxu0 0
    %1840 = vmatpush1.bf16.msra.mxu0 0
    %1841 = vmatprep.subr.bf16.mxu0 0
    %1842 = vmatpush1.bf16.msra.mxu0 0
    %1843 = vmatprep.subr.bf16.mxu0 0
    %1844 = vmatpush1.bf16.msra.mxu0 0
    %1845 = vmatprep.subr.bf16.mxu0 0
    %1846 = vmatpush1.bf16.msra.mxu0 0
    %1847 = vmatprep.subr.bf16.mxu0 0
    %1848 = vmatpush1.bf16.msra.mxu0 0
    %1849 = vmatprep.subr.bf16.mxu0 0
    %1850 = vmatpush1.bf16.msra.mxu0 0
    %1851 = vmatprep.subr.bf16.mxu0 0
    %1852 = vmatpush1.bf16.msra.mxu0 0
    %1853 = vmatprep.mubr.bf16.mxu0 0
    %1854 = vmatmul.mubr.bf16.gmra.mrb[0].mxu0 %v1819
    %v1855 = vpop.f32.mrb[0].mxu0
    %v1856 = vadd.f32 %v1810, %v1855
    %v1857 = vpop.f32.mrb[0].mxu0
    %v1858 = vpop.f32.mrb[0].mxu0
    %v1859 = vpop.f32.mrb[0].mxu0
    %1860 = vdwg.mxu0
    %v1861 = vadd.f32 %v1856, %v395
    %v1862 = vxor.u32 %v1861, 2147483648
    %v1863 = vmul.f32 %v1862, 1.442695
    %v1864 = vpow.pop %v1863
    %v1865 = vadd.f32 %v1864, 1.0
    %v1866 = vrcp.pop %v1865
    %v1867 = vmul.f32 1.0, %v1866
    %v1868 = vtanh.pop %v1861
    %v1869 = vmul.f32 %v1867, %v1635
    %1871 = vrot.lane.b32.xlu0 %v1868, 64
    %v1872 = vpop.permute.xlu0 %1871
    %v1874 = vmul.f32 %v1867, %v1872
    %1876 = vrot.lane.b32.xlu0 %v1874, 32
    %v1877 = vpop.permute.xlu0 %1876
    %v1879 = vadd.f32 %v1869, %v1877
    %v1880 = vtanh.pop %v1879
    %1882 = vrot.lane.b32.xlu0 %v1880, 64
    %v1883 = vpop.permute.xlu0 %1882
    %v1885 = vmul.f32 %v1867, %v1883
    %s1886 = scalar_lea.vmem [#allocation2], 14
    %v1887 = vld [vmem:[%s1886] sm:$0x3]
    %v1888 = vpack.c.bf16 %v1887, %v1887
    %v1889 = vpack.c.bf16 %v1759, %v1759
    %1891 = vrot.lane.b32.xlu0 %v1889, 32
    %v1892 = vpop.permute.xlu0 %1891
    %v1894 = vsel %vm139, %v1892, 0
    %1896 = vmatprep.subr.bf16.mxu0 0
    %1897 = vmatpush1.bf16.msra.mxu0 %v135
    %1898 = vmatprep.subr.bf16.mxu0 0
    %1899 = vmatpush1.bf16.msra.mxu0 %v136
    %1900 = vmatprep.subr.bf16.mxu0 0
    %1901 = vmatpush1.bf16.msra.mxu0 0
    %1902 = vmatprep.subr.bf16.mxu0 0
    %1903 = vmatpush1.bf16.msra.mxu0 0
    %1904 = vmatprep.subr.bf16.mxu0 0
    %1905 = vmatpush1.bf16.msra.mxu0 0
    %1906 = vmatprep.subr.bf16.mxu0 0
    %1907 = vmatpush1.bf16.msra.mxu0 0
    %1908 = vmatprep.subr.bf16.mxu0 0
    %1909 = vmatpush1.bf16.msra.mxu0 0
    %1910 = vmatprep.subr.bf16.mxu0 0
    %1911 = vmatpush1.bf16.msra.mxu0 0
    %1912 = vmatprep.subr.bf16.mxu0 0
    %1913 = vmatpush1.bf16.msra.mxu0 0
    %1914 = vmatprep.subr.bf16.mxu0 0
    %1915 = vmatpush1.bf16.msra.mxu0 0
    %1916 = vmatprep.subr.bf16.mxu0 0
    %1917 = vmatpush1.bf16.msra.mxu0 0
    %1918 = vmatprep.subr.bf16.mxu0 0
    %1919 = vmatpush1.bf16.msra.mxu0 0
    %1920 = vmatprep.subr.bf16.mxu0 0
    %1921 = vmatpush1.bf16.msra.mxu0 0
    %1922 = vmatprep.subr.bf16.mxu0 0
    %1923 = vmatpush1.bf16.msra.mxu0 0
    %1924 = vmatprep.subr.bf16.mxu0 0
    %1925 = vmatpush1.bf16.msra.mxu0 0
    %1926 = vmatprep.subr.bf16.mxu0 0
    %1927 = vmatpush1.bf16.msra.mxu0 0
    %1928 = vmatprep.mubr.bf16.mxu0 0
    %1929 = vmatmul.mubr.bf16.gmra.mrb[0].mxu0 %v1894
    %v1930 = vpop.f32.mrb[0].mxu0
    %v1931 = vadd.f32 0.0, %v1930
    %v1932 = vpop.f32.mrb[0].mxu0
    %v1933 = vpop.f32.mrb[0].mxu0
    %v1934 = vpop.f32.mrb[0].mxu0
    %1935 = vdwg.mxu0
    %v1937 = vsel %vm189, %v1888, 0
    %1939 = vmatprep.subr.bf16.mxu0 0
    %1940 = vmatpush1.bf16.msra.mxu0 %v187
    %1941 = vmatprep.subr.bf16.mxu0 0
    %1942 = vmatpush1.bf16.msra.mxu0 0
    %1943 = vmatprep.subr.bf16.mxu0 0
    %1944 = vmatpush1.bf16.msra.mxu0 0
    %1945 = vmatprep.subr.bf16.mxu0 0
    %1946 = vmatpush1.bf16.msra.mxu0 0
    %1947 = vmatprep.subr.bf16.mxu0 0
    %1948 = vmatpush1.bf16.msra.mxu0 0
    %1949 = vmatprep.subr.bf16.mxu0 0
    %1950 = vmatpush1.bf16.msra.mxu0 0
    %1951 = vmatprep.subr.bf16.mxu0 0
    %1952 = vmatpush1.bf16.msra.mxu0 0
    %1953 = vmatprep.subr.bf16.mxu0 0
    %1954 = vmatpush1.bf16.msra.mxu0 0
    %1955 = vmatprep.subr.bf16.mxu0 0
    %1956 = vmatpush1.bf16.msra.mxu0 0
    %1957 = vmatprep.subr.bf16.mxu0 0
    %1958 = vmatpush1.bf16.msra.mxu0 0
    %1959 = vmatprep.subr.bf16.mxu0 0
    %1960 = vmatpush1.bf16.msra.mxu0 0
    %1961 = vmatprep.subr.bf16.mxu0 0
    %1962 = vmatpush1.bf16.msra.mxu0 0
    %1963 = vmatprep.subr.bf16.mxu0 0
    %1964 = vmatpush1.bf16.msra.mxu0 0
    %1965 = vmatprep.subr.bf16.mxu0 0
    %1966 = vmatpush1.bf16.msra.mxu0 0
    %1967 = vmatprep.subr.bf16.mxu0 0
    %1968 = vmatpush1.bf16.msra.mxu0 0
    %1969 = vmatprep.subr.bf16.mxu0 0
    %1970 = vmatpush1.bf16.msra.mxu0 0
    %1971 = vmatprep.mubr.bf16.mxu0 0
    %1972 = vmatmul.mubr.bf16.gmra.mrb[0].mxu0 %v1937
    %v1973 = vpop.f32.mrb[0].mxu0
    %v1974 = vadd.f32 %v1931, %v1973
    %v1975 = vpop.f32.mrb[0].mxu0
    %v1976 = vpop.f32.mrb[0].mxu0
    %v1977 = vpop.f32.mrb[0].mxu0
    %1978 = vdwg.mxu0
    %v1979 = vadd.f32 %v1974, %v238
    %v1980 = vxor.u32 %v1979, 2147483648
    %v1981 = vmul.f32 %v1980, 1.442695
    %v1982 = vpow.pop %v1981
    %v1983 = vadd.f32 %v1982, 1.0
    %v1984 = vrcp.pop %v1983
    %v1985 = vmul.f32 1.0, %v1984
    %v1986 = vtanh.pop %v1979
    %v1987 = vmul.f32 %v1985, %v1753
    %1989 = vrot.lane.b32.xlu0 %v1986, 64
    %v1990 = vpop.permute.xlu0 %1989
    %v1992 = vmul.f32 %v1985, %v1990
    %1994 = vrot.lane.b32.xlu0 %v1992, 32
    %v1995 = vpop.permute.xlu0 %1994
    %v1997 = vadd.f32 %v1987, %v1995
    %v1998 = vtanh.pop %v1997
    %2000 = vrot.lane.b32.xlu0 %v1998, 64
    %v2001 = vpop.permute.xlu0 %2000
    %v2003 = vmul.f32 %v1985, %v2001
    %s2004 = scalar_lea.vmem [#allocation10], 14
    %v2005 = vld [vmem:[%s2004] sm:$0x3]
    %2007 = vrot.lane.b32.xlu0 %v2005, 96
    %v2008 = vpop.permute.xlu0 %2007
    %v2010 = vmul.f32 %v2003, %v2008
    %v2011 = vpack.c.bf16 %v2010, %v2010
    %v2012 = vpack.c.bf16 %v1885, %v1885
    %2014 = vrot.lane.b32.xlu0 %v2012, 32
    %v2015 = vpop.permute.xlu0 %2014
    %v2017 = vsel %vm139, %v2015, 0
    %2019 = vmatprep.subr.bf16.mxu0 0
    %2020 = vmatpush1.bf16.msra.mxu0 %v288
    %2021 = vmatprep.subr.bf16.mxu0 0
    %2022 = vmatpush1.bf16.msra.mxu0 %v289
    %2023 = vmatprep.subr.bf16.mxu0 0
    %2024 = vmatpush1.bf16.msra.mxu0 0
    %2025 = vmatprep.subr.bf16.mxu0 0
    %2026 = vmatpush1.bf16.msra.mxu0 0
    %2027 = vmatprep.subr.bf16.mxu0 0
    %2028 = vmatpush1.bf16.msra.mxu0 0
    %2029 = vmatprep.subr.bf16.mxu0 0
    %2030 = vmatpush1.bf16.msra.mxu0 0
    %2031 = vmatprep.subr.bf16.mxu0 0
    %2032 = vmatpush1.bf16.msra.mxu0 0
    %2033 = vmatprep.subr.bf16.mxu0 0
    %2034 = vmatpush1.bf16.msra.mxu0 0
    %2035 = vmatprep.subr.bf16.mxu0 0
    %2036 = vmatpush1.bf16.msra.mxu0 0
    %2037 = vmatprep.subr.bf16.mxu0 0
    %2038 = vmatpush1.bf16.msra.mxu0 0
    %2039 = vmatprep.subr.bf16.mxu0 0
    %2040 = vmatpush1.bf16.msra.mxu0 0
    %2041 = vmatprep.subr.bf16.mxu0 0
    %2042 = vmatpush1.bf16.msra.mxu0 0
    %2043 = vmatprep.subr.bf16.mxu0 0
    %2044 = vmatpush1.bf16.msra.mxu0 0
    %2045 = vmatprep.subr.bf16.mxu0 0
    %2046 = vmatpush1.bf16.msra.mxu0 0
    %2047 = vmatprep.subr.bf16.mxu0 0
    %2048 = vmatpush1.bf16.msra.mxu0 0
    %2049 = vmatprep.subr.bf16.mxu0 0
    %2050 = vmatpush1.bf16.msra.mxu0 0
    %2051 = vmatprep.mubr.bf16.mxu0 0
    %2052 = vmatmul.mubr.bf16.gmra.mrb[0].mxu0 %v2017
    %v2053 = vpop.f32.mrb[0].mxu0
    %v2054 = vadd.f32 0.0, %v2053
    %v2055 = vpop.f32.mrb[0].mxu0
    %v2056 = vpop.f32.mrb[0].mxu0
    %v2057 = vpop.f32.mrb[0].mxu0
    %2058 = vdwg.mxu0
    %2060 = vrot.lane.b32.xlu0 %v2011, 32
    %v2061 = vpop.permute.xlu0 %2060
    %v2063 = vsel %vm139, %v2061, 0
    %2065 = vmatprep.subr.bf16.mxu0 0
    %2066 = vmatpush1.bf16.msra.mxu0 %v343
    %2067 = vmatprep.subr.bf16.mxu0 0
    %2068 = vmatpush1.bf16.msra.mxu0 %v344
    %2069 = vmatprep.subr.bf16.mxu0 0
    %2070 = vmatpush1.bf16.msra.mxu0 0
    %2071 = vmatprep.subr.bf16.mxu0 0
    %2072 = vmatpush1.bf16.msra.mxu0 0
    %2073 = vmatprep.subr.bf16.mxu0 0
    %2074 = vmatpush1.bf16.msra.mxu0 0
    %2075 = vmatprep.subr.bf16.mxu0 0
    %2076 = vmatpush1.bf16.msra.mxu0 0
    %2077 = vmatprep.subr.bf16.mxu0 0
    %2078 = vmatpush1.bf16.msra.mxu0 0
    %2079 = vmatprep.subr.bf16.mxu0 0
    %2080 = vmatpush1.bf16.msra.mxu0 0
    %2081 = vmatprep.subr.bf16.mxu0 0
    %2082 = vmatpush1.bf16.msra.mxu0 0
    %2083 = vmatprep.subr.bf16.mxu0 0
    %2084 = vmatpush1.bf16.msra.mxu0 0
    %2085 = vmatprep.subr.bf16.mxu0 0
    %2086 = vmatpush1.bf16.msra.mxu0 0
    %2087 = vmatprep.subr.bf16.mxu0 0
    %2088 = vmatpush1.bf16.msra.mxu0 0
    %2089 = vmatprep.subr.bf16.mxu0 0
    %2090 = vmatpush1.bf16.msra.mxu0 0
    %2091 = vmatprep.subr.bf16.mxu0 0
    %2092 = vmatpush1.bf16.msra.mxu0 0
    %2093 = vmatprep.subr.bf16.mxu0 0
    %2094 = vmatpush1.bf16.msra.mxu0 0
    %2095 = vmatprep.subr.bf16.mxu0 0
    %2096 = vmatpush1.bf16.msra.mxu0 0
    %2097 = vmatprep.mubr.bf16.mxu0 0
    %2098 = vmatmul.mubr.bf16.gmra.mrb[0].mxu0 %v2063
    %v2099 = vpop.f32.mrb[0].mxu0
    %v2100 = vadd.f32 %v2054, %v2099
    %v2101 = vpop.f32.mrb[0].mxu0
    %v2102 = vpop.f32.mrb[0].mxu0
    %v2103 = vpop.f32.mrb[0].mxu0
    %2104 = vdwg.mxu0
    %v2105 = vadd.f32 %v2100, %v395
    %v2106 = vxor.u32 %v2105, 2147483648
    %v2107 = vmul.f32 %v2106, 1.442695
    %v2108 = vpow.pop %v2107
    %v2109 = vadd.f32 %v2108, 1.0
    %v2110 = vrcp.pop %v2109
    %v2111 = vmul.f32 1.0, %v2110
    %v2112 = vtanh.pop %v2105
    %v2113 = vmul.f32 %v2111, %v1879
    %2115 = vrot.lane.b32.xlu0 %v2112, 64
    %v2116 = vpop.permute.xlu0 %2115
    %v2118 = vmul.f32 %v2111, %v2116
    %2120 = vrot.lane.b32.xlu0 %v2118, 32
    %v2121 = vpop.permute.xlu0 %2120
    %v2123 = vadd.f32 %v2113, %v2121
    %v2124 = vtanh.pop %v2123
    %2126 = vrot.lane.b32.xlu0 %v2124, 64
    %v2127 = vpop.permute.xlu0 %2126
    %v2129 = vmul.f32 %v2111, %v2127
    %v2130 = vpack.c.bf16 %v2129, %v2129
    %v2131 = vld [vmem:[#allocation11] sm:$0xf]
    %v2132 = vld [vmem:[#allocation11 + $0x4] sm:$0xf]
    %v2133 = vld [vmem:[#allocation11 + $0x8] sm:$0xf]
    %v2134 = vld [vmem:[#allocation11 + $0xc] sm:$0xf]
    %v2135 = vld [vmem:[%s9] sm:$0x1]
    %v2137 = vlaneseq
    %v2138 = vshrl.u32 %v2137, 7
    %v2139 = vsub.s32 0, %v2138
    %v2140 = vrot.slane %v2135, %v2139
    %2143 = vrot.lane.b32.xlu0 %v2130, 32
    %v2144 = vpop.permute.xlu0 %2143
    %v2149 = vunpack.c.l.b16 %v2131
    %v2150 = vunpack.c.l.b16 %v2132
    %v2151 = vunpack.c.l.b16 %v2133
    %v2152 = vunpack.c.l.b16 %v2134
    %v2153 = vpack.c.b16 %v2150, %v2149
    %v2154 = vpack.c.b16 %v2152, %v2151
    %v2158 = vsel %vm139, %v2144, 0
    %2160 = vmatprep.subr.bf16.mxu0 0
    %2161 = vmatpush1.bf16.msra.mxu0 %v2153
    %2162 = vmatprep.subr.bf16.mxu0 0
    %2163 = vmatpush1.bf16.msra.mxu0 %v2154
    %2164 = vmatprep.subr.bf16.mxu0 0
    %2165 = vmatpush1.bf16.msra.mxu0 0
    %2166 = vmatprep.subr.bf16.mxu0 0
    %2167 = vmatpush1.bf16.msra.mxu0 0
    %2168 = vmatprep.subr.bf16.mxu0 0
    %2169 = vmatpush1.bf16.msra.mxu0 0
    %2170 = vmatprep.subr.bf16.mxu0 0
    %2171 = vmatpush1.bf16.msra.mxu0 0
    %2172 = vmatprep.subr.bf16.mxu0 0
    %2173 = vmatpush1.bf16.msra.mxu0 0
    %2174 = vmatprep.subr.bf16.mxu0 0
    %2175 = vmatpush1.bf16.msra.mxu0 0
    %2176 = vmatprep.subr.bf16.mxu0 0
    %2177 = vmatpush1.bf16.msra.mxu0 0
    %2178 = vmatprep.subr.bf16.mxu0 0
    %2179 = vmatpush1.bf16.msra.mxu0 0
    %2180 = vmatprep.subr.bf16.mxu0 0
    %2181 = vmatpush1.bf16.msra.mxu0 0
    %2182 = vmatprep.subr.bf16.mxu0 0
    %2183 = vmatpush1.bf16.msra.mxu0 0
    %2184 = vmatprep.subr.bf16.mxu0 0
    %2185 = vmatpush1.bf16.msra.mxu0 0
    %2186 = vmatprep.subr.bf16.mxu0 0
    %2187 = vmatpush1.bf16.msra.mxu0 0
    %2188 = vmatprep.subr.bf16.mxu0 0
    %2189 = vmatpush1.bf16.msra.mxu0 0
    %2190 = vmatprep.subr.bf16.mxu0 0
    %2191 = vmatpush1.bf16.msra.mxu0 0
    %2192 = vmatprep.mubr.bf16.mxu0 0
    %2193 = vmatmul.mubr.bf16.gmra.mrb[0].mxu0 %v2158
    %v2194 = vpop.f32.mrb[0].mxu0
    %v2195 = vadd.f32 %v2140, %v2194
    %v2196 = vpop.f32.mrb[0].mxu0
    %v2197 = vpop.f32.mrb[0].mxu0
    %v2198 = vpop.f32.mrb[0].mxu0
    %2199 = vdwg.mxu0
    %2200 = vst [vmem:[#allocation13] sm:$0x3] %v2195
    // Predicated region
    $region66: #{tpu_custom_call.1} parent=1 // pred_check
      _
    $region67: #{tpu_custom_call.1} parent=1 // pred_check_branch
      %2202 = sbr.rel (0) target = $region69
    $region68: #{tpu_custom_call.1} parent=1 // pred_region
      %s2204 = ssub.s32 32, 32
      %2205 = vsyncadd [#allocation4], %s2204
      %s2207 = sshll.u32 [#allocation13], 4
      %s2208 = int_to_ptr.vmem [resolvable:$true] %s2207
      %2210 = dma.vmem_to_hbm [thread:$0]  %s2208, 32, %s10, [#allocation4]
    $region69: #{tpu_custom_call.1} parent=1 // pred_fallthru
      _
    // Predicated region
    $region70: #{tpu_custom_call.1} parent=1 // pred_check
      _
    $region71: #{tpu_custom_call.1} parent=1 // pred_check_branch
      %2212 = sbr.rel (0) target = $region73
    $region72: #{tpu_custom_call.1} parent=1 // pred_region
      %2213 = dma.done [#allocation4], 32
    $region73: #{tpu_custom_call.1} parent=1 // pred_fallthru
      _
    %2214 = vsyncpa [#allocation3], 1
    %2215 = vsyncpa [#allocation6], 1
    %2216 = vsyncpa [#allocation9], 1
    %2217 = vsyncpa [#allocation12], 1
    %2218 = vsyncpa [#allocation4], 1

</llo_original>
